<compile_context>
chip_gen: v6e
topology: v6e:2x2x1
jax: 0.10.0
libtpu: 0.0.40
codegen_flags: <defaults>
</compile_context>

<pallas_src>
import functools

import jax
import jax.numpy as jnp
from jax import lax
from jax.experimental import pallas as pl
from jax.experimental.pallas import tpu as pltpu


def gru_kernel(x_ref,      # (S, TB, E)   time-major embedded tokens (one batch tile)
               wx_ref,     # (E, 3G)      fused [r|z|n] input weights, gate stride G
               bx_ref,     # (1, 3G)      fused input biases (b_rh/b_zh folded in)
               wh_ref,     # (G, 3G)      fused [r|z|n] hidden weights, zero-padded
               bn_ref,     # (1, G)       n-gate hidden bias (b_nh), zero-padded
               wcls_ref,   # (G, Cpad)    classifier weights, zero-padded
               bcls_ref,   # (1, Cpad)    classifier bias, zero-padded
               out_ref,    # (TB, Cpad)   lane-dense logits
               xp_ref,     # VMEM scratch (S, TB, 3G): precomputed x-side projections
               *, seq_len, tile_b, gate, unroll):
    G = gate

    # Hoist loop-invariant loads and broadcasts out of both loops
    # (JAX does not CSE broadcast_in_dim).
    wx = wx_ref[...]                                          # (E, 3G)
    wh = wh_ref[...]                                          # (G, 3G)
    bx = jnp.broadcast_to(bx_ref[...], (tile_b, 3 * G))       # (TB, 3G)
    bn = jnp.broadcast_to(bn_ref[...], (tile_b, G))           # (TB, G)

    # ---- Phase 1: x-side projection of every timestep (independent of h, so it is
    # off the serial chain and pipelines freely on the MXU).  Input biases folded in.
    def proj(t, carry):
        xp_ref[t] = jnp.dot(x_ref[t], wx,
                            preferred_element_type=jnp.float32) + bx
        return carry

    lax.fori_loop(0, seq_len, proj, 0, unroll=unroll)

    # ---- Phase 2: serial GRU recurrence; only h @ W_h_cat per step.  Gate slices are
    # whole-vreg 128-lane selects at offsets 0 / G / 2G.  Padded lanes of h stay 0:
    # their pre-activations are 0 (zero-padded weights/biases) => r = z = 0.5, n = 0,
    # so h_new_pad = 0.5*0 + 0.5*0 = 0.
    def step(t, h):
        xt = xp_ref[t]                                                   # (TB, 3G)
        hp = jnp.dot(h, wh, preferred_element_type=jnp.float32)          # (TB, 3G)
        pre_r = xt[:, 0 * G:1 * G] + hp[:, 0 * G:1 * G]
        pre_z = xt[:, 1 * G:2 * G] + hp[:, 1 * G:2 * G]
        # sigmoid(x) == 0.5 * (1 + tanh(0.5 x)): one EUP op + cheap VPU scale/add
        r = 0.5 * (1.0 + jnp.tanh(0.5 * pre_r))
        z = 0.5 * (1.0 + jnp.tanh(0.5 * pre_z))
        n = jnp.tanh(xt[:, 2 * G:3 * G] + r * (hp[:, 2 * G:3 * G] + bn))
        return (1.0 - z) * n + z * h

    h0 = jnp.zeros((tile_b, G), jnp.float32)
    h_final = lax.fori_loop(0, seq_len, step, h0, unroll=unroll)

    # ---- Phase 3: classifier into a lane-dense (TB, Cpad) slab (unmasked stores).
    out_ref[...] = (jnp.dot(h_final, wcls_ref[...],
                            preferred_element_type=jnp.float32) + bcls_ref[...])


def gru_model_forward(x_tokens, params):
    # TODO(synk): embedding gather left in plain JAX (a DMA-gather kernel is not worth
    # it at these scales); done time-major directly so no activation transpose is
    # materialized afterwards.
    emb = params["embed"][x_tokens.T]                         # (S, B, E)
    S, B, E = emb.shape
    H = params["w_rh"].shape[0]
    C = params["w_cls"].shape[1]

    G = max(128, pl.cdiv(H, 128) * 128)                       # per-gate lane stride
    C_pad = max(128, pl.cdiv(C, 128) * 128)

    # Batch tiling: one grid step per TB rows; "parallel" lets v7x's two TensorCores
    # each run an independent recurrence on a tile.  TB also bounds per-TC VMEM.
    if B <= 256:
        TB = max(8, pl.cdiv(B, 8) * 8)
    else:
        TB = 256
    B_pad = pl.cdiv(B, TB) * TB
    num_tiles = B_pad // TB

    x = jnp.pad(emb, ((0, 0), (0, B_pad - B), (0, 0))).astype(jnp.float32)

    def pad_cols(w):                                          # (R, H) -> (R, G)
        return jnp.pad(w, ((0, 0), (0, G - H)))

    # Fused gate weights/biases in [r | z | n] order, each gate in its own 128-lane
    # block.  b_rh / b_zh are folded into the x-side biases; only b_nh stays separate
    # (it sits inside r * (...)).
    w_x = jnp.concatenate([pad_cols(params["w_rx"]),
                           pad_cols(params["w_zx"]),
                           pad_cols(params["w_nx"])], axis=1)               # (E, 3G)
    b_x = jnp.concatenate([pad_cols(params["b_rx"] + params["b_rh"]),
                           pad_cols(params["b_zx"] + params["b_zh"]),
                           pad_cols(params["b_nx"])], axis=1)               # (1, 3G)
    w_h = jnp.concatenate([jnp.pad(params["w_rh"], ((0, G - H), (0, G - H))),
                           jnp.pad(params["w_zh"], ((0, G - H), (0, G - H))),
                           jnp.pad(params["w_nh"], ((0, G - H), (0, G - H)))],
                          axis=1)                                           # (G, 3G)
    b_n = pad_cols(params["b_nh"])                                          # (1, G)

    w_cls = jnp.pad(params["w_cls"], ((0, G - H), (0, C_pad - C)))          # (G, Cpad)
    b_cls = jnp.pad(params["b_cls"], ((0, 0), (0, C_pad - C)))              # (1, Cpad)

    unroll = True if S <= 32 else 8

    kernel = functools.partial(gru_kernel, seq_len=S, tile_b=TB, gate=G, unroll=unroll)

    # VMEM budget per grid step (f32): double-buffered input/weights/output + scratch.
    est = 4 * (2 * S * TB * E
               + 2 * (E * 3 * G + 3 * G + G * 3 * G + G + G * C_pad + C_pad)
               + 2 * TB * C_pad
               + S * TB * 3 * G)
    vmem_limit = int(min(max(est + (4 << 20), 16 << 20), 40 << 20))
    # TODO(synk): for very large S*B, chunk Phase 1 over time (double-buffered xp
    # scratch) instead of raising vmem_limit further.

    out_pad = pl.pallas_call(
        kernel,
        out_shape=jax.ShapeDtypeStruct((B_pad, C_pad), jnp.float32),
        grid=(num_tiles,),
        in_specs=[
            pl.BlockSpec((S, TB, E), lambda i: (0, i, 0)),      # x: tiled on batch
            pl.BlockSpec((E, 3 * G), lambda i: (0, 0)),         # W_x_cat
            pl.BlockSpec((1, 3 * G), lambda i: (0, 0)),         # b_x_cat
            pl.BlockSpec((G, 3 * G), lambda i: (0, 0)),         # W_h_cat
            pl.BlockSpec((1, G), lambda i: (0, 0)),             # b_nh
            pl.BlockSpec((G, C_pad), lambda i: (0, 0)),         # W_cls
            pl.BlockSpec((1, C_pad), lambda i: (0, 0)),         # b_cls
        ],
        out_specs=pl.BlockSpec((TB, C_pad), lambda i: (i, 0)),
        scratch_shapes=[pltpu.VMEM((S, TB, 3 * G), jnp.float32)],
        compiler_params=pltpu.CompilerParams(
            dimension_semantics=("parallel",),
            vmem_limit_bytes=vmem_limit),
    )(x, w_x, b_x, w_h, b_n, w_cls, b_cls)

    return out_pad[:B, :C]


def reference_forward(x_tokens, params):
    emb = params["embed"][x_tokens]
    B = emb.shape[0]
    H = params["w_rh"].shape[0]
    h = jnp.zeros((B, H), jnp.float32)
    for t in range(emb.shape[1]):
        xt = emb[:, t]
        r = jax.nn.sigmoid(xt @ params["w_rx"] + params["b_rx"]
                           + h @ params["w_rh"] + params["b_rh"])
        z = jax.nn.sigmoid(xt @ params["w_zx"] + params["b_zx"]
                           + h @ params["w_zh"] + params["b_zh"])
        n = jnp.tanh(xt @ params["w_nx"] + params["b_nx"]
                     + r * (h @ params["w_nh"] + params["b_nh"]))
        h = (1.0 - z) * n + z * h
    return h @ params["w_cls"] + params["b_cls"]


def init_params(key, vocab, embed_size, hidden_size, num_classes):
    keys = jax.random.split(key, 16)
    p = {}
    # nn.Embedding default init ~ N(0, 1)
    p["embed"] = jax.random.normal(keys[0], (vocab, embed_size), jnp.float32)

    # GRU parameters: torch.rand -> uniform [0, 1)
    def u(k, shape):
        return jax.random.uniform(k, shape, jnp.float32)

    p["w_rh"] = u(keys[1], (hidden_size, hidden_size))
    p["b_rh"] = u(keys[2], (1, hidden_size))
    p["w_rx"] = u(keys[3], (embed_size, hidden_size))
    p["b_rx"] = u(keys[4], (1, hidden_size))
    p["w_zh"] = u(keys[5], (hidden_size, hidden_size))
    p["b_zh"] = u(keys[6], (1, hidden_size))
    p["w_zx"] = u(keys[7], (embed_size, hidden_size))
    p["b_zx"] = u(keys[8], (1, hidden_size))
    p["w_nh"] = u(keys[9], (hidden_size, hidden_size))
    p["b_nh"] = u(keys[10], (1, hidden_size))
    p["w_nx"] = u(keys[11], (embed_size, hidden_size))
    p["b_nx"] = u(keys[12], (1, hidden_size))
    # nn.Linear: uniform in [-1/sqrt(H), 1/sqrt(H)]
    bound = 1.0 / (hidden_size ** 0.5)
    p["w_cls"] = jax.random.uniform(keys[13], (hidden_size, num_classes),
                                    jnp.float32, -bound, bound)
    p["b_cls"] = jax.random.uniform(keys[14], (1, num_classes),
                                    jnp.float32, -bound, bound)
    return p


if __name__ == "__main__":
    VOCAB, EMBED, HIDDEN, CLASSES = 50, 16, 32, 2
    BATCH, SEQ = 2, 8

    key = jax.random.PRNGKey(0)
    k_params, k_tokens = jax.random.split(key)
    params = init_params(k_params, VOCAB, EMBED, HIDDEN, CLASSES)
    tokens = jax.random.randint(k_tokens, (BATCH, SEQ), 0, VOCAB, dtype=jnp.int32)

    out = gru_model_forward(tokens, params)
    out = jax.block_until_ready(out)

    ref = jax.block_until_ready(reference_forward(tokens, params))
    assert out.shape == (BATCH, CLASSES)
    assert jnp.allclose(out, ref, atol=1e-4, rtol=1e-4), (out, ref)
    print("KERNEL_OK")
</pallas_src>

<mosaic_0001>
module attributes {stable_mosaic.version = 11 : i64} {
  func.func @gru_kernel(%arg0: i32, %arg1: memref<8x8x16xf32, #tpu.memory_space<vmem>>, %arg2: memref<16x384xf32, #tpu.memory_space<vmem>>, %arg3: memref<1x384xf32, #tpu.memory_space<vmem>>, %arg4: memref<128x384xf32, #tpu.memory_space<vmem>>, %arg5: memref<1x128xf32, #tpu.memory_space<vmem>>, %arg6: memref<128x128xf32, #tpu.memory_space<vmem>>, %arg7: memref<1x128xf32, #tpu.memory_space<vmem>>, %arg8: memref<8x128xf32, #tpu.memory_space<vmem>>, %arg9: memref<8x8x384xf32, #tpu.memory_space<vmem>>) attributes {dimension_semantics = [#tpu.dimension_semantics<parallel>], iteration_bounds = array<i64: 1>, scalar_prefetch = 0 : i64, scratch_operands = 1 : i64, tpu.core_type = #tpu.core_type<tc>, window_params = [{transform_indices = @transform_0, window_bounds = array<i64: 8, 8, 16>}, {pipeline_mode = #tpu.pipeline_mode<synchronous>, transform_indices = @transform_1, window_bounds = array<i64: 16, 384>}, {pipeline_mode = #tpu.pipeline_mode<synchronous>, transform_indices = @transform_2, window_bounds = array<i64: 1, 384>}, {pipeline_mode = #tpu.pipeline_mode<synchronous>, transform_indices = @transform_3, window_bounds = array<i64: 128, 384>}, {pipeline_mode = #tpu.pipeline_mode<synchronous>, transform_indices = @transform_4, window_bounds = array<i64: 1, 128>}, {pipeline_mode = #tpu.pipeline_mode<synchronous>, transform_indices = @transform_5, window_bounds = array<i64: 128, 128>}, {pipeline_mode = #tpu.pipeline_mode<synchronous>, transform_indices = @transform_6, window_bounds = array<i64: 1, 128>}, {transform_indices = @transform_7, window_bounds = array<i64: 8, 128>}]} {
    %c0 = arith.constant 0 : index
    %c0_0 = arith.constant 0 : index
    %0 = vector.load %arg2[%c0, %c0_0] : memref<16x384xf32, #tpu.memory_space<vmem>>, vector<16x384xf32>
    %c0_1 = arith.constant 0 : index
    %c0_2 = arith.constant 0 : index
    %1 = vector.load %arg4[%c0_1, %c0_2] : memref<128x384xf32, #tpu.memory_space<vmem>>, vector<128x384xf32>
    %c0_3 = arith.constant 0 : index
    %c0_4 = arith.constant 0 : index
    %2 = vector.load %arg3[%c0_3, %c0_4] : memref<1x384xf32, #tpu.memory_space<vmem>>, vector<1x384xf32>
    %3 = vector.shape_cast %2 : vector<1x384xf32> to vector<1x384xf32>
    %4 = vector.broadcast %3 : vector<1x384xf32> to vector<8x384xf32>
    %c0_5 = arith.constant 0 : index
    %c0_6 = arith.constant 0 : index
    %5 = vector.load %arg5[%c0_5, %c0_6] : memref<1x128xf32, #tpu.memory_space<vmem>>, vector<1x128xf32>
    %6 = vector.shape_cast %5 : vector<1x128xf32> to vector<1x128xf32>
    %7 = vector.broadcast %6 : vector<1x128xf32> to vector<8x128xf32>
    %c0_i32 = arith.constant 0 : i32
    %8 = arith.index_cast %c0_i32 : i32 to index
    %c0_7 = arith.constant 0 : index
    %c0_8 = arith.constant 0 : index
    %9 = vector.load %arg1[%8, %c0_7, %c0_8] : memref<8x8x16xf32, #tpu.memory_space<vmem>>, vector<1x8x16xf32>
    %10 = vector.shape_cast %9 : vector<1x8x16xf32> to vector<8x16xf32>
    %cst = arith.constant dense<0.000000e+00> : vector<8x384xf32>
    %11 = tpu.matmul %10, %0, %cst {dimension_numbers = #tpu.dot_dimension_numbers<[1], [0], [0], [1], [0, 0, 1, 1], [], []>} : vector<8x16xf32>, vector<16x384xf32>, vector<8x384xf32> -> vector<8x384xf32>
    %12 = arith.addf %11, %4 : vector<8x384xf32>
    %13 = arith.index_cast %c0_i32 : i32 to index
    %c0_9 = arith.constant 0 : index
    %c0_10 = arith.constant 0 : index
    %14 = vector.load %arg9[%13, %c0_9, %c0_10] : memref<8x8x384xf32, #tpu.memory_space<vmem>>, vector<1x8x384xf32>
    %15 = vector.shape_cast %14 : vector<1x8x384xf32> to vector<8x384xf32>
    %16 = vector.shape_cast %12 : vector<8x384xf32> to vector<1x8x384xf32>
    tpu.vector_store %arg9[%13, %c0_9, %c0_10], %16 {strides = array<i32>} : memref<8x8x384xf32, #tpu.memory_space<vmem>>, vector<1x8x384xf32>,
    %c1_i32 = arith.constant 1 : i32
    %17 = arith.index_cast %c1_i32 : i32 to index
    %c0_11 = arith.constant 0 : index
    %c0_12 = arith.constant 0 : index
    %18 = vector.load %arg1[%17, %c0_11, %c0_12] : memref<8x8x16xf32, #tpu.memory_space<vmem>>, vector<1x8x16xf32>
    %19 = vector.shape_cast %18 : vector<1x8x16xf32> to vector<8x16xf32>
    %cst_13 = arith.constant dense<0.000000e+00> : vector<8x384xf32>
    %20 = tpu.matmul %19, %0, %cst_13 {dimension_numbers = #tpu.dot_dimension_numbers<[1], [0], [0], [1], [0, 0, 1, 1], [], []>} : vector<8x16xf32>, vector<16x384xf32>, vector<8x384xf32> -> vector<8x384xf32>
    %21 = arith.addf %20, %4 : vector<8x384xf32>
    %22 = arith.index_cast %c1_i32 : i32 to index
    %c0_14 = arith.constant 0 : index
    %c0_15 = arith.constant 0 : index
    %23 = vector.load %arg9[%22, %c0_14, %c0_15] : memref<8x8x384xf32, #tpu.memory_space<vmem>>, vector<1x8x384xf32>
    %24 = vector.shape_cast %23 : vector<1x8x384xf32> to vector<8x384xf32>
    %25 = vector.shape_cast %21 : vector<8x384xf32> to vector<1x8x384xf32>
    tpu.vector_store %arg9[%22, %c0_14, %c0_15], %25 {strides = array<i32>} : memref<8x8x384xf32, #tpu.memory_space<vmem>>, vector<1x8x384xf32>,
    %c2_i32 = arith.constant 2 : i32
    %26 = arith.index_cast %c2_i32 : i32 to index
    %c0_16 = arith.constant 0 : index
    %c0_17 = arith.constant 0 : index
    %27 = vector.load %arg1[%26, %c0_16, %c0_17] : memref<8x8x16xf32, #tpu.memory_space<vmem>>, vector<1x8x16xf32>
    %28 = vector.shape_cast %27 : vector<1x8x16xf32> to vector<8x16xf32>
    %cst_18 = arith.constant dense<0.000000e+00> : vector<8x384xf32>
    %29 = tpu.matmul %28, %0, %cst_18 {dimension_numbers = #tpu.dot_dimension_numbers<[1], [0], [0], [1], [0, 0, 1, 1], [], []>} : vector<8x16xf32>, vector<16x384xf32>, vector<8x384xf32> -> vector<8x384xf32>
    %30 = arith.addf %29, %4 : vector<8x384xf32>
    %31 = arith.index_cast %c2_i32 : i32 to index
    %c0_19 = arith.constant 0 : index
    %c0_20 = arith.constant 0 : index
    %32 = vector.load %arg9[%31, %c0_19, %c0_20] : memref<8x8x384xf32, #tpu.memory_space<vmem>>, vector<1x8x384xf32>
    %33 = vector.shape_cast %32 : vector<1x8x384xf32> to vector<8x384xf32>
    %34 = vector.shape_cast %30 : vector<8x384xf32> to vector<1x8x384xf32>
    tpu.vector_store %arg9[%31, %c0_19, %c0_20], %34 {strides = array<i32>} : memref<8x8x384xf32, #tpu.memory_space<vmem>>, vector<1x8x384xf32>,
    %c3_i32 = arith.constant 3 : i32
    %35 = arith.index_cast %c3_i32 : i32 to index
    %c0_21 = arith.constant 0 : index
    %c0_22 = arith.constant 0 : index
    %36 = vector.load %arg1[%35, %c0_21, %c0_22] : memref<8x8x16xf32, #tpu.memory_space<vmem>>, vector<1x8x16xf32>
    %37 = vector.shape_cast %36 : vector<1x8x16xf32> to vector<8x16xf32>
    %cst_23 = arith.constant dense<0.000000e+00> : vector<8x384xf32>
    %38 = tpu.matmul %37, %0, %cst_23 {dimension_numbers = #tpu.dot_dimension_numbers<[1], [0], [0], [1], [0, 0, 1, 1], [], []>} : vector<8x16xf32>, vector<16x384xf32>, vector<8x384xf32> -> vector<8x384xf32>
    %39 = arith.addf %38, %4 : vector<8x384xf32>
    %40 = arith.index_cast %c3_i32 : i32 to index
    %c0_24 = arith.constant 0 : index
    %c0_25 = arith.constant 0 : index
    %41 = vector.load %arg9[%40, %c0_24, %c0_25] : memref<8x8x384xf32, #tpu.memory_space<vmem>>, vector<1x8x384xf32>
    %42 = vector.shape_cast %41 : vector<1x8x384xf32> to vector<8x384xf32>
    %43 = vector.shape_cast %39 : vector<8x384xf32> to vector<1x8x384xf32>
    tpu.vector_store %arg9[%40, %c0_24, %c0_25], %43 {strides = array<i32>} : memref<8x8x384xf32, #tpu.memory_space<vmem>>, vector<1x8x384xf32>,
    %c4_i32 = arith.constant 4 : i32
    %44 = arith.index_cast %c4_i32 : i32 to index
    %c0_26 = arith.constant 0 : index
    %c0_27 = arith.constant 0 : index
    %45 = vector.load %arg1[%44, %c0_26, %c0_27] : memref<8x8x16xf32, #tpu.memory_space<vmem>>, vector<1x8x16xf32>
    %46 = vector.shape_cast %45 : vector<1x8x16xf32> to vector<8x16xf32>
    %cst_28 = arith.constant dense<0.000000e+00> : vector<8x384xf32>
    %47 = tpu.matmul %46, %0, %cst_28 {dimension_numbers = #tpu.dot_dimension_numbers<[1], [0], [0], [1], [0, 0, 1, 1], [], []>} : vector<8x16xf32>, vector<16x384xf32>, vector<8x384xf32> -> vector<8x384xf32>
    %48 = arith.addf %47, %4 : vector<8x384xf32>
    %49 = arith.index_cast %c4_i32 : i32 to index
    %c0_29 = arith.constant 0 : index
    %c0_30 = arith.constant 0 : index
    %50 = vector.load %arg9[%49, %c0_29, %c0_30] : memref<8x8x384xf32, #tpu.memory_space<vmem>>, vector<1x8x384xf32>
    %51 = vector.shape_cast %50 : vector<1x8x384xf32> to vector<8x384xf32>
    %52 = vector.shape_cast %48 : vector<8x384xf32> to vector<1x8x384xf32>
    tpu.vector_store %arg9[%49, %c0_29, %c0_30], %52 {strides = array<i32>} : memref<8x8x384xf32, #tpu.memory_space<vmem>>, vector<1x8x384xf32>,
    %c5_i32 = arith.constant 5 : i32
    %53 = arith.index_cast %c5_i32 : i32 to index
    %c0_31 = arith.constant 0 : index
    %c0_32 = arith.constant 0 : index
    %54 = vector.load %arg1[%53, %c0_31, %c0_32] : memref<8x8x16xf32, #tpu.memory_space<vmem>>, vector<1x8x16xf32>
    %55 = vector.shape_cast %54 : vector<1x8x16xf32> to vector<8x16xf32>
    %cst_33 = arith.constant dense<0.000000e+00> : vector<8x384xf32>
    %56 = tpu.matmul %55, %0, %cst_33 {dimension_numbers = #tpu.dot_dimension_numbers<[1], [0], [0], [1], [0, 0, 1, 1], [], []>} : vector<8x16xf32>, vector<16x384xf32>, vector<8x384xf32> -> vector<8x384xf32>
    %57 = arith.addf %56, %4 : vector<8x384xf32>
    %58 = arith.index_cast %c5_i32 : i32 to index
    %c0_34 = arith.constant 0 : index
    %c0_35 = arith.constant 0 : index
    %59 = vector.load %arg9[%58, %c0_34, %c0_35] : memref<8x8x384xf32, #tpu.memory_space<vmem>>, vector<1x8x384xf32>
    %60 = vector.shape_cast %59 : vector<1x8x384xf32> to vector<8x384xf32>
    %61 = vector.shape_cast %57 : vector<8x384xf32> to vector<1x8x384xf32>
    tpu.vector_store %arg9[%58, %c0_34, %c0_35], %61 {strides = array<i32>} : memref<8x8x384xf32, #tpu.memory_space<vmem>>, vector<1x8x384xf32>,
    %c6_i32 = arith.constant 6 : i32
    %62 = arith.index_cast %c6_i32 : i32 to index
    %c0_36 = arith.constant 0 : index
    %c0_37 = arith.constant 0 : index
    %63 = vector.load %arg1[%62, %c0_36, %c0_37] : memref<8x8x16xf32, #tpu.memory_space<vmem>>, vector<1x8x16xf32>
    %64 = vector.shape_cast %63 : vector<1x8x16xf32> to vector<8x16xf32>
    %cst_38 = arith.constant dense<0.000000e+00> : vector<8x384xf32>
    %65 = tpu.matmul %64, %0, %cst_38 {dimension_numbers = #tpu.dot_dimension_numbers<[1], [0], [0], [1], [0, 0, 1, 1], [], []>} : vector<8x16xf32>, vector<16x384xf32>, vector<8x384xf32> -> vector<8x384xf32>
    %66 = arith.addf %65, %4 : vector<8x384xf32>
    %67 = arith.index_cast %c6_i32 : i32 to index
    %c0_39 = arith.constant 0 : index
    %c0_40 = arith.constant 0 : index
    %68 = vector.load %arg9[%67, %c0_39, %c0_40] : memref<8x8x384xf32, #tpu.memory_space<vmem>>, vector<1x8x384xf32>
    %69 = vector.shape_cast %68 : vector<1x8x384xf32> to vector<8x384xf32>
    %70 = vector.shape_cast %66 : vector<8x384xf32> to vector<1x8x384xf32>
    tpu.vector_store %arg9[%67, %c0_39, %c0_40], %70 {strides = array<i32>} : memref<8x8x384xf32, #tpu.memory_space<vmem>>, vector<1x8x384xf32>,
    %c7_i32 = arith.constant 7 : i32
    %71 = arith.index_cast %c7_i32 : i32 to index
    %c0_41 = arith.constant 0 : index
    %c0_42 = arith.constant 0 : index
    %72 = vector.load %arg1[%71, %c0_41, %c0_42] : memref<8x8x16xf32, #tpu.memory_space<vmem>>, vector<1x8x16xf32>
    %73 = vector.shape_cast %72 : vector<1x8x16xf32> to vector<8x16xf32>
    %cst_43 = arith.constant dense<0.000000e+00> : vector<8x384xf32>
    %74 = tpu.matmul %73, %0, %cst_43 {dimension_numbers = #tpu.dot_dimension_numbers<[1], [0], [0], [1], [0, 0, 1, 1], [], []>} : vector<8x16xf32>, vector<16x384xf32>, vector<8x384xf32> -> vector<8x384xf32>
    %75 = arith.addf %74, %4 : vector<8x384xf32>
    %76 = arith.index_cast %c7_i32 : i32 to index
    %c0_44 = arith.constant 0 : index
    %c0_45 = arith.constant 0 : index
    %77 = vector.load %arg9[%76, %c0_44, %c0_45] : memref<8x8x384xf32, #tpu.memory_space<vmem>>, vector<1x8x384xf32>
    %78 = vector.shape_cast %77 : vector<1x8x384xf32> to vector<8x384xf32>
    %79 = vector.shape_cast %75 : vector<8x384xf32> to vector<1x8x384xf32>
    tpu.vector_store %arg9[%76, %c0_44, %c0_45], %79 {strides = array<i32>} : memref<8x8x384xf32, #tpu.memory_space<vmem>>, vector<1x8x384xf32>,
    %c8_i32 = arith.constant 8 : i32
    %cst_46 = arith.constant 0.000000e+00 : f32
    %80 = vector.broadcast %cst_46 : f32 to vector<8x128xf32>
    %c0_i32_47 = arith.constant 0 : i32
    %81 = arith.index_cast %c0_i32_47 : i32 to index
    %c0_48 = arith.constant 0 : index
    %c0_49 = arith.constant 0 : index
    %82 = vector.load %arg9[%81, %c0_48, %c0_49] : memref<8x8x384xf32, #tpu.memory_space<vmem>>, vector<1x8x384xf32>
    %83 = vector.shape_cast %82 : vector<1x8x384xf32> to vector<8x384xf32>
    %cst_50 = arith.constant dense<0.000000e+00> : vector<8x384xf32>
    %84 = tpu.matmul %80, %1, %cst_50 {dimension_numbers = #tpu.dot_dimension_numbers<[1], [0], [0], [1], [0, 0, 1, 1], [], []>} : vector<8x128xf32>, vector<128x384xf32>, vector<8x384xf32> -> vector<8x384xf32>
    %85 = vector.extract_strided_slice %83 {offsets = [0, 0], sizes = [8, 128], strides = [1, 1]} : vector<8x384xf32> to vector<8x128xf32>
    %86 = vector.extract_strided_slice %84 {offsets = [0, 0], sizes = [8, 128], strides = [1, 1]} : vector<8x384xf32> to vector<8x128xf32>
    %87 = arith.addf %85, %86 : vector<8x128xf32>
    %88 = vector.extract_strided_slice %83 {offsets = [0, 128], sizes = [8, 128], strides = [1, 1]} : vector<8x384xf32> to vector<8x128xf32>
    %89 = vector.extract_strided_slice %84 {offsets = [0, 128], sizes = [8, 128], strides = [1, 1]} : vector<8x384xf32> to vector<8x128xf32>
    %90 = arith.addf %88, %89 : vector<8x128xf32>
    %cst_51 = arith.constant 5.000000e-01 : f32
    %91 = vector.broadcast %cst_51 : f32 to vector<8x128xf32>
    %92 = arith.mulf %91, %87 : vector<8x128xf32>
    %93 = math.tanh %92 : vector<8x128xf32>
    %cst_52 = arith.constant 1.000000e+00 : f32
    %94 = vector.broadcast %cst_52 : f32 to vector<8x128xf32>
    %95 = arith.addf %94, %93 : vector<8x128xf32>
    %cst_53 = arith.constant 5.000000e-01 : f32
    %96 = vector.broadcast %cst_53 : f32 to vector<8x128xf32>
    %97 = arith.mulf %96, %95 : vector<8x128xf32>
    %cst_54 = arith.constant 5.000000e-01 : f32
    %98 = vector.broadcast %cst_54 : f32 to vector<8x128xf32>
    %99 = arith.mulf %98, %90 : vector<8x128xf32>
    %100 = math.tanh %99 : vector<8x128xf32>
    %cst_55 = arith.constant 1.000000e+00 : f32
    %101 = vector.broadcast %cst_55 : f32 to vector<8x128xf32>
    %102 = arith.addf %101, %100 : vector<8x128xf32>
    %cst_56 = arith.constant 5.000000e-01 : f32
    %103 = vector.broadcast %cst_56 : f32 to vector<8x128xf32>
    %104 = arith.mulf %103, %102 : vector<8x128xf32>
    %105 = vector.extract_strided_slice %83 {offsets = [0, 256], sizes = [8, 128], strides = [1, 1]} : vector<8x384xf32> to vector<8x128xf32>
    %106 = vector.extract_strided_slice %84 {offsets = [0, 256], sizes = [8, 128], strides = [1, 1]} : vector<8x384xf32> to vector<8x128xf32>
    %107 = arith.addf %106, %7 : vector<8x128xf32>
    %108 = arith.mulf %97, %107 : vector<8x128xf32>
    %109 = arith.addf %105, %108 : vector<8x128xf32>
    %110 = math.tanh %109 : vector<8x128xf32>
    %cst_57 = arith.constant 1.000000e+00 : f32
    %111 = vector.broadcast %cst_57 : f32 to vector<8x128xf32>
    %112 = arith.subf %111, %104 : vector<8x128xf32>
    %113 = arith.mulf %112, %110 : vector<8x128xf32>
    %114 = arith.mulf %104, %80 : vector<8x128xf32>
    %115 = arith.addf %113, %114 : vector<8x128xf32>
    %c1_i32_58 = arith.constant 1 : i32
    %116 = arith.index_cast %c1_i32_58 : i32 to index
    %c0_59 = arith.constant 0 : index
    %c0_60 = arith.constant 0 : index
    %117 = vector.load %arg9[%116, %c0_59, %c0_60] : memref<8x8x384xf32, #tpu.memory_space<vmem>>, vector<1x8x384xf32>
    %118 = vector.shape_cast %117 : vector<1x8x384xf32> to vector<8x384xf32>
    %cst_61 = arith.constant dense<0.000000e+00> : vector<8x384xf32>
    %119 = tpu.matmul %115, %1, %cst_61 {dimension_numbers = #tpu.dot_dimension_numbers<[1], [0], [0], [1], [0, 0, 1, 1], [], []>} : vector<8x128xf32>, vector<128x384xf32>, vector<8x384xf32> -> vector<8x384xf32>
    %120 = vector.extract_strided_slice %118 {offsets = [0, 0], sizes = [8, 128], strides = [1, 1]} : vector<8x384xf32> to vector<8x128xf32>
    %121 = vector.extract_strided_slice %119 {offsets = [0, 0], sizes = [8, 128], strides = [1, 1]} : vector<8x384xf32> to vector<8x128xf32>
    %122 = arith.addf %120, %121 : vector<8x128xf32>
    %123 = vector.extract_strided_slice %118 {offsets = [0, 128], sizes = [8, 128], strides = [1, 1]} : vector<8x384xf32> to vector<8x128xf32>
    %124 = vector.extract_strided_slice %119 {offsets = [0, 128], sizes = [8, 128], strides = [1, 1]} : vector<8x384xf32> to vector<8x128xf32>
    %125 = arith.addf %123, %124 : vector<8x128xf32>
    %cst_62 = arith.constant 5.000000e-01 : f32
    %126 = vector.broadcast %cst_62 : f32 to vector<8x128xf32>
    %127 = arith.mulf %126, %122 : vector<8x128xf32>
    %128 = math.tanh %127 : vector<8x128xf32>
    %cst_63 = arith.constant 1.000000e+00 : f32
    %129 = vector.broadcast %cst_63 : f32 to vector<8x128xf32>
    %130 = arith.addf %129, %128 : vector<8x128xf32>
    %cst_64 = arith.constant 5.000000e-01 : f32
    %131 = vector.broadcast %cst_64 : f32 to vector<8x128xf32>
    %132 = arith.mulf %131, %130 : vector<8x128xf32>
    %cst_65 = arith.constant 5.000000e-01 : f32
    %133 = vector.broadcast %cst_65 : f32 to vector<8x128xf32>
    %134 = arith.mulf %133, %125 : vector<8x128xf32>
    %135 = math.tanh %134 : vector<8x128xf32>
    %cst_66 = arith.constant 1.000000e+00 : f32
    %136 = vector.broadcast %cst_66 : f32 to vector<8x128xf32>
    %137 = arith.addf %136, %135 : vector<8x128xf32>
    %cst_67 = arith.constant 5.000000e-01 : f32
    %138 = vector.broadcast %cst_67 : f32 to vector<8x128xf32>
    %139 = arith.mulf %138, %137 : vector<8x128xf32>
    %140 = vector.extract_strided_slice %118 {offsets = [0, 256], sizes = [8, 128], strides = [1, 1]} : vector<8x384xf32> to vector<8x128xf32>
    %141 = vector.extract_strided_slice %119 {offsets = [0, 256], sizes = [8, 128], strides = [1, 1]} : vector<8x384xf32> to vector<8x128xf32>
    %142 = arith.addf %141, %7 : vector<8x128xf32>
    %143 = arith.mulf %132, %142 : vector<8x128xf32>
    %144 = arith.addf %140, %143 : vector<8x128xf32>
    %145 = math.tanh %144 : vector<8x128xf32>
    %cst_68 = arith.constant 1.000000e+00 : f32
    %146 = vector.broadcast %cst_68 : f32 to vector<8x128xf32>
    %147 = arith.subf %146, %139 : vector<8x128xf32>
    %148 = arith.mulf %147, %145 : vector<8x128xf32>
    %149 = arith.mulf %139, %115 : vector<8x128xf32>
    %150 = arith.addf %148, %149 : vector<8x128xf32>
    %c2_i32_69 = arith.constant 2 : i32
    %151 = arith.index_cast %c2_i32_69 : i32 to index
    %c0_70 = arith.constant 0 : index
    %c0_71 = arith.constant 0 : index
    %152 = vector.load %arg9[%151, %c0_70, %c0_71] : memref<8x8x384xf32, #tpu.memory_space<vmem>>, vector<1x8x384xf32>
    %153 = vector.shape_cast %152 : vector<1x8x384xf32> to vector<8x384xf32>
    %cst_72 = arith.constant dense<0.000000e+00> : vector<8x384xf32>
    %154 = tpu.matmul %150, %1, %cst_72 {dimension_numbers = #tpu.dot_dimension_numbers<[1], [0], [0], [1], [0, 0, 1, 1], [], []>} : vector<8x128xf32>, vector<128x384xf32>, vector<8x384xf32> -> vector<8x384xf32>
    %155 = vector.extract_strided_slice %153 {offsets = [0, 0], sizes = [8, 128], strides = [1, 1]} : vector<8x384xf32> to vector<8x128xf32>
    %156 = vector.extract_strided_slice %154 {offsets = [0, 0], sizes = [8, 128], strides = [1, 1]} : vector<8x384xf32> to vector<8x128xf32>
    %157 = arith.addf %155, %156 : vector<8x128xf32>
    %158 = vector.extract_strided_slice %153 {offsets = [0, 128], sizes = [8, 128], strides = [1, 1]} : vector<8x384xf32> to vector<8x128xf32>
    %159 = vector.extract_strided_slice %154 {offsets = [0, 128], sizes = [8, 128], strides = [1, 1]} : vector<8x384xf32> to vector<8x128xf32>
    %160 = arith.addf %158, %159 : vector<8x128xf32>
    %cst_73 = arith.constant 5.000000e-01 : f32
    %161 = vector.broadcast %cst_73 : f32 to vector<8x128xf32>
    %162 = arith.mulf %161, %157 : vector<8x128xf32>
    %163 = math.tanh %162 : vector<8x128xf32>
    %cst_74 = arith.constant 1.000000e+00 : f32
    %164 = vector.broadcast %cst_74 : f32 to vector<8x128xf32>
    %165 = arith.addf %164, %163 : vector<8x128xf32>
    %cst_75 = arith.constant 5.000000e-01 : f32
    %166 = vector.broadcast %cst_75 : f32 to vector<8x128xf32>
    %167 = arith.mulf %166, %165 : vector<8x128xf32>
    %cst_76 = arith.constant 5.000000e-01 : f32
    %168 = vector.broadcast %cst_76 : f32 to vector<8x128xf32>
    %169 = arith.mulf %168, %160 : vector<8x128xf32>
    %170 = math.tanh %169 : vector<8x128xf32>
    %cst_77 = arith.constant 1.000000e+00 : f32
    %171 = vector.broadcast %cst_77 : f32 to vector<8x128xf32>
    %172 = arith.addf %171, %170 : vector<8x128xf32>
    %cst_78 = arith.constant 5.000000e-01 : f32
    %173 = vector.broadcast %cst_78 : f32 to vector<8x128xf32>
    %174 = arith.mulf %173, %172 : vector<8x128xf32>
    %175 = vector.extract_strided_slice %153 {offsets = [0, 256], sizes = [8, 128], strides = [1, 1]} : vector<8x384xf32> to vector<8x128xf32>
    %176 = vector.extract_strided_slice %154 {offsets = [0, 256], sizes = [8, 128], strides = [1, 1]} : vector<8x384xf32> to vector<8x128xf32>
    %177 = arith.addf %176, %7 : vector<8x128xf32>
    %178 = arith.mulf %167, %177 : vector<8x128xf32>
    %179 = arith.addf %175, %178 : vector<8x128xf32>
    %180 = math.tanh %179 : vector<8x128xf32>
    %cst_79 = arith.constant 1.000000e+00 : f32
    %181 = vector.broadcast %cst_79 : f32 to vector<8x128xf32>
    %182 = arith.subf %181, %174 : vector<8x128xf32>
    %183 = arith.mulf %182, %180 : vector<8x128xf32>
    %184 = arith.mulf %174, %150 : vector<8x128xf32>
    %185 = arith.addf %183, %184 : vector<8x128xf32>
    %c3_i32_80 = arith.constant 3 : i32
    %186 = arith.index_cast %c3_i32_80 : i32 to index
    %c0_81 = arith.constant 0 : index
    %c0_82 = arith.constant 0 : index
    %187 = vector.load %arg9[%186, %c0_81, %c0_82] : memref<8x8x384xf32, #tpu.memory_space<vmem>>, vector<1x8x384xf32>
    %188 = vector.shape_cast %187 : vector<1x8x384xf32> to vector<8x384xf32>
    %cst_83 = arith.constant dense<0.000000e+00> : vector<8x384xf32>
    %189 = tpu.matmul %185, %1, %cst_83 {dimension_numbers = #tpu.dot_dimension_numbers<[1], [0], [0], [1], [0, 0, 1, 1], [], []>} : vector<8x128xf32>, vector<128x384xf32>, vector<8x384xf32> -> vector<8x384xf32>
    %190 = vector.extract_strided_slice %188 {offsets = [0, 0], sizes = [8, 128], strides = [1, 1]} : vector<8x384xf32> to vector<8x128xf32>
    %191 = vector.extract_strided_slice %189 {offsets = [0, 0], sizes = [8, 128], strides = [1, 1]} : vector<8x384xf32> to vector<8x128xf32>
    %192 = arith.addf %190, %191 : vector<8x128xf32>
    %193 = vector.extract_strided_slice %188 {offsets = [0, 128], sizes = [8, 128], strides = [1, 1]} : vector<8x384xf32> to vector<8x128xf32>
    %194 = vector.extract_strided_slice %189 {offsets = [0, 128], sizes = [8, 128], strides = [1, 1]} : vector<8x384xf32> to vector<8x128xf32>
    %195 = arith.addf %193, %194 : vector<8x128xf32>
    %cst_84 = arith.constant 5.000000e-01 : f32
    %196 = vector.broadcast %cst_84 : f32 to vector<8x128xf32>
    %197 = arith.mulf %196, %192 : vector<8x128xf32>
    %198 = math.tanh %197 : vector<8x128xf32>
    %cst_85 = arith.constant 1.000000e+00 : f32
    %199 = vector.broadcast %cst_85 : f32 to vector<8x128xf32>
    %200 = arith.addf %199, %198 : vector<8x128xf32>
    %cst_86 = arith.constant 5.000000e-01 : f32
    %201 = vector.broadcast %cst_86 : f32 to vector<8x128xf32>
    %202 = arith.mulf %201, %200 : vector<8x128xf32>
    %cst_87 = arith.constant 5.000000e-01 : f32
    %203 = vector.broadcast %cst_87 : f32 to vector<8x128xf32>
    %204 = arith.mulf %203, %195 : vector<8x128xf32>
    %205 = math.tanh %204 : vector<8x128xf32>
    %cst_88 = arith.constant 1.000000e+00 : f32
    %206 = vector.broadcast %cst_88 : f32 to vector<8x128xf32>
    %207 = arith.addf %206, %205 : vector<8x128xf32>
    %cst_89 = arith.constant 5.000000e-01 : f32
    %208 = vector.broadcast %cst_89 : f32 to vector<8x128xf32>
    %209 = arith.mulf %208, %207 : vector<8x128xf32>
    %210 = vector.extract_strided_slice %188 {offsets = [0, 256], sizes = [8, 128], strides = [1, 1]} : vector<8x384xf32> to vector<8x128xf32>
    %211 = vector.extract_strided_slice %189 {offsets = [0, 256], sizes = [8, 128], strides = [1, 1]} : vector<8x384xf32> to vector<8x128xf32>
    %212 = arith.addf %211, %7 : vector<8x128xf32>
    %213 = arith.mulf %202, %212 : vector<8x128xf32>
    %214 = arith.addf %210, %213 : vector<8x128xf32>
    %215 = math.tanh %214 : vector<8x128xf32>
    %cst_90 = arith.constant 1.000000e+00 : f32
    %216 = vector.broadcast %cst_90 : f32 to vector<8x128xf32>
    %217 = arith.subf %216, %209 : vector<8x128xf32>
    %218 = arith.mulf %217, %215 : vector<8x128xf32>
    %219 = arith.mulf %209, %185 : vector<8x128xf32>
    %220 = arith.addf %218, %219 : vector<8x128xf32>
    %c4_i32_91 = arith.constant 4 : i32
    %221 = arith.index_cast %c4_i32_91 : i32 to index
    %c0_92 = arith.constant 0 : index
    %c0_93 = arith.constant 0 : index
    %222 = vector.load %arg9[%221, %c0_92, %c0_93] : memref<8x8x384xf32, #tpu.memory_space<vmem>>, vector<1x8x384xf32>
    %223 = vector.shape_cast %222 : vector<1x8x384xf32> to vector<8x384xf32>
    %cst_94 = arith.constant dense<0.000000e+00> : vector<8x384xf32>
    %224 = tpu.matmul %220, %1, %cst_94 {dimension_numbers = #tpu.dot_dimension_numbers<[1], [0], [0], [1], [0, 0, 1, 1], [], []>} : vector<8x128xf32>, vector<128x384xf32>, vector<8x384xf32> -> vector<8x384xf32>
    %225 = vector.extract_strided_slice %223 {offsets = [0, 0], sizes = [8, 128], strides = [1, 1]} : vector<8x384xf32> to vector<8x128xf32>
    %226 = vector.extract_strided_slice %224 {offsets = [0, 0], sizes = [8, 128], strides = [1, 1]} : vector<8x384xf32> to vector<8x128xf32>
    %227 = arith.addf %225, %226 : vector<8x128xf32>
    %228 = vector.extract_strided_slice %223 {offsets = [0, 128], sizes = [8, 128], strides = [1, 1]} : vector<8x384xf32> to vector<8x128xf32>
    %229 = vector.extract_strided_slice %224 {offsets = [0, 128], sizes = [8, 128], strides = [1, 1]} : vector<8x384xf32> to vector<8x128xf32>
    %230 = arith.addf %228, %229 : vector<8x128xf32>
    %cst_95 = arith.constant 5.000000e-01 : f32
    %231 = vector.broadcast %cst_95 : f32 to vector<8x128xf32>
    %232 = arith.mulf %231, %227 : vector<8x128xf32>
    %233 = math.tanh %232 : vector<8x128xf32>
    %cst_96 = arith.constant 1.000000e+00 : f32
    %234 = vector.broadcast %cst_96 : f32 to vector<8x128xf32>
    %235 = arith.addf %234, %233 : vector<8x128xf32>
    %cst_97 = arith.constant 5.000000e-01 : f32
    %236 = vector.broadcast %cst_97 : f32 to vector<8x128xf32>
    %237 = arith.mulf %236, %235 : vector<8x128xf32>
    %cst_98 = arith.constant 5.000000e-01 : f32
    %238 = vector.broadcast %cst_98 : f32 to vector<8x128xf32>
    %239 = arith.mulf %238, %230 : vector<8x128xf32>
    %240 = math.tanh %239 : vector<8x128xf32>
    %cst_99 = arith.constant 1.000000e+00 : f32
    %241 = vector.broadcast %cst_99 : f32 to vector<8x128xf32>
    %242 = arith.addf %241, %240 : vector<8x128xf32>
    %cst_100 = arith.constant 5.000000e-01 : f32
    %243 = vector.broadcast %cst_100 : f32 to vector<8x128xf32>
    %244 = arith.mulf %243, %242 : vector<8x128xf32>
    %245 = vector.extract_strided_slice %223 {offsets = [0, 256], sizes = [8, 128], strides = [1, 1]} : vector<8x384xf32> to vector<8x128xf32>
    %246 = vector.extract_strided_slice %224 {offsets = [0, 256], sizes = [8, 128], strides = [1, 1]} : vector<8x384xf32> to vector<8x128xf32>
    %247 = arith.addf %246, %7 : vector<8x128xf32>
    %248 = arith.mulf %237, %247 : vector<8x128xf32>
    %249 = arith.addf %245, %248 : vector<8x128xf32>
    %250 = math.tanh %249 : vector<8x128xf32>
    %cst_101 = arith.constant 1.000000e+00 : f32
    %251 = vector.broadcast %cst_101 : f32 to vector<8x128xf32>
    %252 = arith.subf %251, %244 : vector<8x128xf32>
    %253 = arith.mulf %252, %250 : vector<8x128xf32>
    %254 = arith.mulf %244, %220 : vector<8x128xf32>
    %255 = arith.addf %253, %254 : vector<8x128xf32>
    %c5_i32_102 = arith.constant 5 : i32
    %256 = arith.index_cast %c5_i32_102 : i32 to index
    %c0_103 = arith.constant 0 : index
    %c0_104 = arith.constant 0 : index
    %257 = vector.load %arg9[%256, %c0_103, %c0_104] : memref<8x8x384xf32, #tpu.memory_space<vmem>>, vector<1x8x384xf32>
    %258 = vector.shape_cast %257 : vector<1x8x384xf32> to vector<8x384xf32>
    %cst_105 = arith.constant dense<0.000000e+00> : vector<8x384xf32>
    %259 = tpu.matmul %255, %1, %cst_105 {dimension_numbers = #tpu.dot_dimension_numbers<[1], [0], [0], [1], [0, 0, 1, 1], [], []>} : vector<8x128xf32>, vector<128x384xf32>, vector<8x384xf32> -> vector<8x384xf32>
    %260 = vector.extract_strided_slice %258 {offsets = [0, 0], sizes = [8, 128], strides = [1, 1]} : vector<8x384xf32> to vector<8x128xf32>
    %261 = vector.extract_strided_slice %259 {offsets = [0, 0], sizes = [8, 128], strides = [1, 1]} : vector<8x384xf32> to vector<8x128xf32>
    %262 = arith.addf %260, %261 : vector<8x128xf32>
    %263 = vector.extract_strided_slice %258 {offsets = [0, 128], sizes = [8, 128], strides = [1, 1]} : vector<8x384xf32> to vector<8x128xf32>
    %264 = vector.extract_strided_slice %259 {offsets = [0, 128], sizes = [8, 128], strides = [1, 1]} : vector<8x384xf32> to vector<8x128xf32>
    %265 = arith.addf %263, %264 : vector<8x128xf32>
    %cst_106 = arith.constant 5.000000e-01 : f32
    %266 = vector.broadcast %cst_106 : f32 to vector<8x128xf32>
    %267 = arith.mulf %266, %262 : vector<8x128xf32>
    %268 = math.tanh %267 : vector<8x128xf32>
    %cst_107 = arith.constant 1.000000e+00 : f32
    %269 = vector.broadcast %cst_107 : f32 to vector<8x128xf32>
    %270 = arith.addf %269, %268 : vector<8x128xf32>
    %cst_108 = arith.constant 5.000000e-01 : f32
    %271 = vector.broadcast %cst_108 : f32 to vector<8x128xf32>
    %272 = arith.mulf %271, %270 : vector<8x128xf32>
    %cst_109 = arith.constant 5.000000e-01 : f32
    %273 = vector.broadcast %cst_109 : f32 to vector<8x128xf32>
    %274 = arith.mulf %273, %265 : vector<8x128xf32>
    %275 = math.tanh %274 : vector<8x128xf32>
    %cst_110 = arith.constant 1.000000e+00 : f32
    %276 = vector.broadcast %cst_110 : f32 to vector<8x128xf32>
    %277 = arith.addf %276, %275 : vector<8x128xf32>
    %cst_111 = arith.constant 5.000000e-01 : f32
    %278 = vector.broadcast %cst_111 : f32 to vector<8x128xf32>
    %279 = arith.mulf %278, %277 : vector<8x128xf32>
    %280 = vector.extract_strided_slice %258 {offsets = [0, 256], sizes = [8, 128], strides = [1, 1]} : vector<8x384xf32> to vector<8x128xf32>
    %281 = vector.extract_strided_slice %259 {offsets = [0, 256], sizes = [8, 128], strides = [1, 1]} : vector<8x384xf32> to vector<8x128xf32>
    %282 = arith.addf %281, %7 : vector<8x128xf32>
    %283 = arith.mulf %272, %282 : vector<8x128xf32>
    %284 = arith.addf %280, %283 : vector<8x128xf32>
    %285 = math.tanh %284 : vector<8x128xf32>
    %cst_112 = arith.constant 1.000000e+00 : f32
    %286 = vector.broadcast %cst_112 : f32 to vector<8x128xf32>
    %287 = arith.subf %286, %279 : vector<8x128xf32>
    %288 = arith.mulf %287, %285 : vector<8x128xf32>
    %289 = arith.mulf %279, %255 : vector<8x128xf32>
    %290 = arith.addf %288, %289 : vector<8x128xf32>
    %c6_i32_113 = arith.constant 6 : i32
    %291 = arith.index_cast %c6_i32_113 : i32 to index
    %c0_114 = arith.constant 0 : index
    %c0_115 = arith.constant 0 : index
    %292 = vector.load %arg9[%291, %c0_114, %c0_115] : memref<8x8x384xf32, #tpu.memory_space<vmem>>, vector<1x8x384xf32>
    %293 = vector.shape_cast %292 : vector<1x8x384xf32> to vector<8x384xf32>
    %cst_116 = arith.constant dense<0.000000e+00> : vector<8x384xf32>
    %294 = tpu.matmul %290, %1, %cst_116 {dimension_numbers = #tpu.dot_dimension_numbers<[1], [0], [0], [1], [0, 0, 1, 1], [], []>} : vector<8x128xf32>, vector<128x384xf32>, vector<8x384xf32> -> vector<8x384xf32>
    %295 = vector.extract_strided_slice %293 {offsets = [0, 0], sizes = [8, 128], strides = [1, 1]} : vector<8x384xf32> to vector<8x128xf32>
    %296 = vector.extract_strided_slice %294 {offsets = [0, 0], sizes = [8, 128], strides = [1, 1]} : vector<8x384xf32> to vector<8x128xf32>
    %297 = arith.addf %295, %296 : vector<8x128xf32>
    %298 = vector.extract_strided_slice %293 {offsets = [0, 128], sizes = [8, 128], strides = [1, 1]} : vector<8x384xf32> to vector<8x128xf32>
    %299 = vector.extract_strided_slice %294 {offsets = [0, 128], sizes = [8, 128], strides = [1, 1]} : vector<8x384xf32> to vector<8x128xf32>
    %300 = arith.addf %298, %299 : vector<8x128xf32>
    %cst_117 = arith.constant 5.000000e-01 : f32
    %301 = vector.broadcast %cst_117 : f32 to vector<8x128xf32>
    %302 = arith.mulf %301, %297 : vector<8x128xf32>
    %303 = math.tanh %302 : vector<8x128xf32>
    %cst_118 = arith.constant 1.000000e+00 : f32
    %304 = vector.broadcast %cst_118 : f32 to vector<8x128xf32>
    %305 = arith.addf %304, %303 : vector<8x128xf32>
    %cst_119 = arith.constant 5.000000e-01 : f32
    %306 = vector.broadcast %cst_119 : f32 to vector<8x128xf32>
    %307 = arith.mulf %306, %305 : vector<8x128xf32>
    %cst_120 = arith.constant 5.000000e-01 : f32
    %308 = vector.broadcast %cst_120 : f32 to vector<8x128xf32>
    %309 = arith.mulf %308, %300 : vector<8x128xf32>
    %310 = math.tanh %309 : vector<8x128xf32>
    %cst_121 = arith.constant 1.000000e+00 : f32
    %311 = vector.broadcast %cst_121 : f32 to vector<8x128xf32>
    %312 = arith.addf %311, %310 : vector<8x128xf32>
    %cst_122 = arith.constant 5.000000e-01 : f32
    %313 = vector.broadcast %cst_122 : f32 to vector<8x128xf32>
    %314 = arith.mulf %313, %312 : vector<8x128xf32>
    %315 = vector.extract_strided_slice %293 {offsets = [0, 256], sizes = [8, 128], strides = [1, 1]} : vector<8x384xf32> to vector<8x128xf32>
    %316 = vector.extract_strided_slice %294 {offsets = [0, 256], sizes = [8, 128], strides = [1, 1]} : vector<8x384xf32> to vector<8x128xf32>
    %317 = arith.addf %316, %7 : vector<8x128xf32>
    %318 = arith.mulf %307, %317 : vector<8x128xf32>
    %319 = arith.addf %315, %318 : vector<8x128xf32>
    %320 = math.tanh %319 : vector<8x128xf32>
    %cst_123 = arith.constant 1.000000e+00 : f32
    %321 = vector.broadcast %cst_123 : f32 to vector<8x128xf32>
    %322 = arith.subf %321, %314 : vector<8x128xf32>
    %323 = arith.mulf %322, %320 : vector<8x128xf32>
    %324 = arith.mulf %314, %290 : vector<8x128xf32>
    %325 = arith.addf %323, %324 : vector<8x128xf32>
    %c7_i32_124 = arith.constant 7 : i32
    %326 = arith.index_cast %c7_i32_124 : i32 to index
    %c0_125 = arith.constant 0 : index
    %c0_126 = arith.constant 0 : index
    %327 = vector.load %arg9[%326, %c0_125, %c0_126] : memref<8x8x384xf32, #tpu.memory_space<vmem>>, vector<1x8x384xf32>
    %328 = vector.shape_cast %327 : vector<1x8x384xf32> to vector<8x384xf32>
    %cst_127 = arith.constant dense<0.000000e+00> : vector<8x384xf32>
    %329 = tpu.matmul %325, %1, %cst_127 {dimension_numbers = #tpu.dot_dimension_numbers<[1], [0], [0], [1], [0, 0, 1, 1], [], []>} : vector<8x128xf32>, vector<128x384xf32>, vector<8x384xf32> -> vector<8x384xf32>
    %330 = vector.extract_strided_slice %328 {offsets = [0, 0], sizes = [8, 128], strides = [1, 1]} : vector<8x384xf32> to vector<8x128xf32>
    %331 = vector.extract_strided_slice %329 {offsets = [0, 0], sizes = [8, 128], strides = [1, 1]} : vector<8x384xf32> to vector<8x128xf32>
    %332 = arith.addf %330, %331 : vector<8x128xf32>
    %333 = vector.extract_strided_slice %328 {offsets = [0, 128], sizes = [8, 128], strides = [1, 1]} : vector<8x384xf32> to vector<8x128xf32>
    %334 = vector.extract_strided_slice %329 {offsets = [0, 128], sizes = [8, 128], strides = [1, 1]} : vector<8x384xf32> to vector<8x128xf32>
    %335 = arith.addf %333, %334 : vector<8x128xf32>
    %cst_128 = arith.constant 5.000000e-01 : f32
    %336 = vector.broadcast %cst_128 : f32 to vector<8x128xf32>
    %337 = arith.mulf %336, %332 : vector<8x128xf32>
    %338 = math.tanh %337 : vector<8x128xf32>
    %cst_129 = arith.constant 1.000000e+00 : f32
    %339 = vector.broadcast %cst_129 : f32 to vector<8x128xf32>
    %340 = arith.addf %339, %338 : vector<8x128xf32>
    %cst_130 = arith.constant 5.000000e-01 : f32
    %341 = vector.broadcast %cst_130 : f32 to vector<8x128xf32>
    %342 = arith.mulf %341, %340 : vector<8x128xf32>
    %cst_131 = arith.constant 5.000000e-01 : f32
    %343 = vector.broadcast %cst_131 : f32 to vector<8x128xf32>
    %344 = arith.mulf %343, %335 : vector<8x128xf32>
    %345 = math.tanh %344 : vector<8x128xf32>
    %cst_132 = arith.constant 1.000000e+00 : f32
    %346 = vector.broadcast %cst_132 : f32 to vector<8x128xf32>
    %347 = arith.addf %346, %345 : vector<8x128xf32>
    %cst_133 = arith.constant 5.000000e-01 : f32
    %348 = vector.broadcast %cst_133 : f32 to vector<8x128xf32>
    %349 = arith.mulf %348, %347 : vector<8x128xf32>
    %350 = vector.extract_strided_slice %328 {offsets = [0, 256], sizes = [8, 128], strides = [1, 1]} : vector<8x384xf32> to vector<8x128xf32>
    %351 = vector.extract_strided_slice %329 {offsets = [0, 256], sizes = [8, 128], strides = [1, 1]} : vector<8x384xf32> to vector<8x128xf32>
    %352 = arith.addf %351, %7 : vector<8x128xf32>
    %353 = arith.mulf %342, %352 : vector<8x128xf32>
    %354 = arith.addf %350, %353 : vector<8x128xf32>
    %355 = math.tanh %354 : vector<8x128xf32>
    %cst_134 = arith.constant 1.000000e+00 : f32
    %356 = vector.broadcast %cst_134 : f32 to vector<8x128xf32>
    %357 = arith.subf %356, %349 : vector<8x128xf32>
    %358 = arith.mulf %357, %355 : vector<8x128xf32>
    %359 = arith.mulf %349, %325 : vector<8x128xf32>
    %360 = arith.addf %358, %359 : vector<8x128xf32>
    %c8_i32_135 = arith.constant 8 : i32
    %c0_136 = arith.constant 0 : index
    %c0_137 = arith.constant 0 : index
    %361 = vector.load %arg6[%c0_136, %c0_137] : memref<128x128xf32, #tpu.memory_space<vmem>>, vector<128x128xf32>
    %cst_138 = arith.constant dense<0.000000e+00> : vector<8x128xf32>
    %362 = tpu.matmul %360, %361, %cst_138 {dimension_numbers = #tpu.dot_dimension_numbers<[1], [0], [0], [1], [0, 0, 1, 1], [], []>} : vector<8x128xf32>, vector<128x128xf32>, vector<8x128xf32> -> vector<8x128xf32>
    %c0_139 = arith.constant 0 : index
    %c0_140 = arith.constant 0 : index
    %363 = vector.load %arg7[%c0_139, %c0_140] : memref<1x128xf32, #tpu.memory_space<vmem>>, vector<1x128xf32>
    %364 = vector.broadcast %363 : vector<1x128xf32> to vector<8x128xf32>
    %365 = arith.addf %362, %364 : vector<8x128xf32>
    %c0_141 = arith.constant 0 : index
    %c0_142 = arith.constant 0 : index
    %366 = vector.load %arg8[%c0_141, %c0_142] : memref<8x128xf32, #tpu.memory_space<vmem>>, vector<8x128xf32>
    tpu.vector_store %arg8[%c0_141, %c0_142], %365 {strides = array<i32>} : memref<8x128xf32, #tpu.memory_space<vmem>>, vector<8x128xf32>,
    return
  }
  func.func @transform_0(%arg0: i32) -> (i32, i32, i32) {
    %c0_i32 = arith.constant 0 : i32
    %c0_i32_0 = arith.constant 0 : i32
    %c0_i32_1 = arith.constant 0 : i32
    return %c0_i32, %arg0, %c0_i32_0 : i32, i32, i32
  }
  func.func @transform_1(%arg0: i32) -> (i32, i32) {
    %c0_i32 = arith.constant 0 : i32
    %c0_i32_0 = arith.constant 0 : i32
    %c0_i32_1 = arith.constant 0 : i32
    return %c0_i32, %c0_i32_0 : i32, i32
  }
  func.func @transform_2(%arg0: i32) -> (i32, i32) {
    %c0_i32 = arith.constant 0 : i32
    %c0_i32_0 = arith.constant 0 : i32
    %c0_i32_1 = arith.constant 0 : i32
    return %c0_i32, %c0_i32_0 : i32, i32
  }
  func.func @transform_3(%arg0: i32) -> (i32, i32) {
    %c0_i32 = arith.constant 0 : i32
    %c0_i32_0 = arith.constant 0 : i32
    %c0_i32_1 = arith.constant 0 : i32
    return %c0_i32, %c0_i32_0 : i32, i32
  }
  func.func @transform_4(%arg0: i32) -> (i32, i32) {
    %c0_i32 = arith.constant 0 : i32
    %c0_i32_0 = arith.constant 0 : i32
    %c0_i32_1 = arith.constant 0 : i32
    return %c0_i32, %c0_i32_0 : i32, i32
  }
  func.func @transform_5(%arg0: i32) -> (i32, i32) {
    %c0_i32 = arith.constant 0 : i32
    %c0_i32_0 = arith.constant 0 : i32
    %c0_i32_1 = arith.constant 0 : i32
    return %c0_i32, %c0_i32_0 : i32, i32
  }
  func.func @transform_6(%arg0: i32) -> (i32, i32) {
    %c0_i32 = arith.constant 0 : i32
    %c0_i32_0 = arith.constant 0 : i32
    %c0_i32_1 = arith.constant 0 : i32
    return %c0_i32, %c0_i32_0 : i32, i32
  }
  func.func @transform_7(%arg0: i32) -> (i32, i32) {
    %c0_i32 = arith.constant 0 : i32
    %c0_i32_0 = arith.constant 0 : i32
    return %arg0, %c0_i32 : i32, i32
  }
}

</mosaic_0001>

<llo_original>
// kernel: tpu_custom_call.1
$region0: #{tpu_custom_call.1}
  #allocation0 [shape = 'u32[]', space=smem, size = 0x4, offset = 0x4, fixed_abs, tag = 'smem constant byte address 0x4 - core index']
  #allocation1 [shape = 'u32[144,128]{1,0:T(1,128)}', space=vmem, size = 0x12000, scoped, tag = 'internal scratch']
  #allocation2 [shape = 'f32[8,8,384]{2,1,0:T(8,128)}', space=vmem, size = 0x18000, scoped, tag = 'scratch operand']
  %s0 = inlined_call_operand.hbm [shape: f32[8,8,16], index: 0, kind: input, shape index: {}]
  %s1 = inlined_call_operand.hbm [shape: f32[16,384], index: 1, kind: input, shape index: {}]
  %s2 = inlined_call_operand.vmem [shape: f32[1,384], index: 2, kind: input, shape index: {}]
  %s3 = inlined_call_operand.hbm [shape: f32[128,384], index: 3, kind: input, shape index: {}]
  %s4 = inlined_call_operand.vmem [shape: f32[1,128], index: 4, kind: input, shape index: {}]
  %s5 = inlined_call_operand.hbm [shape: f32[128,128], index: 5, kind: input, shape index: {}]
  %s6 = inlined_call_operand.vmem [shape: f32[1,128], index: 6, kind: input, shape index: {}]
  %s7 = inlined_call_operand.hbm [shape: f32[8,128], index: 7, kind: output, shape index: {}]
  %s8 = sld [smem:[#allocation0]]
  $region54: #{tpu_custom_call.1} parent=0
    _
  %s10 = ssub.s32 1, %s8
  %s11 = scalar_select 0, %s10, %s8
  $region1: #{tpu_custom_call.1} parent=0
    #allocation3 [shape = 'u8[32768]{0}', space=vmem, size = 0x8000, scoped, tag = 'input window, operand 0, single buffered']
    #allocation4 [shape = 's32[1]{0}', space=sflag, size = 0x4, scoped, tag = 'scoped memory for tpu_custom_call.1']
    #allocation5 [shape = 's32[1]{0}', space=sflag, size = 0x4, scoped, tag = 'scoped memory for tpu_custom_call.1']
    #allocation6 [shape = 'u8[24576]{0}', space=vmem, size = 0x6000, scoped, tag = 'input window, operand 1, single buffered']
    #allocation7 [shape = 's32[1]{0}', space=sflag, size = 0x4, scoped, tag = 'scoped memory for tpu_custom_call.1']
    #allocation8 [shape = 'u8[196608]{0}', space=vmem, size = 0x30000, scoped, tag = 'input window, operand 3, single buffered']
    #allocation9 [shape = 'u8[65536]{0}', space=vmem, size = 0x10000, scoped, tag = 'input window, operand 5, single buffered']
    #allocation10 [shape = 's32[1]{0}', space=sflag, size = 0x4, scoped, tag = 'scoped memory for tpu_custom_call.1']
    #allocation11 [shape = 'u8[4096]{0}', space=vmem, size = 0x1000, scoped, tag = 'output window, operand 0, single buffered']
    %12 = vsyncpa [#allocation4], 0
    %13 = vsyncpa [#allocation7], 0
    %14 = vsyncpa [#allocation10], 0
    %15 = vsyncpa [#allocation5], 0
    // Predicated region
    $region2: #{tpu_custom_call.1} parent=1 // pred_check
      _
    $region3: #{tpu_custom_call.1} parent=1 // pred_check_branch
      %17 = sbr.rel (0) target = $region5
    $region4: #{tpu_custom_call.1} parent=1 // pred_region
      %s19 = ssub.s32 1024, 1024
      %20 = vsyncadd [#allocation4], %s19
      %s21 = sshll.u32 [#allocation3], 4
      %s22 = int_to_ptr.vmem [resolvable:$true] %s21
      %27 = dma.hbm_to_vmem [thread:$0]  %s0, 1024, %s22, [#allocation4], 128, 128, 8
    $region5: #{tpu_custom_call.1} parent=1 // pred_fallthru
      _
    // Predicated region
    $region6: #{tpu_custom_call.1} parent=1 // pred_check
      _
    $region7: #{tpu_custom_call.1} parent=1 // pred_check_branch
      %29 = sbr.rel (0) target = $region9
    $region8: #{tpu_custom_call.1} parent=1 // pred_region
      %s31 = ssub.s32 768, 768
      %32 = vsyncadd [#allocation7], %s31
      %s33 = sshll.u32 [#allocation6], 4
      %s34 = int_to_ptr.vmem [resolvable:$true] %s33
      %39 = dma.hbm_to_vmem [thread:$0]  %s1, 768, %s34, [#allocation7], 384, 384, 24
    $region9: #{tpu_custom_call.1} parent=1 // pred_fallthru
      _
    // Predicated region
    $region10: #{tpu_custom_call.1} parent=1 // pred_check
      _
    $region11: #{tpu_custom_call.1} parent=1 // pred_check_branch
      %41 = sbr.rel (0) target = $region13
    $region12: #{tpu_custom_call.1} parent=1 // pred_region
      _
    $region13: #{tpu_custom_call.1} parent=1 // pred_fallthru
      _
    // Predicated region
    $region14: #{tpu_custom_call.1} parent=1 // pred_check
      _
    $region15: #{tpu_custom_call.1} parent=1 // pred_check_branch
      %43 = sbr.rel (0) target = $region17
    $region16: #{tpu_custom_call.1} parent=1 // pred_region
      %s45 = ssub.s32 6144, 6144
      %46 = vsyncadd [#allocation7], %s45
      %s47 = sshll.u32 [#allocation8], 4
      %s48 = int_to_ptr.vmem [resolvable:$true] %s47
      %53 = dma.hbm_to_vmem [thread:$0]  %s3, 6144, %s48, [#allocation7], 384, 384, 24
    $region17: #{tpu_custom_call.1} parent=1 // pred_fallthru
      _
    // Predicated region
    $region18: #{tpu_custom_call.1} parent=1 // pred_check
      _
    $region19: #{tpu_custom_call.1} parent=1 // pred_check_branch
      %55 = sbr.rel (0) target = $region21
    $region20: #{tpu_custom_call.1} parent=1 // pred_region
      _
    $region21: #{tpu_custom_call.1} parent=1 // pred_fallthru
      _
    // Predicated region
    $region22: #{tpu_custom_call.1} parent=1 // pred_check
      _
    $region23: #{tpu_custom_call.1} parent=1 // pred_check_branch
      %57 = sbr.rel (0) target = $region25
    $region24: #{tpu_custom_call.1} parent=1 // pred_region
      %s59 = ssub.s32 2048, 2048
      %60 = vsyncadd [#allocation10], %s59
      %s61 = sshll.u32 [#allocation9], 4
      %s62 = int_to_ptr.vmem [resolvable:$true] %s61
      %67 = dma.hbm_to_vmem [thread:$0]  %s5, 2048, %s62, [#allocation10], 128, 128, 8
    $region25: #{tpu_custom_call.1} parent=1 // pred_fallthru
      _
    // Predicated region
    $region26: #{tpu_custom_call.1} parent=1 // pred_check
      _
    $region27: #{tpu_custom_call.1} parent=1 // pred_check_branch
      %69 = sbr.rel (0) target = $region29
    $region28: #{tpu_custom_call.1} parent=1 // pred_region
      _
    $region29: #{tpu_custom_call.1} parent=1 // pred_fallthru
      _
    // Predicated region
    $region30: #{tpu_custom_call.1} parent=1 // pred_check
      _
    $region31: #{tpu_custom_call.1} parent=1 // pred_check_branch
      %71 = sbr.rel (0) target = $region33
    $region32: #{tpu_custom_call.1} parent=1 // pred_region
      %72 = dma.done [#allocation4], 1024
    $region33: #{tpu_custom_call.1} parent=1 // pred_fallthru
      _
    // Predicated region
    $region34: #{tpu_custom_call.1} parent=1 // pred_check
      _
    $region35: #{tpu_custom_call.1} parent=1 // pred_check_branch
      %74 = sbr.rel (0) target = $region37
    $region36: #{tpu_custom_call.1} parent=1 // pred_region
      %75 = dma.done [#allocation7], 768
    $region37: #{tpu_custom_call.1} parent=1 // pred_fallthru
      _
    // Predicated region
    $region38: #{tpu_custom_call.1} parent=1 // pred_check
      _
    $region39: #{tpu_custom_call.1} parent=1 // pred_check_branch
      %77 = sbr.rel (0) target = $region41
    $region40: #{tpu_custom_call.1} parent=1 // pred_region
      %78 = dma.done [#allocation7], 6144
    $region41: #{tpu_custom_call.1} parent=1 // pred_fallthru
      _
    // Predicated region
    $region42: #{tpu_custom_call.1} parent=1 // pred_check
      _
    $region43: #{tpu_custom_call.1} parent=1 // pred_check_branch
      %80 = sbr.rel (0) target = $region45
    $region44: #{tpu_custom_call.1} parent=1 // pred_region
      %81 = dma.done [#allocation10], 2048
    $region45: #{tpu_custom_call.1} parent=1 // pred_fallthru
      _
    %v82 = vld [vmem:[#allocation6] sm:$0xff]
    %v83 = vld [vmem:[#allocation6 + $0x8] sm:$0xff]
    %v84 = vld [vmem:[#allocation6 + $0x10] sm:$0xff]
    %v85 = vld [vmem:[#allocation6 + $0x18] sm:$0xff]
    %v86 = vld [vmem:[#allocation6 + $0x20] sm:$0xff]
    %v87 = vld [vmem:[#allocation6 + $0x28] sm:$0xff]
    %v88 = vld [vmem:[#allocation8] sm:$0xff]
    %v89 = vld [vmem:[#allocation8 + $0x8] sm:$0xff]
    %v90 = vld [vmem:[#allocation8 + $0x10] sm:$0xff]
    %v91 = vld [vmem:[#allocation8 + $0x18] sm:$0xff]
    %v92 = vld [vmem:[#allocation8 + $0x20] sm:$0xff]
    %v93 = vld [vmem:[#allocation8 + $0x28] sm:$0xff]
    %v94 = vld [vmem:[#allocation8 + $0x30] sm:$0xff]
    %v95 = vld [vmem:[#allocation8 + $0x38] sm:$0xff]
    %v96 = vld [vmem:[#allocation8 + $0x40] sm:$0xff]
    %v97 = vld [vmem:[#allocation8 + $0x48] sm:$0xff]
    %v98 = vld [vmem:[#allocation8 + $0x50] sm:$0xff]
    %v99 = vld [vmem:[#allocation8 + $0x58] sm:$0xff]
    %v100 = vld [vmem:[#allocation8 + $0x60] sm:$0xff]
    %v101 = vld [vmem:[#allocation8 + $0x68] sm:$0xff]
    %v102 = vld [vmem:[#allocation8 + $0x70] sm:$0xff]
    %v103 = vld [vmem:[#allocation8 + $0x78] sm:$0xff]
    %v104 = vld [vmem:[#allocation8 + $0x80] sm:$0xff]
    %v105 = vld [vmem:[#allocation8 + $0x88] sm:$0xff]
    %v106 = vld [vmem:[#allocation8 + $0x90] sm:$0xff]
    %v107 = vld [vmem:[#allocation8 + $0x98] sm:$0xff]
    %v108 = vld [vmem:[#allocation8 + $0xa0] sm:$0xff]
    %v109 = vld [vmem:[#allocation8 + $0xa8] sm:$0xff]
    %v110 = vld [vmem:[#allocation8 + $0xb0] sm:$0xff]
    %v111 = vld [vmem:[#allocation8 + $0xb8] sm:$0xff]
    %v112 = vld [vmem:[#allocation8 + $0xc0] sm:$0xff]
    %v113 = vld [vmem:[#allocation8 + $0xc8] sm:$0xff]
    %v114 = vld [vmem:[#allocation8 + $0xd0] sm:$0xff]
    %v115 = vld [vmem:[#allocation8 + $0xd8] sm:$0xff]
    %v116 = vld [vmem:[#allocation8 + $0xe0] sm:$0xff]
    %v117 = vld [vmem:[#allocation8 + $0xe8] sm:$0xff]
    %v118 = vld [vmem:[#allocation8 + $0xf0] sm:$0xff]
    %v119 = vld [vmem:[#allocation8 + $0xf8] sm:$0xff]
    %v120 = vld [vmem:[#allocation8 + $0x100] sm:$0xff]
    %v121 = vld [vmem:[#allocation8 + $0x108] sm:$0xff]
    %v122 = vld [vmem:[#allocation8 + $0x110] sm:$0xff]
    %v123 = vld [vmem:[#allocation8 + $0x118] sm:$0xff]
    %v124 = vld [vmem:[#allocation8 + $0x120] sm:$0xff]
    %v125 = vld [vmem:[#allocation8 + $0x128] sm:$0xff]
    %v126 = vld [vmem:[#allocation8 + $0x130] sm:$0xff]
    %v127 = vld [vmem:[#allocation8 + $0x138] sm:$0xff]
    %v128 = vld [vmem:[#allocation8 + $0x140] sm:$0xff]
    %v129 = vld [vmem:[#allocation8 + $0x148] sm:$0xff]
    %v130 = vld [vmem:[#allocation8 + $0x150] sm:$0xff]
    %v131 = vld [vmem:[#allocation8 + $0x158] sm:$0xff]
    %v132 = vld [vmem:[#allocation8 + $0x160] sm:$0xff]
    %v133 = vld [vmem:[#allocation8 + $0x168] sm:$0xff]
    %v134 = vld [vmem:[#allocation8 + $0x170] sm:$0xff]
    %v135 = vld [vmem:[#allocation8 + $0x178] sm:$0xff]
    %v136 = vld [vmem:[%s2] sm:$0x7]
    %v138 = vlaneseq
    %v139 = vshrl.u32 %v138, 7
    %v140 = vsub.s32 0, %v139
    %v141 = vrot.slane %v136, %v140
    %v142 = vlaneseq
    %v143 = vshrl.u32 %v142, 7
    %v144 = vsub.s32 1, %v143
    %v145 = vrot.slane %v136, %v144
    %v146 = vlaneseq
    %v147 = vshrl.u32 %v146, 7
    %v148 = vsub.s32 2, %v147
    %v149 = vrot.slane %v136, %v148
    %v153 = vld [vmem:[%s4] sm:$0x1]
    %v155 = vlaneseq
    %v156 = vshrl.u32 %v155, 7
    %v157 = vsub.s32 0, %v156
    %v158 = vrot.slane %v153, %v157
    %v160 = vld [vmem:[#allocation3] sm:$0xff]
    %vm161 = vcmask 130048
    %v163 = vsel %vm161, %v160, 0
    %165 = vmatprep.subr.mxu0 0.0
    %166 = vmatpush1.msra.mxu0 0.0
    %167 = vmatprep.subr.mxu0 0.0
    %168 = vmatpush1.msra.mxu0 0.0
    %169 = vmatprep.subr.mxu0 0.0
    %170 = vmatpush1.msra.mxu0 0.0
    %171 = vmatprep.subr.mxu0 0.0
    %172 = vmatpush1.msra.mxu0 0.0
    %173 = vmatprep.subr.mxu0 0.0
    %174 = vmatpush1.msra.mxu0 0.0
    %175 = vmatprep.subr.mxu0 0.0
    %176 = vmatpush1.msra.mxu0 0.0
    %177 = vmatprep.subr.mxu0 0.0
    %178 = vmatpush1.msra.mxu0 0.0
    %179 = vmatprep.subr.mxu0 0.0
    %180 = vmatpush1.msra.mxu0 0.0
    %181 = vmatprep.subr.mxu0 0.0
    %182 = vmatpush1.msra.mxu0 0.0
    %183 = vmatprep.subr.mxu0 0.0
    %184 = vmatpush1.msra.mxu0 0.0
    %185 = vmatprep.subr.mxu0 0.0
    %186 = vmatpush1.msra.mxu0 0.0
    %187 = vmatprep.subr.mxu0 0.0
    %188 = vmatpush1.msra.mxu0 0.0
    %189 = vmatprep.subr.mxu0 0.0
    %190 = vmatpush1.msra.mxu0 0.0
    %191 = vmatprep.subr.mxu0 0.0
    %192 = vmatpush1.msra.mxu0 0.0
    %193 = vmatprep.subr.mxu0 %v86
    %194 = vmatpush1.msra.mxu0 %v85
    %195 = vmatprep.subr.mxu0 %v83
    %196 = vmatpush1.msra.mxu0 %v82
    %197 = vmatprep.subr.mxu0 0.0
    %198 = vmatpush2.msra.mxu0 0.0
    %199 = vmatprep.subr.mxu0 0.0
    %200 = vmatpush2.msra.mxu0 0.0
    %201 = vmatprep.subr.mxu0 0.0
    %202 = vmatpush2.msra.mxu0 0.0
    %203 = vmatprep.subr.mxu0 0.0
    %204 = vmatpush2.msra.mxu0 0.0
    %205 = vmatprep.subr.mxu0 0.0
    %206 = vmatpush2.msra.mxu0 0.0
    %207 = vmatprep.subr.mxu0 0.0
    %208 = vmatpush2.msra.mxu0 0.0
    %209 = vmatprep.subr.mxu0 0.0
    %210 = vmatpush2.msra.mxu0 0.0
    %211 = vmatprep.subr.mxu0 0.0
    %212 = vmatpush2.msra.mxu0 0.0
    %213 = vmatprep.subr.mxu0 0.0
    %214 = vmatpush2.msra.mxu0 0.0
    %215 = vmatprep.subr.mxu0 0.0
    %216 = vmatpush2.msra.mxu0 0.0
    %217 = vmatprep.subr.mxu0 0.0
    %218 = vmatpush2.msra.mxu0 0.0
    %219 = vmatprep.subr.mxu0 0.0
    %220 = vmatpush2.msra.mxu0 0.0
    %221 = vmatprep.subr.mxu0 0.0
    %222 = vmatpush2.msra.mxu0 0.0
    %223 = vmatprep.subr.mxu0 0.0
    %224 = vmatpush2.msra.mxu0 0.0
    %225 = vmatprep.subr.mxu0 0.0
    %226 = vmatpush2.msra.mxu0 0.0
    %227 = vmatprep.subr.mxu0 0.0
    %228 = vmatpush2.msra.mxu0 0.0
    %229 = vmatprep.mubr.f32.mxu0 0.0
    %230 = vmatmul.mubr.f32.gmra.mxu0 %v163
    %v231 = vpop.f32.mrf.mxu0
    %v232 = vadd.f32 %v141, %v231
    %v233 = vpop.f32.mrf.mxu0
    %v234 = vadd.f32 %v145, %v233
    %235 = vdwg.mxu0
    %236 = vmatprep.subr.mxu0 0.0
    %237 = vmatpush1.msra.mxu0 0.0
    %238 = vmatprep.subr.mxu0 0.0
    %239 = vmatpush1.msra.mxu0 0.0
    %240 = vmatprep.subr.mxu0 0.0
    %241 = vmatpush1.msra.mxu0 0.0
    %242 = vmatprep.subr.mxu0 0.0
    %243 = vmatpush1.msra.mxu0 0.0
    %244 = vmatprep.subr.mxu0 0.0
    %245 = vmatpush1.msra.mxu0 0.0
    %246 = vmatprep.subr.mxu0 0.0
    %247 = vmatpush1.msra.mxu0 0.0
    %248 = vmatprep.subr.mxu0 0.0
    %249 = vmatpush1.msra.mxu0 0.0
    %250 = vmatprep.subr.mxu0 0.0
    %251 = vmatpush1.msra.mxu0 0.0
    %252 = vmatprep.subr.mxu0 0.0
    %253 = vmatpush1.msra.mxu0 0.0
    %254 = vmatprep.subr.mxu0 0.0
    %255 = vmatpush1.msra.mxu0 0.0
    %256 = vmatprep.subr.mxu0 0.0
    %257 = vmatpush1.msra.mxu0 0.0
    %258 = vmatprep.subr.mxu0 0.0
    %259 = vmatpush1.msra.mxu0 0.0
    %260 = vmatprep.subr.mxu0 0.0
    %261 = vmatpush1.msra.mxu0 0.0
    %262 = vmatprep.subr.mxu0 0.0
    %263 = vmatpush1.msra.mxu0 0.0
    %264 = vmatprep.subr.mxu0 0.0
    %265 = vmatpush1.msra.mxu0 %v87
    %266 = vmatprep.subr.mxu0 0.0
    %267 = vmatpush1.msra.mxu0 %v84
    %268 = vmatprep.subr.mxu0 0.0
    %269 = vmatpush2.msra.mxu0 0.0
    %270 = vmatprep.subr.mxu0 0.0
    %271 = vmatpush2.msra.mxu0 0.0
    %272 = vmatprep.subr.mxu0 0.0
    %273 = vmatpush2.msra.mxu0 0.0
    %274 = vmatprep.subr.mxu0 0.0
    %275 = vmatpush2.msra.mxu0 0.0
    %276 = vmatprep.subr.mxu0 0.0
    %277 = vmatpush2.msra.mxu0 0.0
    %278 = vmatprep.subr.mxu0 0.0
    %279 = vmatpush2.msra.mxu0 0.0
    %280 = vmatprep.subr.mxu0 0.0
    %281 = vmatpush2.msra.mxu0 0.0
    %282 = vmatprep.subr.mxu0 0.0
    %283 = vmatpush2.msra.mxu0 0.0
    %284 = vmatprep.subr.mxu0 0.0
    %285 = vmatpush2.msra.mxu0 0.0
    %286 = vmatprep.subr.mxu0 0.0
    %287 = vmatpush2.msra.mxu0 0.0
    %288 = vmatprep.subr.mxu0 0.0
    %289 = vmatpush2.msra.mxu0 0.0
    %290 = vmatprep.subr.mxu0 0.0
    %291 = vmatpush2.msra.mxu0 0.0
    %292 = vmatprep.subr.mxu0 0.0
    %293 = vmatpush2.msra.mxu0 0.0
    %294 = vmatprep.subr.mxu0 0.0
    %295 = vmatpush2.msra.mxu0 0.0
    %296 = vmatprep.subr.mxu0 0.0
    %297 = vmatpush2.msra.mxu0 0.0
    %298 = vmatprep.subr.mxu0 0.0
    %299 = vmatpush2.msra.mxu0 0.0
    %300 = vmatprep.mubr.f32.mxu0 0.0
    %301 = vmatmul.mubr.f32.gmra.mxu0 %v163
    %v302 = vpop.f32.mrf.mxu0
    %v303 = vadd.f32 %v149, %v302
    %v304 = vpop.f32.mrf.mxu0
    %305 = vdwg.mxu0
    %306 = vst [vmem:[#allocation2] sm:$0xff] %v232
    %307 = vst [vmem:[#allocation2 + $0x8] sm:$0xff] %v234
    %308 = vst [vmem:[#allocation2 + $0x10] sm:$0xff] %v303
    %s309 = scalar_lea.vmem [#allocation3], 8
    %v310 = vld [vmem:[%s309] sm:$0xff]
    %v312 = vsel %vm161, %v310, 0
    %314 = vmatprep.subr.mxu0 0.0
    %315 = vmatpush1.msra.mxu0 0.0
    %316 = vmatprep.subr.mxu0 0.0
    %317 = vmatpush1.msra.mxu0 0.0
    %318 = vmatprep.subr.mxu0 0.0
    %319 = vmatpush1.msra.mxu0 0.0
    %320 = vmatprep.subr.mxu0 0.0
    %321 = vmatpush1.msra.mxu0 0.0
    %322 = vmatprep.subr.mxu0 0.0
    %323 = vmatpush1.msra.mxu0 0.0
    %324 = vmatprep.subr.mxu0 0.0
    %325 = vmatpush1.msra.mxu0 0.0
    %326 = vmatprep.subr.mxu0 0.0
    %327 = vmatpush1.msra.mxu0 0.0
    %328 = vmatprep.subr.mxu0 0.0
    %329 = vmatpush1.msra.mxu0 0.0
    %330 = vmatprep.subr.mxu0 0.0
    %331 = vmatpush1.msra.mxu0 0.0
    %332 = vmatprep.subr.mxu0 0.0
    %333 = vmatpush1.msra.mxu0 0.0
    %334 = vmatprep.subr.mxu0 0.0
    %335 = vmatpush1.msra.mxu0 0.0
    %336 = vmatprep.subr.mxu0 0.0
    %337 = vmatpush1.msra.mxu0 0.0
    %338 = vmatprep.subr.mxu0 0.0
    %339 = vmatpush1.msra.mxu0 0.0
    %340 = vmatprep.subr.mxu0 0.0
    %341 = vmatpush1.msra.mxu0 0.0
    %342 = vmatprep.subr.mxu0 %v86
    %343 = vmatpush1.msra.mxu0 %v85
    %344 = vmatprep.subr.mxu0 %v83
    %345 = vmatpush1.msra.mxu0 %v82
    %346 = vmatprep.subr.mxu0 0.0
    %347 = vmatpush2.msra.mxu0 0.0
    %348 = vmatprep.subr.mxu0 0.0
    %349 = vmatpush2.msra.mxu0 0.0
    %350 = vmatprep.subr.mxu0 0.0
    %351 = vmatpush2.msra.mxu0 0.0
    %352 = vmatprep.subr.mxu0 0.0
    %353 = vmatpush2.msra.mxu0 0.0
    %354 = vmatprep.subr.mxu0 0.0
    %355 = vmatpush2.msra.mxu0 0.0
    %356 = vmatprep.subr.mxu0 0.0
    %357 = vmatpush2.msra.mxu0 0.0
    %358 = vmatprep.subr.mxu0 0.0
    %359 = vmatpush2.msra.mxu0 0.0
    %360 = vmatprep.subr.mxu0 0.0
    %361 = vmatpush2.msra.mxu0 0.0
    %362 = vmatprep.subr.mxu0 0.0
    %363 = vmatpush2.msra.mxu0 0.0
    %364 = vmatprep.subr.mxu0 0.0
    %365 = vmatpush2.msra.mxu0 0.0
    %366 = vmatprep.subr.mxu0 0.0
    %367 = vmatpush2.msra.mxu0 0.0
    %368 = vmatprep.subr.mxu0 0.0
    %369 = vmatpush2.msra.mxu0 0.0
    %370 = vmatprep.subr.mxu0 0.0
    %371 = vmatpush2.msra.mxu0 0.0
    %372 = vmatprep.subr.mxu0 0.0
    %373 = vmatpush2.msra.mxu0 0.0
    %374 = vmatprep.subr.mxu0 0.0
    %375 = vmatpush2.msra.mxu0 0.0
    %376 = vmatprep.subr.mxu0 0.0
    %377 = vmatpush2.msra.mxu0 0.0
    %378 = vmatprep.mubr.f32.mxu0 0.0
    %379 = vmatmul.mubr.f32.gmra.mxu0 %v312
    %v380 = vpop.f32.mrf.mxu0
    %v381 = vadd.f32 %v141, %v380
    %v382 = vpop.f32.mrf.mxu0
    %v383 = vadd.f32 %v145, %v382
    %384 = vdwg.mxu0
    %385 = vmatprep.subr.mxu0 0.0
    %386 = vmatpush1.msra.mxu0 0.0
    %387 = vmatprep.subr.mxu0 0.0
    %388 = vmatpush1.msra.mxu0 0.0
    %389 = vmatprep.subr.mxu0 0.0
    %390 = vmatpush1.msra.mxu0 0.0
    %391 = vmatprep.subr.mxu0 0.0
    %392 = vmatpush1.msra.mxu0 0.0
    %393 = vmatprep.subr.mxu0 0.0
    %394 = vmatpush1.msra.mxu0 0.0
    %395 = vmatprep.subr.mxu0 0.0
    %396 = vmatpush1.msra.mxu0 0.0
    %397 = vmatprep.subr.mxu0 0.0
    %398 = vmatpush1.msra.mxu0 0.0
    %399 = vmatprep.subr.mxu0 0.0
    %400 = vmatpush1.msra.mxu0 0.0
    %401 = vmatprep.subr.mxu0 0.0
    %402 = vmatpush1.msra.mxu0 0.0
    %403 = vmatprep.subr.mxu0 0.0
    %404 = vmatpush1.msra.mxu0 0.0
    %405 = vmatprep.subr.mxu0 0.0
    %406 = vmatpush1.msra.mxu0 0.0
    %407 = vmatprep.subr.mxu0 0.0
    %408 = vmatpush1.msra.mxu0 0.0
    %409 = vmatprep.subr.mxu0 0.0
    %410 = vmatpush1.msra.mxu0 0.0
    %411 = vmatprep.subr.mxu0 0.0
    %412 = vmatpush1.msra.mxu0 0.0
    %413 = vmatprep.subr.mxu0 0.0
    %414 = vmatpush1.msra.mxu0 %v87
    %415 = vmatprep.subr.mxu0 0.0
    %416 = vmatpush1.msra.mxu0 %v84
    %417 = vmatprep.subr.mxu0 0.0
    %418 = vmatpush2.msra.mxu0 0.0
    %419 = vmatprep.subr.mxu0 0.0
    %420 = vmatpush2.msra.mxu0 0.0
    %421 = vmatprep.subr.mxu0 0.0
    %422 = vmatpush2.msra.mxu0 0.0
    %423 = vmatprep.subr.mxu0 0.0
    %424 = vmatpush2.msra.mxu0 0.0
    %425 = vmatprep.subr.mxu0 0.0
    %426 = vmatpush2.msra.mxu0 0.0
    %427 = vmatprep.subr.mxu0 0.0
    %428 = vmatpush2.msra.mxu0 0.0
    %429 = vmatprep.subr.mxu0 0.0
    %430 = vmatpush2.msra.mxu0 0.0
    %431 = vmatprep.subr.mxu0 0.0
    %432 = vmatpush2.msra.mxu0 0.0
    %433 = vmatprep.subr.mxu0 0.0
    %434 = vmatpush2.msra.mxu0 0.0
    %435 = vmatprep.subr.mxu0 0.0
    %436 = vmatpush2.msra.mxu0 0.0
    %437 = vmatprep.subr.mxu0 0.0
    %438 = vmatpush2.msra.mxu0 0.0
    %439 = vmatprep.subr.mxu0 0.0
    %440 = vmatpush2.msra.mxu0 0.0
    %441 = vmatprep.subr.mxu0 0.0
    %442 = vmatpush2.msra.mxu0 0.0
    %443 = vmatprep.subr.mxu0 0.0
    %444 = vmatpush2.msra.mxu0 0.0
    %445 = vmatprep.subr.mxu0 0.0
    %446 = vmatpush2.msra.mxu0 0.0
    %447 = vmatprep.subr.mxu0 0.0
    %448 = vmatpush2.msra.mxu0 0.0
    %449 = vmatprep.mubr.f32.mxu0 0.0
    %450 = vmatmul.mubr.f32.gmra.mxu0 %v312
    %v451 = vpop.f32.mrf.mxu0
    %v452 = vadd.f32 %v149, %v451
    %v453 = vpop.f32.mrf.mxu0
    %454 = vdwg.mxu0
    %s455 = scalar_lea.vmem [#allocation2], 24
    %456 = vst [vmem:[%s455] sm:$0xff] %v381
    %457 = vst [vmem:[%s455 + $0x8] sm:$0xff] %v383
    %458 = vst [vmem:[%s455 + $0x10] sm:$0xff] %v452
    %s459 = scalar_lea.vmem [#allocation3], 16
    %v460 = vld [vmem:[%s459] sm:$0xff]
    %v462 = vsel %vm161, %v460, 0
    %464 = vmatprep.subr.mxu0 0.0
    %465 = vmatpush1.msra.mxu0 0.0
    %466 = vmatprep.subr.mxu0 0.0
    %467 = vmatpush1.msra.mxu0 0.0
    %468 = vmatprep.subr.mxu0 0.0
    %469 = vmatpush1.msra.mxu0 0.0
    %470 = vmatprep.subr.mxu0 0.0
    %471 = vmatpush1.msra.mxu0 0.0
    %472 = vmatprep.subr.mxu0 0.0
    %473 = vmatpush1.msra.mxu0 0.0
    %474 = vmatprep.subr.mxu0 0.0
    %475 = vmatpush1.msra.mxu0 0.0
    %476 = vmatprep.subr.mxu0 0.0
    %477 = vmatpush1.msra.mxu0 0.0
    %478 = vmatprep.subr.mxu0 0.0
    %479 = vmatpush1.msra.mxu0 0.0
    %480 = vmatprep.subr.mxu0 0.0
    %481 = vmatpush1.msra.mxu0 0.0
    %482 = vmatprep.subr.mxu0 0.0
    %483 = vmatpush1.msra.mxu0 0.0
    %484 = vmatprep.subr.mxu0 0.0
    %485 = vmatpush1.msra.mxu0 0.0
    %486 = vmatprep.subr.mxu0 0.0
    %487 = vmatpush1.msra.mxu0 0.0
    %488 = vmatprep.subr.mxu0 0.0
    %489 = vmatpush1.msra.mxu0 0.0
    %490 = vmatprep.subr.mxu0 0.0
    %491 = vmatpush1.msra.mxu0 0.0
    %492 = vmatprep.subr.mxu0 %v86
    %493 = vmatpush1.msra.mxu0 %v85
    %494 = vmatprep.subr.mxu0 %v83
    %495 = vmatpush1.msra.mxu0 %v82
    %496 = vmatprep.subr.mxu0 0.0
    %497 = vmatpush2.msra.mxu0 0.0
    %498 = vmatprep.subr.mxu0 0.0
    %499 = vmatpush2.msra.mxu0 0.0
    %500 = vmatprep.subr.mxu0 0.0
    %501 = vmatpush2.msra.mxu0 0.0
    %502 = vmatprep.subr.mxu0 0.0
    %503 = vmatpush2.msra.mxu0 0.0
    %504 = vmatprep.subr.mxu0 0.0
    %505 = vmatpush2.msra.mxu0 0.0
    %506 = vmatprep.subr.mxu0 0.0
    %507 = vmatpush2.msra.mxu0 0.0
    %508 = vmatprep.subr.mxu0 0.0
    %509 = vmatpush2.msra.mxu0 0.0
    %510 = vmatprep.subr.mxu0 0.0
    %511 = vmatpush2.msra.mxu0 0.0
    %512 = vmatprep.subr.mxu0 0.0
    %513 = vmatpush2.msra.mxu0 0.0
    %514 = vmatprep.subr.mxu0 0.0
    %515 = vmatpush2.msra.mxu0 0.0
    %516 = vmatprep.subr.mxu0 0.0
    %517 = vmatpush2.msra.mxu0 0.0
    %518 = vmatprep.subr.mxu0 0.0
    %519 = vmatpush2.msra.mxu0 0.0
    %520 = vmatprep.subr.mxu0 0.0
    %521 = vmatpush2.msra.mxu0 0.0
    %522 = vmatprep.subr.mxu0 0.0
    %523 = vmatpush2.msra.mxu0 0.0
    %524 = vmatprep.subr.mxu0 0.0
    %525 = vmatpush2.msra.mxu0 0.0
    %526 = vmatprep.subr.mxu0 0.0
    %527 = vmatpush2.msra.mxu0 0.0
    %528 = vmatprep.mubr.f32.mxu0 0.0
    %529 = vmatmul.mubr.f32.gmra.mxu0 %v462
    %v530 = vpop.f32.mrf.mxu0
    %v531 = vadd.f32 %v141, %v530
    %v532 = vpop.f32.mrf.mxu0
    %v533 = vadd.f32 %v145, %v532
    %534 = vdwg.mxu0
    %535 = vmatprep.subr.mxu0 0.0
    %536 = vmatpush1.msra.mxu0 0.0
    %537 = vmatprep.subr.mxu0 0.0
    %538 = vmatpush1.msra.mxu0 0.0
    %539 = vmatprep.subr.mxu0 0.0
    %540 = vmatpush1.msra.mxu0 0.0
    %541 = vmatprep.subr.mxu0 0.0
    %542 = vmatpush1.msra.mxu0 0.0
    %543 = vmatprep.subr.mxu0 0.0
    %544 = vmatpush1.msra.mxu0 0.0
    %545 = vmatprep.subr.mxu0 0.0
    %546 = vmatpush1.msra.mxu0 0.0
    %547 = vmatprep.subr.mxu0 0.0
    %548 = vmatpush1.msra.mxu0 0.0
    %549 = vmatprep.subr.mxu0 0.0
    %550 = vmatpush1.msra.mxu0 0.0
    %551 = vmatprep.subr.mxu0 0.0
    %552 = vmatpush1.msra.mxu0 0.0
    %553 = vmatprep.subr.mxu0 0.0
    %554 = vmatpush1.msra.mxu0 0.0
    %555 = vmatprep.subr.mxu0 0.0
    %556 = vmatpush1.msra.mxu0 0.0
    %557 = vmatprep.subr.mxu0 0.0
    %558 = vmatpush1.msra.mxu0 0.0
    %559 = vmatprep.subr.mxu0 0.0
    %560 = vmatpush1.msra.mxu0 0.0
    %561 = vmatprep.subr.mxu0 0.0
    %562 = vmatpush1.msra.mxu0 0.0
    %563 = vmatprep.subr.mxu0 0.0
    %564 = vmatpush1.msra.mxu0 %v87
    %565 = vmatprep.subr.mxu0 0.0
    %566 = vmatpush1.msra.mxu0 %v84
    %567 = vmatprep.subr.mxu0 0.0
    %568 = vmatpush2.msra.mxu0 0.0
    %569 = vmatprep.subr.mxu0 0.0
    %570 = vmatpush2.msra.mxu0 0.0
    %571 = vmatprep.subr.mxu0 0.0
    %572 = vmatpush2.msra.mxu0 0.0
    %573 = vmatprep.subr.mxu0 0.0
    %574 = vmatpush2.msra.mxu0 0.0
    %575 = vmatprep.subr.mxu0 0.0
    %576 = vmatpush2.msra.mxu0 0.0
    %577 = vmatprep.subr.mxu0 0.0
    %578 = vmatpush2.msra.mxu0 0.0
    %579 = vmatprep.subr.mxu0 0.0
    %580 = vmatpush2.msra.mxu0 0.0
    %581 = vmatprep.subr.mxu0 0.0
    %582 = vmatpush2.msra.mxu0 0.0
    %583 = vmatprep.subr.mxu0 0.0
    %584 = vmatpush2.msra.mxu0 0.0
    %585 = vmatprep.subr.mxu0 0.0
    %586 = vmatpush2.msra.mxu0 0.0
    %587 = vmatprep.subr.mxu0 0.0
    %588 = vmatpush2.msra.mxu0 0.0
    %589 = vmatprep.subr.mxu0 0.0
    %590 = vmatpush2.msra.mxu0 0.0
    %591 = vmatprep.subr.mxu0 0.0
    %592 = vmatpush2.msra.mxu0 0.0
    %593 = vmatprep.subr.mxu0 0.0
    %594 = vmatpush2.msra.mxu0 0.0
    %595 = vmatprep.subr.mxu0 0.0
    %596 = vmatpush2.msra.mxu0 0.0
    %597 = vmatprep.subr.mxu0 0.0
    %598 = vmatpush2.msra.mxu0 0.0
    %599 = vmatprep.mubr.f32.mxu0 0.0
    %600 = vmatmul.mubr.f32.gmra.mxu0 %v462
    %v601 = vpop.f32.mrf.mxu0
    %v602 = vadd.f32 %v149, %v601
    %v603 = vpop.f32.mrf.mxu0
    %604 = vdwg.mxu0
    %s605 = scalar_lea.vmem [#allocation2], 48
    %606 = vst [vmem:[%s605] sm:$0xff] %v531
    %607 = vst [vmem:[%s605 + $0x8] sm:$0xff] %v533
    %608 = vst [vmem:[%s605 + $0x10] sm:$0xff] %v602
    %s609 = scalar_lea.vmem [#allocation3], 24
    %v610 = vld [vmem:[%s609] sm:$0xff]
    %v612 = vsel %vm161, %v610, 0
    %614 = vmatprep.subr.mxu0 0.0
    %615 = vmatpush1.msra.mxu0 0.0
    %616 = vmatprep.subr.mxu0 0.0
    %617 = vmatpush1.msra.mxu0 0.0
    %618 = vmatprep.subr.mxu0 0.0
    %619 = vmatpush1.msra.mxu0 0.0
    %620 = vmatprep.subr.mxu0 0.0
    %621 = vmatpush1.msra.mxu0 0.0
    %622 = vmatprep.subr.mxu0 0.0
    %623 = vmatpush1.msra.mxu0 0.0
    %624 = vmatprep.subr.mxu0 0.0
    %625 = vmatpush1.msra.mxu0 0.0
    %626 = vmatprep.subr.mxu0 0.0
    %627 = vmatpush1.msra.mxu0 0.0
    %628 = vmatprep.subr.mxu0 0.0
    %629 = vmatpush1.msra.mxu0 0.0
    %630 = vmatprep.subr.mxu0 0.0
    %631 = vmatpush1.msra.mxu0 0.0
    %632 = vmatprep.subr.mxu0 0.0
    %633 = vmatpush1.msra.mxu0 0.0
    %634 = vmatprep.subr.mxu0 0.0
    %635 = vmatpush1.msra.mxu0 0.0
    %636 = vmatprep.subr.mxu0 0.0
    %637 = vmatpush1.msra.mxu0 0.0
    %638 = vmatprep.subr.mxu0 0.0
    %639 = vmatpush1.msra.mxu0 0.0
    %640 = vmatprep.subr.mxu0 0.0
    %641 = vmatpush1.msra.mxu0 0.0
    %642 = vmatprep.subr.mxu0 %v86
    %643 = vmatpush1.msra.mxu0 %v85
    %644 = vmatprep.subr.mxu0 %v83
    %645 = vmatpush1.msra.mxu0 %v82
    %646 = vmatprep.subr.mxu0 0.0
    %647 = vmatpush2.msra.mxu0 0.0
    %648 = vmatprep.subr.mxu0 0.0
    %649 = vmatpush2.msra.mxu0 0.0
    %650 = vmatprep.subr.mxu0 0.0
    %651 = vmatpush2.msra.mxu0 0.0
    %652 = vmatprep.subr.mxu0 0.0
    %653 = vmatpush2.msra.mxu0 0.0
    %654 = vmatprep.subr.mxu0 0.0
    %655 = vmatpush2.msra.mxu0 0.0
    %656 = vmatprep.subr.mxu0 0.0
    %657 = vmatpush2.msra.mxu0 0.0
    %658 = vmatprep.subr.mxu0 0.0
    %659 = vmatpush2.msra.mxu0 0.0
    %660 = vmatprep.subr.mxu0 0.0
    %661 = vmatpush2.msra.mxu0 0.0
    %662 = vmatprep.subr.mxu0 0.0
    %663 = vmatpush2.msra.mxu0 0.0
    %664 = vmatprep.subr.mxu0 0.0
    %665 = vmatpush2.msra.mxu0 0.0
    %666 = vmatprep.subr.mxu0 0.0
    %667 = vmatpush2.msra.mxu0 0.0
    %668 = vmatprep.subr.mxu0 0.0
    %669 = vmatpush2.msra.mxu0 0.0
    %670 = vmatprep.subr.mxu0 0.0
    %671 = vmatpush2.msra.mxu0 0.0
    %672 = vmatprep.subr.mxu0 0.0
    %673 = vmatpush2.msra.mxu0 0.0
    %674 = vmatprep.subr.mxu0 0.0
    %675 = vmatpush2.msra.mxu0 0.0
    %676 = vmatprep.subr.mxu0 0.0
    %677 = vmatpush2.msra.mxu0 0.0
    %678 = vmatprep.mubr.f32.mxu0 0.0
    %679 = vmatmul.mubr.f32.gmra.mxu0 %v612
    %v680 = vpop.f32.mrf.mxu0
    %v681 = vadd.f32 %v141, %v680
    %v682 = vpop.f32.mrf.mxu0
    %v683 = vadd.f32 %v145, %v682
    %684 = vdwg.mxu0
    %685 = vmatprep.subr.mxu0 0.0
    %686 = vmatpush1.msra.mxu0 0.0
    %687 = vmatprep.subr.mxu0 0.0
    %688 = vmatpush1.msra.mxu0 0.0
    %689 = vmatprep.subr.mxu0 0.0
    %690 = vmatpush1.msra.mxu0 0.0
    %691 = vmatprep.subr.mxu0 0.0
    %692 = vmatpush1.msra.mxu0 0.0
    %693 = vmatprep.subr.mxu0 0.0
    %694 = vmatpush1.msra.mxu0 0.0
    %695 = vmatprep.subr.mxu0 0.0
    %696 = vmatpush1.msra.mxu0 0.0
    %697 = vmatprep.subr.mxu0 0.0
    %698 = vmatpush1.msra.mxu0 0.0
    %699 = vmatprep.subr.mxu0 0.0
    %700 = vmatpush1.msra.mxu0 0.0
    %701 = vmatprep.subr.mxu0 0.0
    %702 = vmatpush1.msra.mxu0 0.0
    %703 = vmatprep.subr.mxu0 0.0
    %704 = vmatpush1.msra.mxu0 0.0
    %705 = vmatprep.subr.mxu0 0.0
    %706 = vmatpush1.msra.mxu0 0.0
    %707 = vmatprep.subr.mxu0 0.0
    %708 = vmatpush1.msra.mxu0 0.0
    %709 = vmatprep.subr.mxu0 0.0
    %710 = vmatpush1.msra.mxu0 0.0
    %711 = vmatprep.subr.mxu0 0.0
    %712 = vmatpush1.msra.mxu0 0.0
    %713 = vmatprep.subr.mxu0 0.0
    %714 = vmatpush1.msra.mxu0 %v87
    %715 = vmatprep.subr.mxu0 0.0
    %716 = vmatpush1.msra.mxu0 %v84
    %717 = vmatprep.subr.mxu0 0.0
    %718 = vmatpush2.msra.mxu0 0.0
    %719 = vmatprep.subr.mxu0 0.0
    %720 = vmatpush2.msra.mxu0 0.0
    %721 = vmatprep.subr.mxu0 0.0
    %722 = vmatpush2.msra.mxu0 0.0
    %723 = vmatprep.subr.mxu0 0.0
    %724 = vmatpush2.msra.mxu0 0.0
    %725 = vmatprep.subr.mxu0 0.0
    %726 = vmatpush2.msra.mxu0 0.0
    %727 = vmatprep.subr.mxu0 0.0
    %728 = vmatpush2.msra.mxu0 0.0
    %729 = vmatprep.subr.mxu0 0.0
    %730 = vmatpush2.msra.mxu0 0.0
    %731 = vmatprep.subr.mxu0 0.0
    %732 = vmatpush2.msra.mxu0 0.0
    %733 = vmatprep.subr.mxu0 0.0
    %734 = vmatpush2.msra.mxu0 0.0
    %735 = vmatprep.subr.mxu0 0.0
    %736 = vmatpush2.msra.mxu0 0.0
    %737 = vmatprep.subr.mxu0 0.0
    %738 = vmatpush2.msra.mxu0 0.0
    %739 = vmatprep.subr.mxu0 0.0
    %740 = vmatpush2.msra.mxu0 0.0
    %741 = vmatprep.subr.mxu0 0.0
    %742 = vmatpush2.msra.mxu0 0.0
    %743 = vmatprep.subr.mxu0 0.0
    %744 = vmatpush2.msra.mxu0 0.0
    %745 = vmatprep.subr.mxu0 0.0
    %746 = vmatpush2.msra.mxu0 0.0
    %747 = vmatprep.subr.mxu0 0.0
    %748 = vmatpush2.msra.mxu0 0.0
    %749 = vmatprep.mubr.f32.mxu0 0.0
    %750 = vmatmul.mubr.f32.gmra.mxu0 %v612
    %v751 = vpop.f32.mrf.mxu0
    %v752 = vadd.f32 %v149, %v751
    %v753 = vpop.f32.mrf.mxu0
    %754 = vdwg.mxu0
    %s755 = scalar_lea.vmem [#allocation2], 72
    %756 = vst [vmem:[%s755] sm:$0xff] %v681
    %757 = vst [vmem:[%s755 + $0x8] sm:$0xff] %v683
    %758 = vst [vmem:[%s755 + $0x10] sm:$0xff] %v752
    %s759 = scalar_lea.vmem [#allocation3], 32
    %v760 = vld [vmem:[%s759] sm:$0xff]
    %v762 = vsel %vm161, %v760, 0
    %764 = vmatprep.subr.mxu0 0.0
    %765 = vmatpush1.msra.mxu0 0.0
    %766 = vmatprep.subr.mxu0 0.0
    %767 = vmatpush1.msra.mxu0 0.0
    %768 = vmatprep.subr.mxu0 0.0
    %769 = vmatpush1.msra.mxu0 0.0
    %770 = vmatprep.subr.mxu0 0.0
    %771 = vmatpush1.msra.mxu0 0.0
    %772 = vmatprep.subr.mxu0 0.0
    %773 = vmatpush1.msra.mxu0 0.0
    %774 = vmatprep.subr.mxu0 0.0
    %775 = vmatpush1.msra.mxu0 0.0
    %776 = vmatprep.subr.mxu0 0.0
    %777 = vmatpush1.msra.mxu0 0.0
    %778 = vmatprep.subr.mxu0 0.0
    %779 = vmatpush1.msra.mxu0 0.0
    %780 = vmatprep.subr.mxu0 0.0
    %781 = vmatpush1.msra.mxu0 0.0
    %782 = vmatprep.subr.mxu0 0.0
    %783 = vmatpush1.msra.mxu0 0.0
    %784 = vmatprep.subr.mxu0 0.0
    %785 = vmatpush1.msra.mxu0 0.0
    %786 = vmatprep.subr.mxu0 0.0
    %787 = vmatpush1.msra.mxu0 0.0
    %788 = vmatprep.subr.mxu0 0.0
    %789 = vmatpush1.msra.mxu0 0.0
    %790 = vmatprep.subr.mxu0 0.0
    %791 = vmatpush1.msra.mxu0 0.0
    %792 = vmatprep.subr.mxu0 %v86
    %793 = vmatpush1.msra.mxu0 %v85
    %794 = vmatprep.subr.mxu0 %v83
    %795 = vmatpush1.msra.mxu0 %v82
    %796 = vmatprep.subr.mxu0 0.0
    %797 = vmatpush2.msra.mxu0 0.0
    %798 = vmatprep.subr.mxu0 0.0
    %799 = vmatpush2.msra.mxu0 0.0
    %800 = vmatprep.subr.mxu0 0.0
    %801 = vmatpush2.msra.mxu0 0.0
    %802 = vmatprep.subr.mxu0 0.0
    %803 = vmatpush2.msra.mxu0 0.0
    %804 = vmatprep.subr.mxu0 0.0
    %805 = vmatpush2.msra.mxu0 0.0
    %806 = vmatprep.subr.mxu0 0.0
    %807 = vmatpush2.msra.mxu0 0.0
    %808 = vmatprep.subr.mxu0 0.0
    %809 = vmatpush2.msra.mxu0 0.0
    %810 = vmatprep.subr.mxu0 0.0
    %811 = vmatpush2.msra.mxu0 0.0
    %812 = vmatprep.subr.mxu0 0.0
    %813 = vmatpush2.msra.mxu0 0.0
    %814 = vmatprep.subr.mxu0 0.0
    %815 = vmatpush2.msra.mxu0 0.0
    %816 = vmatprep.subr.mxu0 0.0
    %817 = vmatpush2.msra.mxu0 0.0
    %818 = vmatprep.subr.mxu0 0.0
    %819 = vmatpush2.msra.mxu0 0.0
    %820 = vmatprep.subr.mxu0 0.0
    %821 = vmatpush2.msra.mxu0 0.0
    %822 = vmatprep.subr.mxu0 0.0
    %823 = vmatpush2.msra.mxu0 0.0
    %824 = vmatprep.subr.mxu0 0.0
    %825 = vmatpush2.msra.mxu0 0.0
    %826 = vmatprep.subr.mxu0 0.0
    %827 = vmatpush2.msra.mxu0 0.0
    %828 = vmatprep.mubr.f32.mxu0 0.0
    %829 = vmatmul.mubr.f32.gmra.mxu0 %v762
    %v830 = vpop.f32.mrf.mxu0
    %v831 = vadd.f32 %v141, %v830
    %v832 = vpop.f32.mrf.mxu0
    %v833 = vadd.f32 %v145, %v832
    %834 = vdwg.mxu0
    %835 = vmatprep.subr.mxu0 0.0
    %836 = vmatpush1.msra.mxu0 0.0
    %837 = vmatprep.subr.mxu0 0.0
    %838 = vmatpush1.msra.mxu0 0.0
    %839 = vmatprep.subr.mxu0 0.0
    %840 = vmatpush1.msra.mxu0 0.0
    %841 = vmatprep.subr.mxu0 0.0
    %842 = vmatpush1.msra.mxu0 0.0
    %843 = vmatprep.subr.mxu0 0.0
    %844 = vmatpush1.msra.mxu0 0.0
    %845 = vmatprep.subr.mxu0 0.0
    %846 = vmatpush1.msra.mxu0 0.0
    %847 = vmatprep.subr.mxu0 0.0
    %848 = vmatpush1.msra.mxu0 0.0
    %849 = vmatprep.subr.mxu0 0.0
    %850 = vmatpush1.msra.mxu0 0.0
    %851 = vmatprep.subr.mxu0 0.0
    %852 = vmatpush1.msra.mxu0 0.0
    %853 = vmatprep.subr.mxu0 0.0
    %854 = vmatpush1.msra.mxu0 0.0
    %855 = vmatprep.subr.mxu0 0.0
    %856 = vmatpush1.msra.mxu0 0.0
    %857 = vmatprep.subr.mxu0 0.0
    %858 = vmatpush1.msra.mxu0 0.0
    %859 = vmatprep.subr.mxu0 0.0
    %860 = vmatpush1.msra.mxu0 0.0
    %861 = vmatprep.subr.mxu0 0.0
    %862 = vmatpush1.msra.mxu0 0.0
    %863 = vmatprep.subr.mxu0 0.0
    %864 = vmatpush1.msra.mxu0 %v87
    %865 = vmatprep.subr.mxu0 0.0
    %866 = vmatpush1.msra.mxu0 %v84
    %867 = vmatprep.subr.mxu0 0.0
    %868 = vmatpush2.msra.mxu0 0.0
    %869 = vmatprep.subr.mxu0 0.0
    %870 = vmatpush2.msra.mxu0 0.0
    %871 = vmatprep.subr.mxu0 0.0
    %872 = vmatpush2.msra.mxu0 0.0
    %873 = vmatprep.subr.mxu0 0.0
    %874 = vmatpush2.msra.mxu0 0.0
    %875 = vmatprep.subr.mxu0 0.0
    %876 = vmatpush2.msra.mxu0 0.0
    %877 = vmatprep.subr.mxu0 0.0
    %878 = vmatpush2.msra.mxu0 0.0
    %879 = vmatprep.subr.mxu0 0.0
    %880 = vmatpush2.msra.mxu0 0.0
    %881 = vmatprep.subr.mxu0 0.0
    %882 = vmatpush2.msra.mxu0 0.0
    %883 = vmatprep.subr.mxu0 0.0
    %884 = vmatpush2.msra.mxu0 0.0
    %885 = vmatprep.subr.mxu0 0.0
    %886 = vmatpush2.msra.mxu0 0.0
    %887 = vmatprep.subr.mxu0 0.0
    %888 = vmatpush2.msra.mxu0 0.0
    %889 = vmatprep.subr.mxu0 0.0
    %890 = vmatpush2.msra.mxu0 0.0
    %891 = vmatprep.subr.mxu0 0.0
    %892 = vmatpush2.msra.mxu0 0.0
    %893 = vmatprep.subr.mxu0 0.0
    %894 = vmatpush2.msra.mxu0 0.0
    %895 = vmatprep.subr.mxu0 0.0
    %896 = vmatpush2.msra.mxu0 0.0
    %897 = vmatprep.subr.mxu0 0.0
    %898 = vmatpush2.msra.mxu0 0.0
    %899 = vmatprep.mubr.f32.mxu0 0.0
    %900 = vmatmul.mubr.f32.gmra.mxu0 %v762
    %v901 = vpop.f32.mrf.mxu0
    %v902 = vadd.f32 %v149, %v901
    %v903 = vpop.f32.mrf.mxu0
    %904 = vdwg.mxu0
    %s905 = scalar_lea.vmem [#allocation2], 96
    %906 = vst [vmem:[%s905] sm:$0xff] %v831
    %907 = vst [vmem:[%s905 + $0x8] sm:$0xff] %v833
    %908 = vst [vmem:[%s905 + $0x10] sm:$0xff] %v902
    %s909 = scalar_lea.vmem [#allocation3], 40
    %v910 = vld [vmem:[%s909] sm:$0xff]
    %v912 = vsel %vm161, %v910, 0
    %914 = vmatprep.subr.mxu0 0.0
    %915 = vmatpush1.msra.mxu0 0.0
    %916 = vmatprep.subr.mxu0 0.0
    %917 = vmatpush1.msra.mxu0 0.0
    %918 = vmatprep.subr.mxu0 0.0
    %919 = vmatpush1.msra.mxu0 0.0
    %920 = vmatprep.subr.mxu0 0.0
    %921 = vmatpush1.msra.mxu0 0.0
    %922 = vmatprep.subr.mxu0 0.0
    %923 = vmatpush1.msra.mxu0 0.0
    %924 = vmatprep.subr.mxu0 0.0
    %925 = vmatpush1.msra.mxu0 0.0
    %926 = vmatprep.subr.mxu0 0.0
    %927 = vmatpush1.msra.mxu0 0.0
    %928 = vmatprep.subr.mxu0 0.0
    %929 = vmatpush1.msra.mxu0 0.0
    %930 = vmatprep.subr.mxu0 0.0
    %931 = vmatpush1.msra.mxu0 0.0
    %932 = vmatprep.subr.mxu0 0.0
    %933 = vmatpush1.msra.mxu0 0.0
    %934 = vmatprep.subr.mxu0 0.0
    %935 = vmatpush1.msra.mxu0 0.0
    %936 = vmatprep.subr.mxu0 0.0
    %937 = vmatpush1.msra.mxu0 0.0
    %938 = vmatprep.subr.mxu0 0.0
    %939 = vmatpush1.msra.mxu0 0.0
    %940 = vmatprep.subr.mxu0 0.0
    %941 = vmatpush1.msra.mxu0 0.0
    %942 = vmatprep.subr.mxu0 %v86
    %943 = vmatpush1.msra.mxu0 %v85
    %944 = vmatprep.subr.mxu0 %v83
    %945 = vmatpush1.msra.mxu0 %v82
    %946 = vmatprep.subr.mxu0 0.0
    %947 = vmatpush2.msra.mxu0 0.0
    %948 = vmatprep.subr.mxu0 0.0
    %949 = vmatpush2.msra.mxu0 0.0
    %950 = vmatprep.subr.mxu0 0.0
    %951 = vmatpush2.msra.mxu0 0.0
    %952 = vmatprep.subr.mxu0 0.0
    %953 = vmatpush2.msra.mxu0 0.0
    %954 = vmatprep.subr.mxu0 0.0
    %955 = vmatpush2.msra.mxu0 0.0
    %956 = vmatprep.subr.mxu0 0.0
    %957 = vmatpush2.msra.mxu0 0.0
    %958 = vmatprep.subr.mxu0 0.0
    %959 = vmatpush2.msra.mxu0 0.0
    %960 = vmatprep.subr.mxu0 0.0
    %961 = vmatpush2.msra.mxu0 0.0
    %962 = vmatprep.subr.mxu0 0.0
    %963 = vmatpush2.msra.mxu0 0.0
    %964 = vmatprep.subr.mxu0 0.0
    %965 = vmatpush2.msra.mxu0 0.0
    %966 = vmatprep.subr.mxu0 0.0
    %967 = vmatpush2.msra.mxu0 0.0
    %968 = vmatprep.subr.mxu0 0.0
    %969 = vmatpush2.msra.mxu0 0.0
    %970 = vmatprep.subr.mxu0 0.0
    %971 = vmatpush2.msra.mxu0 0.0
    %972 = vmatprep.subr.mxu0 0.0
    %973 = vmatpush2.msra.mxu0 0.0
    %974 = vmatprep.subr.mxu0 0.0
    %975 = vmatpush2.msra.mxu0 0.0
    %976 = vmatprep.subr.mxu0 0.0
    %977 = vmatpush2.msra.mxu0 0.0
    %978 = vmatprep.mubr.f32.mxu0 0.0
    %979 = vmatmul.mubr.f32.gmra.mxu0 %v912
    %v980 = vpop.f32.mrf.mxu0
    %v981 = vadd.f32 %v141, %v980
    %v982 = vpop.f32.mrf.mxu0
    %v983 = vadd.f32 %v145, %v982
    %984 = vdwg.mxu0
    %985 = vmatprep.subr.mxu0 0.0
    %986 = vmatpush1.msra.mxu0 0.0
    %987 = vmatprep.subr.mxu0 0.0
    %988 = vmatpush1.msra.mxu0 0.0
    %989 = vmatprep.subr.mxu0 0.0
    %990 = vmatpush1.msra.mxu0 0.0
    %991 = vmatprep.subr.mxu0 0.0
    %992 = vmatpush1.msra.mxu0 0.0
    %993 = vmatprep.subr.mxu0 0.0
    %994 = vmatpush1.msra.mxu0 0.0
    %995 = vmatprep.subr.mxu0 0.0
    %996 = vmatpush1.msra.mxu0 0.0
    %997 = vmatprep.subr.mxu0 0.0
    %998 = vmatpush1.msra.mxu0 0.0
    %999 = vmatprep.subr.mxu0 0.0
    %1000 = vmatpush1.msra.mxu0 0.0
    %1001 = vmatprep.subr.mxu0 0.0
    %1002 = vmatpush1.msra.mxu0 0.0
    %1003 = vmatprep.subr.mxu0 0.0
    %1004 = vmatpush1.msra.mxu0 0.0
    %1005 = vmatprep.subr.mxu0 0.0
    %1006 = vmatpush1.msra.mxu0 0.0
    %1007 = vmatprep.subr.mxu0 0.0
    %1008 = vmatpush1.msra.mxu0 0.0
    %1009 = vmatprep.subr.mxu0 0.0
    %1010 = vmatpush1.msra.mxu0 0.0
    %1011 = vmatprep.subr.mxu0 0.0
    %1012 = vmatpush1.msra.mxu0 0.0
    %1013 = vmatprep.subr.mxu0 0.0
    %1014 = vmatpush1.msra.mxu0 %v87
    %1015 = vmatprep.subr.mxu0 0.0
    %1016 = vmatpush1.msra.mxu0 %v84
    %1017 = vmatprep.subr.mxu0 0.0
    %1018 = vmatpush2.msra.mxu0 0.0
    %1019 = vmatprep.subr.mxu0 0.0
    %1020 = vmatpush2.msra.mxu0 0.0
    %1021 = vmatprep.subr.mxu0 0.0
    %1022 = vmatpush2.msra.mxu0 0.0
    %1023 = vmatprep.subr.mxu0 0.0
    %1024 = vmatpush2.msra.mxu0 0.0
    %1025 = vmatprep.subr.mxu0 0.0
    %1026 = vmatpush2.msra.mxu0 0.0
    %1027 = vmatprep.subr.mxu0 0.0
    %1028 = vmatpush2.msra.mxu0 0.0
    %1029 = vmatprep.subr.mxu0 0.0
    %1030 = vmatpush2.msra.mxu0 0.0
    %1031 = vmatprep.subr.mxu0 0.0
    %1032 = vmatpush2.msra.mxu0 0.0
    %1033 = vmatprep.subr.mxu0 0.0
    %1034 = vmatpush2.msra.mxu0 0.0
    %1035 = vmatprep.subr.mxu0 0.0
    %1036 = vmatpush2.msra.mxu0 0.0
    %1037 = vmatprep.subr.mxu0 0.0
    %1038 = vmatpush2.msra.mxu0 0.0
    %1039 = vmatprep.subr.mxu0 0.0
    %1040 = vmatpush2.msra.mxu0 0.0
    %1041 = vmatprep.subr.mxu0 0.0
    %1042 = vmatpush2.msra.mxu0 0.0
    %1043 = vmatprep.subr.mxu0 0.0
    %1044 = vmatpush2.msra.mxu0 0.0
    %1045 = vmatprep.subr.mxu0 0.0
    %1046 = vmatpush2.msra.mxu0 0.0
    %1047 = vmatprep.subr.mxu0 0.0
    %1048 = vmatpush2.msra.mxu0 0.0
    %1049 = vmatprep.mubr.f32.mxu0 0.0
    %1050 = vmatmul.mubr.f32.gmra.mxu0 %v912
    %v1051 = vpop.f32.mrf.mxu0
    %v1052 = vadd.f32 %v149, %v1051
    %v1053 = vpop.f32.mrf.mxu0
    %1054 = vdwg.mxu0
    %s1055 = scalar_lea.vmem [#allocation2], 120
    %1056 = vst [vmem:[%s1055] sm:$0xff] %v981
    %1057 = vst [vmem:[%s1055 + $0x8] sm:$0xff] %v983
    %1058 = vst [vmem:[%s1055 + $0x10] sm:$0xff] %v1052
    %s1059 = scalar_lea.vmem [#allocation3], 48
    %v1060 = vld [vmem:[%s1059] sm:$0xff]
    %v1062 = vsel %vm161, %v1060, 0
    %1064 = vmatprep.subr.mxu0 0.0
    %1065 = vmatpush1.msra.mxu0 0.0
    %1066 = vmatprep.subr.mxu0 0.0
    %1067 = vmatpush1.msra.mxu0 0.0
    %1068 = vmatprep.subr.mxu0 0.0
    %1069 = vmatpush1.msra.mxu0 0.0
    %1070 = vmatprep.subr.mxu0 0.0
    %1071 = vmatpush1.msra.mxu0 0.0
    %1072 = vmatprep.subr.mxu0 0.0
    %1073 = vmatpush1.msra.mxu0 0.0
    %1074 = vmatprep.subr.mxu0 0.0
    %1075 = vmatpush1.msra.mxu0 0.0
    %1076 = vmatprep.subr.mxu0 0.0
    %1077 = vmatpush1.msra.mxu0 0.0
    %1078 = vmatprep.subr.mxu0 0.0
    %1079 = vmatpush1.msra.mxu0 0.0
    %1080 = vmatprep.subr.mxu0 0.0
    %1081 = vmatpush1.msra.mxu0 0.0
    %1082 = vmatprep.subr.mxu0 0.0
    %1083 = vmatpush1.msra.mxu0 0.0
    %1084 = vmatprep.subr.mxu0 0.0
    %1085 = vmatpush1.msra.mxu0 0.0
    %1086 = vmatprep.subr.mxu0 0.0
    %1087 = vmatpush1.msra.mxu0 0.0
    %1088 = vmatprep.subr.mxu0 0.0
    %1089 = vmatpush1.msra.mxu0 0.0
    %1090 = vmatprep.subr.mxu0 0.0
    %1091 = vmatpush1.msra.mxu0 0.0
    %1092 = vmatprep.subr.mxu0 %v86
    %1093 = vmatpush1.msra.mxu0 %v85
    %1094 = vmatprep.subr.mxu0 %v83
    %1095 = vmatpush1.msra.mxu0 %v82
    %1096 = vmatprep.subr.mxu0 0.0
    %1097 = vmatpush2.msra.mxu0 0.0
    %1098 = vmatprep.subr.mxu0 0.0
    %1099 = vmatpush2.msra.mxu0 0.0
    %1100 = vmatprep.subr.mxu0 0.0
    %1101 = vmatpush2.msra.mxu0 0.0
    %1102 = vmatprep.subr.mxu0 0.0
    %1103 = vmatpush2.msra.mxu0 0.0
    %1104 = vmatprep.subr.mxu0 0.0
    %1105 = vmatpush2.msra.mxu0 0.0
    %1106 = vmatprep.subr.mxu0 0.0
    %1107 = vmatpush2.msra.mxu0 0.0
    %1108 = vmatprep.subr.mxu0 0.0
    %1109 = vmatpush2.msra.mxu0 0.0
    %1110 = vmatprep.subr.mxu0 0.0
    %1111 = vmatpush2.msra.mxu0 0.0
    %1112 = vmatprep.subr.mxu0 0.0
    %1113 = vmatpush2.msra.mxu0 0.0
    %1114 = vmatprep.subr.mxu0 0.0
    %1115 = vmatpush2.msra.mxu0 0.0
    %1116 = vmatprep.subr.mxu0 0.0
    %1117 = vmatpush2.msra.mxu0 0.0
    %1118 = vmatprep.subr.mxu0 0.0
    %1119 = vmatpush2.msra.mxu0 0.0
    %1120 = vmatprep.subr.mxu0 0.0
    %1121 = vmatpush2.msra.mxu0 0.0
    %1122 = vmatprep.subr.mxu0 0.0
    %1123 = vmatpush2.msra.mxu0 0.0
    %1124 = vmatprep.subr.mxu0 0.0
    %1125 = vmatpush2.msra.mxu0 0.0
    %1126 = vmatprep.subr.mxu0 0.0
    %1127 = vmatpush2.msra.mxu0 0.0
    %1128 = vmatprep.mubr.f32.mxu0 0.0
    %1129 = vmatmul.mubr.f32.gmra.mxu0 %v1062
    %v1130 = vpop.f32.mrf.mxu0
    %v1131 = vadd.f32 %v141, %v1130
    %v1132 = vpop.f32.mrf.mxu0
    %v1133 = vadd.f32 %v145, %v1132
    %1134 = vdwg.mxu0
    %1135 = vmatprep.subr.mxu0 0.0
    %1136 = vmatpush1.msra.mxu0 0.0
    %1137 = vmatprep.subr.mxu0 0.0
    %1138 = vmatpush1.msra.mxu0 0.0
    %1139 = vmatprep.subr.mxu0 0.0
    %1140 = vmatpush1.msra.mxu0 0.0
    %1141 = vmatprep.subr.mxu0 0.0
    %1142 = vmatpush1.msra.mxu0 0.0
    %1143 = vmatprep.subr.mxu0 0.0
    %1144 = vmatpush1.msra.mxu0 0.0
    %1145 = vmatprep.subr.mxu0 0.0
    %1146 = vmatpush1.msra.mxu0 0.0
    %1147 = vmatprep.subr.mxu0 0.0
    %1148 = vmatpush1.msra.mxu0 0.0
    %1149 = vmatprep.subr.mxu0 0.0
    %1150 = vmatpush1.msra.mxu0 0.0
    %1151 = vmatprep.subr.mxu0 0.0
    %1152 = vmatpush1.msra.mxu0 0.0
    %1153 = vmatprep.subr.mxu0 0.0
    %1154 = vmatpush1.msra.mxu0 0.0
    %1155 = vmatprep.subr.mxu0 0.0
    %1156 = vmatpush1.msra.mxu0 0.0
    %1157 = vmatprep.subr.mxu0 0.0
    %1158 = vmatpush1.msra.mxu0 0.0
    %1159 = vmatprep.subr.mxu0 0.0
    %1160 = vmatpush1.msra.mxu0 0.0
    %1161 = vmatprep.subr.mxu0 0.0
    %1162 = vmatpush1.msra.mxu0 0.0
    %1163 = vmatprep.subr.mxu0 0.0
    %1164 = vmatpush1.msra.mxu0 %v87
    %1165 = vmatprep.subr.mxu0 0.0
    %1166 = vmatpush1.msra.mxu0 %v84
    %1167 = vmatprep.subr.mxu0 0.0
    %1168 = vmatpush2.msra.mxu0 0.0
    %1169 = vmatprep.subr.mxu0 0.0
    %1170 = vmatpush2.msra.mxu0 0.0
    %1171 = vmatprep.subr.mxu0 0.0
    %1172 = vmatpush2.msra.mxu0 0.0
    %1173 = vmatprep.subr.mxu0 0.0
    %1174 = vmatpush2.msra.mxu0 0.0
    %1175 = vmatprep.subr.mxu0 0.0
    %1176 = vmatpush2.msra.mxu0 0.0
    %1177 = vmatprep.subr.mxu0 0.0
    %1178 = vmatpush2.msra.mxu0 0.0
    %1179 = vmatprep.subr.mxu0 0.0
    %1180 = vmatpush2.msra.mxu0 0.0
    %1181 = vmatprep.subr.mxu0 0.0
    %1182 = vmatpush2.msra.mxu0 0.0
    %1183 = vmatprep.subr.mxu0 0.0
    %1184 = vmatpush2.msra.mxu0 0.0
    %1185 = vmatprep.subr.mxu0 0.0
    %1186 = vmatpush2.msra.mxu0 0.0
    %1187 = vmatprep.subr.mxu0 0.0
    %1188 = vmatpush2.msra.mxu0 0.0
    %1189 = vmatprep.subr.mxu0 0.0
    %1190 = vmatpush2.msra.mxu0 0.0
    %1191 = vmatprep.subr.mxu0 0.0
    %1192 = vmatpush2.msra.mxu0 0.0
    %1193 = vmatprep.subr.mxu0 0.0
    %1194 = vmatpush2.msra.mxu0 0.0
    %1195 = vmatprep.subr.mxu0 0.0
    %1196 = vmatpush2.msra.mxu0 0.0
    %1197 = vmatprep.subr.mxu0 0.0
    %1198 = vmatpush2.msra.mxu0 0.0
    %1199 = vmatprep.mubr.f32.mxu0 0.0
    %1200 = vmatmul.mubr.f32.gmra.mxu0 %v1062
    %v1201 = vpop.f32.mrf.mxu0
    %v1202 = vadd.f32 %v149, %v1201
    %v1203 = vpop.f32.mrf.mxu0
    %1204 = vdwg.mxu0
    %s1205 = scalar_lea.vmem [#allocation2], 144
    %1206 = vst [vmem:[%s1205] sm:$0xff] %v1131
    %1207 = vst [vmem:[%s1205 + $0x8] sm:$0xff] %v1133
    %1208 = vst [vmem:[%s1205 + $0x10] sm:$0xff] %v1202
    %s1209 = scalar_lea.vmem [#allocation3], 56
    %v1210 = vld [vmem:[%s1209] sm:$0xff]
    %v1212 = vsel %vm161, %v1210, 0
    %1214 = vmatprep.subr.mxu0 0.0
    %1215 = vmatpush1.msra.mxu0 0.0
    %1216 = vmatprep.subr.mxu0 0.0
    %1217 = vmatpush1.msra.mxu0 0.0
    %1218 = vmatprep.subr.mxu0 0.0
    %1219 = vmatpush1.msra.mxu0 0.0
    %1220 = vmatprep.subr.mxu0 0.0
    %1221 = vmatpush1.msra.mxu0 0.0
    %1222 = vmatprep.subr.mxu0 0.0
    %1223 = vmatpush1.msra.mxu0 0.0
    %1224 = vmatprep.subr.mxu0 0.0
    %1225 = vmatpush1.msra.mxu0 0.0
    %1226 = vmatprep.subr.mxu0 0.0
    %1227 = vmatpush1.msra.mxu0 0.0
    %1228 = vmatprep.subr.mxu0 0.0
    %1229 = vmatpush1.msra.mxu0 0.0
    %1230 = vmatprep.subr.mxu0 0.0
    %1231 = vmatpush1.msra.mxu0 0.0
    %1232 = vmatprep.subr.mxu0 0.0
    %1233 = vmatpush1.msra.mxu0 0.0
    %1234 = vmatprep.subr.mxu0 0.0
    %1235 = vmatpush1.msra.mxu0 0.0
    %1236 = vmatprep.subr.mxu0 0.0
    %1237 = vmatpush1.msra.mxu0 0.0
    %1238 = vmatprep.subr.mxu0 0.0
    %1239 = vmatpush1.msra.mxu0 0.0
    %1240 = vmatprep.subr.mxu0 0.0
    %1241 = vmatpush1.msra.mxu0 0.0
    %1242 = vmatprep.subr.mxu0 %v86
    %1243 = vmatpush1.msra.mxu0 %v85
    %1244 = vmatprep.subr.mxu0 %v83
    %1245 = vmatpush1.msra.mxu0 %v82
    %1246 = vmatprep.subr.mxu0 0.0
    %1247 = vmatpush2.msra.mxu0 0.0
    %1248 = vmatprep.subr.mxu0 0.0
    %1249 = vmatpush2.msra.mxu0 0.0
    %1250 = vmatprep.subr.mxu0 0.0
    %1251 = vmatpush2.msra.mxu0 0.0
    %1252 = vmatprep.subr.mxu0 0.0
    %1253 = vmatpush2.msra.mxu0 0.0
    %1254 = vmatprep.subr.mxu0 0.0
    %1255 = vmatpush2.msra.mxu0 0.0
    %1256 = vmatprep.subr.mxu0 0.0
    %1257 = vmatpush2.msra.mxu0 0.0
    %1258 = vmatprep.subr.mxu0 0.0
    %1259 = vmatpush2.msra.mxu0 0.0
    %1260 = vmatprep.subr.mxu0 0.0
    %1261 = vmatpush2.msra.mxu0 0.0
    %1262 = vmatprep.subr.mxu0 0.0
    %1263 = vmatpush2.msra.mxu0 0.0
    %1264 = vmatprep.subr.mxu0 0.0
    %1265 = vmatpush2.msra.mxu0 0.0
    %1266 = vmatprep.subr.mxu0 0.0
    %1267 = vmatpush2.msra.mxu0 0.0
    %1268 = vmatprep.subr.mxu0 0.0
    %1269 = vmatpush2.msra.mxu0 0.0
    %1270 = vmatprep.subr.mxu0 0.0
    %1271 = vmatpush2.msra.mxu0 0.0
    %1272 = vmatprep.subr.mxu0 0.0
    %1273 = vmatpush2.msra.mxu0 0.0
    %1274 = vmatprep.subr.mxu0 0.0
    %1275 = vmatpush2.msra.mxu0 0.0
    %1276 = vmatprep.subr.mxu0 0.0
    %1277 = vmatpush2.msra.mxu0 0.0
    %1278 = vmatprep.mubr.f32.mxu0 0.0
    %1279 = vmatmul.mubr.f32.gmra.mxu0 %v1212
    %v1280 = vpop.f32.mrf.mxu0
    %v1281 = vadd.f32 %v141, %v1280
    %v1282 = vpop.f32.mrf.mxu0
    %v1283 = vadd.f32 %v145, %v1282
    %1284 = vdwg.mxu0
    %1285 = vmatprep.subr.mxu0 0.0
    %1286 = vmatpush1.msra.mxu0 0.0
    %1287 = vmatprep.subr.mxu0 0.0
    %1288 = vmatpush1.msra.mxu0 0.0
    %1289 = vmatprep.subr.mxu0 0.0
    %1290 = vmatpush1.msra.mxu0 0.0
    %1291 = vmatprep.subr.mxu0 0.0
    %1292 = vmatpush1.msra.mxu0 0.0
    %1293 = vmatprep.subr.mxu0 0.0
    %1294 = vmatpush1.msra.mxu0 0.0
    %1295 = vmatprep.subr.mxu0 0.0
    %1296 = vmatpush1.msra.mxu0 0.0
    %1297 = vmatprep.subr.mxu0 0.0
    %1298 = vmatpush1.msra.mxu0 0.0
    %1299 = vmatprep.subr.mxu0 0.0
    %1300 = vmatpush1.msra.mxu0 0.0
    %1301 = vmatprep.subr.mxu0 0.0
    %1302 = vmatpush1.msra.mxu0 0.0
    %1303 = vmatprep.subr.mxu0 0.0
    %1304 = vmatpush1.msra.mxu0 0.0
    %1305 = vmatprep.subr.mxu0 0.0
    %1306 = vmatpush1.msra.mxu0 0.0
    %1307 = vmatprep.subr.mxu0 0.0
    %1308 = vmatpush1.msra.mxu0 0.0
    %1309 = vmatprep.subr.mxu0 0.0
    %1310 = vmatpush1.msra.mxu0 0.0
    %1311 = vmatprep.subr.mxu0 0.0
    %1312 = vmatpush1.msra.mxu0 0.0
    %1313 = vmatprep.subr.mxu0 0.0
    %1314 = vmatpush1.msra.mxu0 %v87
    %1315 = vmatprep.subr.mxu0 0.0
    %1316 = vmatpush1.msra.mxu0 %v84
    %1317 = vmatprep.subr.mxu0 0.0
    %1318 = vmatpush2.msra.mxu0 0.0
    %1319 = vmatprep.subr.mxu0 0.0
    %1320 = vmatpush2.msra.mxu0 0.0
    %1321 = vmatprep.subr.mxu0 0.0
    %1322 = vmatpush2.msra.mxu0 0.0
    %1323 = vmatprep.subr.mxu0 0.0
    %1324 = vmatpush2.msra.mxu0 0.0
    %1325 = vmatprep.subr.mxu0 0.0
    %1326 = vmatpush2.msra.mxu0 0.0
    %1327 = vmatprep.subr.mxu0 0.0
    %1328 = vmatpush2.msra.mxu0 0.0
    %1329 = vmatprep.subr.mxu0 0.0
    %1330 = vmatpush2.msra.mxu0 0.0
    %1331 = vmatprep.subr.mxu0 0.0
    %1332 = vmatpush2.msra.mxu0 0.0
    %1333 = vmatprep.subr.mxu0 0.0
    %1334 = vmatpush2.msra.mxu0 0.0
    %1335 = vmatprep.subr.mxu0 0.0
    %1336 = vmatpush2.msra.mxu0 0.0
    %1337 = vmatprep.subr.mxu0 0.0
    %1338 = vmatpush2.msra.mxu0 0.0
    %1339 = vmatprep.subr.mxu0 0.0
    %1340 = vmatpush2.msra.mxu0 0.0
    %1341 = vmatprep.subr.mxu0 0.0
    %1342 = vmatpush2.msra.mxu0 0.0
    %1343 = vmatprep.subr.mxu0 0.0
    %1344 = vmatpush2.msra.mxu0 0.0
    %1345 = vmatprep.subr.mxu0 0.0
    %1346 = vmatpush2.msra.mxu0 0.0
    %1347 = vmatprep.subr.mxu0 0.0
    %1348 = vmatpush2.msra.mxu0 0.0
    %1349 = vmatprep.mubr.f32.mxu0 0.0
    %1350 = vmatmul.mubr.f32.gmra.mxu0 %v1212
    %v1351 = vpop.f32.mrf.mxu0
    %v1352 = vadd.f32 %v149, %v1351
    %v1353 = vpop.f32.mrf.mxu0
    %1354 = vdwg.mxu0
    %s1355 = scalar_lea.vmem [#allocation2], 168
    %1356 = vst [vmem:[%s1355] sm:$0xff] %v1281
    %1357 = vst [vmem:[%s1355 + $0x8] sm:$0xff] %v1283
    %1358 = vst [vmem:[%s1355 + $0x10] sm:$0xff] %v1352
    %v1359 = vld [vmem:[#allocation2] sm:$0xff]
    %v1360 = vld [vmem:[#allocation2 + $0x8] sm:$0xff]
    %v1361 = vld [vmem:[#allocation2 + $0x10] sm:$0xff]
    %1362 = vmatprep.subr.mxu0 %v134
    %1363 = vmatpush1.msra.mxu0 %v133
    %1364 = vmatprep.subr.mxu0 %v131
    %1365 = vmatpush1.msra.mxu0 %v130
    %1366 = vmatprep.subr.mxu0 %v128
    %1367 = vmatpush1.msra.mxu0 %v127
    %1368 = vmatprep.subr.mxu0 %v125
    %1369 = vmatpush1.msra.mxu0 %v124
    %1370 = vmatprep.subr.mxu0 %v122
    %1371 = vmatpush1.msra.mxu0 %v121
    %1372 = vmatprep.subr.mxu0 %v119
    %1373 = vmatpush1.msra.mxu0 %v118
    %1374 = vmatprep.subr.mxu0 %v116
    %1375 = vmatpush1.msra.mxu0 %v115
    %1376 = vmatprep.subr.mxu0 %v113
    %1377 = vmatpush1.msra.mxu0 %v112
    %1378 = vmatprep.subr.mxu0 %v110
    %1379 = vmatpush1.msra.mxu0 %v109
    %1380 = vmatprep.subr.mxu0 %v107
    %1381 = vmatpush1.msra.mxu0 %v106
    %1382 = vmatprep.subr.mxu0 %v104
    %1383 = vmatpush1.msra.mxu0 %v103
    %1384 = vmatprep.subr.mxu0 %v101
    %1385 = vmatpush1.msra.mxu0 %v100
    %1386 = vmatprep.subr.mxu0 %v98
    %1387 = vmatpush1.msra.mxu0 %v97
    %1388 = vmatprep.subr.mxu0 %v95
    %1389 = vmatpush1.msra.mxu0 %v94
    %1390 = vmatprep.subr.mxu0 %v92
    %1391 = vmatpush1.msra.mxu0 %v91
    %1392 = vmatprep.subr.mxu0 %v89
    %1393 = vmatpush1.msra.mxu0 %v88
    %1394 = vmatprep.subr.mxu0 0.0
    %1395 = vmatpush2.msra.mxu0 0.0
    %1396 = vmatprep.subr.mxu0 0.0
    %1397 = vmatpush2.msra.mxu0 0.0
    %1398 = vmatprep.subr.mxu0 0.0
    %1399 = vmatpush2.msra.mxu0 0.0
    %1400 = vmatprep.subr.mxu0 0.0
    %1401 = vmatpush2.msra.mxu0 0.0
    %1402 = vmatprep.subr.mxu0 0.0
    %1403 = vmatpush2.msra.mxu0 0.0
    %1404 = vmatprep.subr.mxu0 0.0
    %1405 = vmatpush2.msra.mxu0 0.0
    %1406 = vmatprep.subr.mxu0 0.0
    %1407 = vmatpush2.msra.mxu0 0.0
    %1408 = vmatprep.subr.mxu0 0.0
    %1409 = vmatpush2.msra.mxu0 0.0
    %1410 = vmatprep.subr.mxu0 0.0
    %1411 = vmatpush2.msra.mxu0 0.0
    %1412 = vmatprep.subr.mxu0 0.0
    %1413 = vmatpush2.msra.mxu0 0.0
    %1414 = vmatprep.subr.mxu0 0.0
    %1415 = vmatpush2.msra.mxu0 0.0
    %1416 = vmatprep.subr.mxu0 0.0
    %1417 = vmatpush2.msra.mxu0 0.0
    %1418 = vmatprep.subr.mxu0 0.0
    %1419 = vmatpush2.msra.mxu0 0.0
    %1420 = vmatprep.subr.mxu0 0.0
    %1421 = vmatpush2.msra.mxu0 0.0
    %1422 = vmatprep.subr.mxu0 0.0
    %1423 = vmatpush2.msra.mxu0 0.0
    %1424 = vmatprep.subr.mxu0 0.0
    %1425 = vmatpush2.msra.mxu0 0.0
    %1426 = vmatprep.mubr.f32.mxu0 0.0
    %1427 = vmatmul.mubr.f32.gmra.mxu0 0.0
    %v1428 = vpop.f32.mrf.mxu0
    %v1429 = vadd.f32 0.0, %v1428
    %v1430 = vpop.f32.mrf.mxu0
    %v1431 = vadd.f32 0.0, %v1430
    %1432 = vdwg.mxu0
    %1433 = vmatprep.subr.mxu0 0.0
    %1434 = vmatpush1.msra.mxu0 %v135
    %1435 = vmatprep.subr.mxu0 0.0
    %1436 = vmatpush1.msra.mxu0 %v132
    %1437 = vmatprep.subr.mxu0 0.0
    %1438 = vmatpush1.msra.mxu0 %v129
    %1439 = vmatprep.subr.mxu0 0.0
    %1440 = vmatpush1.msra.mxu0 %v126
    %1441 = vmatprep.subr.mxu0 0.0
    %1442 = vmatpush1.msra.mxu0 %v123
    %1443 = vmatprep.subr.mxu0 0.0
    %1444 = vmatpush1.msra.mxu0 %v120
    %1445 = vmatprep.subr.mxu0 0.0
    %1446 = vmatpush1.msra.mxu0 %v117
    %1447 = vmatprep.subr.mxu0 0.0
    %1448 = vmatpush1.msra.mxu0 %v114
    %1449 = vmatprep.subr.mxu0 0.0
    %1450 = vmatpush1.msra.mxu0 %v111
    %1451 = vmatprep.subr.mxu0 0.0
    %1452 = vmatpush1.msra.mxu0 %v108
    %1453 = vmatprep.subr.mxu0 0.0
    %1454 = vmatpush1.msra.mxu0 %v105
    %1455 = vmatprep.subr.mxu0 0.0
    %1456 = vmatpush1.msra.mxu0 %v102
    %1457 = vmatprep.subr.mxu0 0.0
    %1458 = vmatpush1.msra.mxu0 %v99
    %1459 = vmatprep.subr.mxu0 0.0
    %1460 = vmatpush1.msra.mxu0 %v96
    %1461 = vmatprep.subr.mxu0 0.0
    %1462 = vmatpush1.msra.mxu0 %v93
    %1463 = vmatprep.subr.mxu0 0.0
    %1464 = vmatpush1.msra.mxu0 %v90
    %1465 = vmatprep.subr.mxu0 0.0
    %1466 = vmatpush2.msra.mxu0 0.0
    %1467 = vmatprep.subr.mxu0 0.0
    %1468 = vmatpush2.msra.mxu0 0.0
    %1469 = vmatprep.subr.mxu0 0.0
    %1470 = vmatpush2.msra.mxu0 0.0
    %1471 = vmatprep.subr.mxu0 0.0
    %1472 = vmatpush2.msra.mxu0 0.0
    %1473 = vmatprep.subr.mxu0 0.0
    %1474 = vmatpush2.msra.mxu0 0.0
    %1475 = vmatprep.subr.mxu0 0.0
    %1476 = vmatpush2.msra.mxu0 0.0
    %1477 = vmatprep.subr.mxu0 0.0
    %1478 = vmatpush2.msra.mxu0 0.0
    %1479 = vmatprep.subr.mxu0 0.0
    %1480 = vmatpush2.msra.mxu0 0.0
    %1481 = vmatprep.subr.mxu0 0.0
    %1482 = vmatpush2.msra.mxu0 0.0
    %1483 = vmatprep.subr.mxu0 0.0
    %1484 = vmatpush2.msra.mxu0 0.0
    %1485 = vmatprep.subr.mxu0 0.0
    %1486 = vmatpush2.msra.mxu0 0.0
    %1487 = vmatprep.subr.mxu0 0.0
    %1488 = vmatpush2.msra.mxu0 0.0
    %1489 = vmatprep.subr.mxu0 0.0
    %1490 = vmatpush2.msra.mxu0 0.0
    %1491 = vmatprep.subr.mxu0 0.0
    %1492 = vmatpush2.msra.mxu0 0.0
    %1493 = vmatprep.subr.mxu0 0.0
    %1494 = vmatpush2.msra.mxu0 0.0
    %1495 = vmatprep.subr.mxu0 0.0
    %1496 = vmatpush2.msra.mxu0 0.0
    %1497 = vmatprep.mubr.f32.mxu0 0.0
    %1498 = vmatmul.mubr.f32.gmra.mxu0 0.0
    %v1499 = vpop.f32.mrf.mxu0
    %v1500 = vadd.f32 0.0, %v1499
    %v1501 = vpop.f32.mrf.mxu0
    %1502 = vdwg.mxu0
    %v1503 = vadd.f32 %v1359, %v1429
    %v1504 = vadd.f32 %v1360, %v1431
    %v1505 = vmul.f32 %v1503, 0.5
    %v1506 = vtanh.pop %v1505
    %v1507 = vadd.f32 %v1506, 1.0
    %v1508 = vmul.f32 %v1507, 0.5
    %v1509 = vmul.f32 %v1504, 0.5
    %v1510 = vtanh.pop %v1509
    %v1511 = vadd.f32 %v1510, 1.0
    %v1512 = vmul.f32 %v1511, 0.5
    %v1513 = vadd.f32 %v1500, %v158
    %v1514 = vmul.f32 %v1508, %v1513
    %v1515 = vadd.f32 %v1361, %v1514
    %v1516 = vtanh.pop %v1515
    %v1517 = vsub.f32 1.0, %v1512
    %v1518 = vmul.f32 %v1517, %v1516
    %v1519 = vmul.f32 %v1512, 0.0
    %v1520 = vadd.f32 %v1518, %v1519
    %v1521 = vld [vmem:[%s455] sm:$0xff]
    %v1522 = vld [vmem:[%s455 + $0x8] sm:$0xff]
    %v1523 = vld [vmem:[%s455 + $0x10] sm:$0xff]
    %1524 = vmatprep.subr.mxu0 %v134
    %1525 = vmatpush1.msra.mxu0 %v133
    %1526 = vmatprep.subr.mxu0 %v131
    %1527 = vmatpush1.msra.mxu0 %v130
    %1528 = vmatprep.subr.mxu0 %v128
    %1529 = vmatpush1.msra.mxu0 %v127
    %1530 = vmatprep.subr.mxu0 %v125
    %1531 = vmatpush1.msra.mxu0 %v124
    %1532 = vmatprep.subr.mxu0 %v122
    %1533 = vmatpush1.msra.mxu0 %v121
    %1534 = vmatprep.subr.mxu0 %v119
    %1535 = vmatpush1.msra.mxu0 %v118
    %1536 = vmatprep.subr.mxu0 %v116
    %1537 = vmatpush1.msra.mxu0 %v115
    %1538 = vmatprep.subr.mxu0 %v113
    %1539 = vmatpush1.msra.mxu0 %v112
    %1540 = vmatprep.subr.mxu0 %v110
    %1541 = vmatpush1.msra.mxu0 %v109
    %1542 = vmatprep.subr.mxu0 %v107
    %1543 = vmatpush1.msra.mxu0 %v106
    %1544 = vmatprep.subr.mxu0 %v104
    %1545 = vmatpush1.msra.mxu0 %v103
    %1546 = vmatprep.subr.mxu0 %v101
    %1547 = vmatpush1.msra.mxu0 %v100
    %1548 = vmatprep.subr.mxu0 %v98
    %1549 = vmatpush1.msra.mxu0 %v97
    %1550 = vmatprep.subr.mxu0 %v95
    %1551 = vmatpush1.msra.mxu0 %v94
    %1552 = vmatprep.subr.mxu0 %v92
    %1553 = vmatpush1.msra.mxu0 %v91
    %1554 = vmatprep.subr.mxu0 %v89
    %1555 = vmatpush1.msra.mxu0 %v88
    %1556 = vmatprep.subr.mxu0 0.0
    %1557 = vmatpush2.msra.mxu0 0.0
    %1558 = vmatprep.subr.mxu0 0.0
    %1559 = vmatpush2.msra.mxu0 0.0
    %1560 = vmatprep.subr.mxu0 0.0
    %1561 = vmatpush2.msra.mxu0 0.0
    %1562 = vmatprep.subr.mxu0 0.0
    %1563 = vmatpush2.msra.mxu0 0.0
    %1564 = vmatprep.subr.mxu0 0.0
    %1565 = vmatpush2.msra.mxu0 0.0
    %1566 = vmatprep.subr.mxu0 0.0
    %1567 = vmatpush2.msra.mxu0 0.0
    %1568 = vmatprep.subr.mxu0 0.0
    %1569 = vmatpush2.msra.mxu0 0.0
    %1570 = vmatprep.subr.mxu0 0.0
    %1571 = vmatpush2.msra.mxu0 0.0
    %1572 = vmatprep.subr.mxu0 0.0
    %1573 = vmatpush2.msra.mxu0 0.0
    %1574 = vmatprep.subr.mxu0 0.0
    %1575 = vmatpush2.msra.mxu0 0.0
    %1576 = vmatprep.subr.mxu0 0.0
    %1577 = vmatpush2.msra.mxu0 0.0
    %1578 = vmatprep.subr.mxu0 0.0
    %1579 = vmatpush2.msra.mxu0 0.0
    %1580 = vmatprep.subr.mxu0 0.0
    %1581 = vmatpush2.msra.mxu0 0.0
    %1582 = vmatprep.subr.mxu0 0.0
    %1583 = vmatpush2.msra.mxu0 0.0
    %1584 = vmatprep.subr.mxu0 0.0
    %1585 = vmatpush2.msra.mxu0 0.0
    %1586 = vmatprep.subr.mxu0 0.0
    %1587 = vmatpush2.msra.mxu0 0.0
    %1588 = vmatprep.mubr.f32.mxu0 0.0
    %1589 = vmatmul.mubr.f32.gmra.mxu0 %v1520
    %v1590 = vpop.f32.mrf.mxu0
    %v1591 = vadd.f32 0.0, %v1590
    %v1592 = vpop.f32.mrf.mxu0
    %v1593 = vadd.f32 0.0, %v1592
    %1594 = vdwg.mxu0
    %1595 = vmatprep.subr.mxu0 0.0
    %1596 = vmatpush1.msra.mxu0 %v135
    %1597 = vmatprep.subr.mxu0 0.0
    %1598 = vmatpush1.msra.mxu0 %v132
    %1599 = vmatprep.subr.mxu0 0.0
    %1600 = vmatpush1.msra.mxu0 %v129
    %1601 = vmatprep.subr.mxu0 0.0
    %1602 = vmatpush1.msra.mxu0 %v126
    %1603 = vmatprep.subr.mxu0 0.0
    %1604 = vmatpush1.msra.mxu0 %v123
    %1605 = vmatprep.subr.mxu0 0.0
    %1606 = vmatpush1.msra.mxu0 %v120
    %1607 = vmatprep.subr.mxu0 0.0
    %1608 = vmatpush1.msra.mxu0 %v117
    %1609 = vmatprep.subr.mxu0 0.0
    %1610 = vmatpush1.msra.mxu0 %v114
    %1611 = vmatprep.subr.mxu0 0.0
    %1612 = vmatpush1.msra.mxu0 %v111
    %1613 = vmatprep.subr.mxu0 0.0
    %1614 = vmatpush1.msra.mxu0 %v108
    %1615 = vmatprep.subr.mxu0 0.0
    %1616 = vmatpush1.msra.mxu0 %v105
    %1617 = vmatprep.subr.mxu0 0.0
    %1618 = vmatpush1.msra.mxu0 %v102
    %1619 = vmatprep.subr.mxu0 0.0
    %1620 = vmatpush1.msra.mxu0 %v99
    %1621 = vmatprep.subr.mxu0 0.0
    %1622 = vmatpush1.msra.mxu0 %v96
    %1623 = vmatprep.subr.mxu0 0.0
    %1624 = vmatpush1.msra.mxu0 %v93
    %1625 = vmatprep.subr.mxu0 0.0
    %1626 = vmatpush1.msra.mxu0 %v90
    %1627 = vmatprep.subr.mxu0 0.0
    %1628 = vmatpush2.msra.mxu0 0.0
    %1629 = vmatprep.subr.mxu0 0.0
    %1630 = vmatpush2.msra.mxu0 0.0
    %1631 = vmatprep.subr.mxu0 0.0
    %1632 = vmatpush2.msra.mxu0 0.0
    %1633 = vmatprep.subr.mxu0 0.0
    %1634 = vmatpush2.msra.mxu0 0.0
    %1635 = vmatprep.subr.mxu0 0.0
    %1636 = vmatpush2.msra.mxu0 0.0
    %1637 = vmatprep.subr.mxu0 0.0
    %1638 = vmatpush2.msra.mxu0 0.0
    %1639 = vmatprep.subr.mxu0 0.0
    %1640 = vmatpush2.msra.mxu0 0.0
    %1641 = vmatprep.subr.mxu0 0.0
    %1642 = vmatpush2.msra.mxu0 0.0
    %1643 = vmatprep.subr.mxu0 0.0
    %1644 = vmatpush2.msra.mxu0 0.0
    %1645 = vmatprep.subr.mxu0 0.0
    %1646 = vmatpush2.msra.mxu0 0.0
    %1647 = vmatprep.subr.mxu0 0.0
    %1648 = vmatpush2.msra.mxu0 0.0
    %1649 = vmatprep.subr.mxu0 0.0
    %1650 = vmatpush2.msra.mxu0 0.0
    %1651 = vmatprep.subr.mxu0 0.0
    %1652 = vmatpush2.msra.mxu0 0.0
    %1653 = vmatprep.subr.mxu0 0.0
    %1654 = vmatpush2.msra.mxu0 0.0
    %1655 = vmatprep.subr.mxu0 0.0
    %1656 = vmatpush2.msra.mxu0 0.0
    %1657 = vmatprep.subr.mxu0 0.0
    %1658 = vmatpush2.msra.mxu0 0.0
    %1659 = vmatprep.mubr.f32.mxu0 0.0
    %1660 = vmatmul.mubr.f32.gmra.mxu0 %v1520
    %v1661 = vpop.f32.mrf.mxu0
    %v1662 = vadd.f32 0.0, %v1661
    %v1663 = vpop.f32.mrf.mxu0
    %1664 = vdwg.mxu0
    %v1665 = vadd.f32 %v1521, %v1591
    %v1666 = vadd.f32 %v1522, %v1593
    %v1667 = vmul.f32 %v1665, 0.5
    %v1668 = vtanh.pop %v1667
    %v1669 = vadd.f32 %v1668, 1.0
    %v1670 = vmul.f32 %v1669, 0.5
    %v1671 = vmul.f32 %v1666, 0.5
    %v1672 = vtanh.pop %v1671
    %v1673 = vadd.f32 %v1672, 1.0
    %v1674 = vmul.f32 %v1673, 0.5
    %v1675 = vadd.f32 %v1662, %v158
    %v1676 = vmul.f32 %v1670, %v1675
    %v1677 = vadd.f32 %v1523, %v1676
    %v1678 = vtanh.pop %v1677
    %v1679 = vsub.f32 1.0, %v1674
    %v1680 = vmul.f32 %v1679, %v1678
    %v1681 = vmul.f32 %v1674, %v1520
    %v1682 = vadd.f32 %v1680, %v1681
    %v1683 = vld [vmem:[%s605] sm:$0xff]
    %v1684 = vld [vmem:[%s605 + $0x8] sm:$0xff]
    %v1685 = vld [vmem:[%s605 + $0x10] sm:$0xff]
    %1686 = vmatprep.subr.mxu0 %v134
    %1687 = vmatpush1.msra.mxu0 %v133
    %1688 = vmatprep.subr.mxu0 %v131
    %1689 = vmatpush1.msra.mxu0 %v130
    %1690 = vmatprep.subr.mxu0 %v128
    %1691 = vmatpush1.msra.mxu0 %v127
    %1692 = vmatprep.subr.mxu0 %v125
    %1693 = vmatpush1.msra.mxu0 %v124
    %1694 = vmatprep.subr.mxu0 %v122
    %1695 = vmatpush1.msra.mxu0 %v121
    %1696 = vmatprep.subr.mxu0 %v119
    %1697 = vmatpush1.msra.mxu0 %v118
    %1698 = vmatprep.subr.mxu0 %v116
    %1699 = vmatpush1.msra.mxu0 %v115
    %1700 = vmatprep.subr.mxu0 %v113
    %1701 = vmatpush1.msra.mxu0 %v112
    %1702 = vmatprep.subr.mxu0 %v110
    %1703 = vmatpush1.msra.mxu0 %v109
    %1704 = vmatprep.subr.mxu0 %v107
    %1705 = vmatpush1.msra.mxu0 %v106
    %1706 = vmatprep.subr.mxu0 %v104
    %1707 = vmatpush1.msra.mxu0 %v103
    %1708 = vmatprep.subr.mxu0 %v101
    %1709 = vmatpush1.msra.mxu0 %v100
    %1710 = vmatprep.subr.mxu0 %v98
    %1711 = vmatpush1.msra.mxu0 %v97
    %1712 = vmatprep.subr.mxu0 %v95
    %1713 = vmatpush1.msra.mxu0 %v94
    %1714 = vmatprep.subr.mxu0 %v92
    %1715 = vmatpush1.msra.mxu0 %v91
    %1716 = vmatprep.subr.mxu0 %v89
    %1717 = vmatpush1.msra.mxu0 %v88
    %1718 = vmatprep.subr.mxu0 0.0
    %1719 = vmatpush2.msra.mxu0 0.0
    %1720 = vmatprep.subr.mxu0 0.0
    %1721 = vmatpush2.msra.mxu0 0.0
    %1722 = vmatprep.subr.mxu0 0.0
    %1723 = vmatpush2.msra.mxu0 0.0
    %1724 = vmatprep.subr.mxu0 0.0
    %1725 = vmatpush2.msra.mxu0 0.0
    %1726 = vmatprep.subr.mxu0 0.0
    %1727 = vmatpush2.msra.mxu0 0.0
    %1728 = vmatprep.subr.mxu0 0.0
    %1729 = vmatpush2.msra.mxu0 0.0
    %1730 = vmatprep.subr.mxu0 0.0
    %1731 = vmatpush2.msra.mxu0 0.0
    %1732 = vmatprep.subr.mxu0 0.0
    %1733 = vmatpush2.msra.mxu0 0.0
    %1734 = vmatprep.subr.mxu0 0.0
    %1735 = vmatpush2.msra.mxu0 0.0
    %1736 = vmatprep.subr.mxu0 0.0
    %1737 = vmatpush2.msra.mxu0 0.0
    %1738 = vmatprep.subr.mxu0 0.0
    %1739 = vmatpush2.msra.mxu0 0.0
    %1740 = vmatprep.subr.mxu0 0.0
    %1741 = vmatpush2.msra.mxu0 0.0
    %1742 = vmatprep.subr.mxu0 0.0
    %1743 = vmatpush2.msra.mxu0 0.0
    %1744 = vmatprep.subr.mxu0 0.0
    %1745 = vmatpush2.msra.mxu0 0.0
    %1746 = vmatprep.subr.mxu0 0.0
    %1747 = vmatpush2.msra.mxu0 0.0
    %1748 = vmatprep.subr.mxu0 0.0
    %1749 = vmatpush2.msra.mxu0 0.0
    %1750 = vmatprep.mubr.f32.mxu0 0.0
    %1751 = vmatmul.mubr.f32.gmra.mxu0 %v1682
    %v1752 = vpop.f32.mrf.mxu0
    %v1753 = vadd.f32 0.0, %v1752
    %v1754 = vpop.f32.mrf.mxu0
    %v1755 = vadd.f32 0.0, %v1754
    %1756 = vdwg.mxu0
    %1757 = vmatprep.subr.mxu0 0.0
    %1758 = vmatpush1.msra.mxu0 %v135
    %1759 = vmatprep.subr.mxu0 0.0
    %1760 = vmatpush1.msra.mxu0 %v132
    %1761 = vmatprep.subr.mxu0 0.0
    %1762 = vmatpush1.msra.mxu0 %v129
    %1763 = vmatprep.subr.mxu0 0.0
    %1764 = vmatpush1.msra.mxu0 %v126
    %1765 = vmatprep.subr.mxu0 0.0
    %1766 = vmatpush1.msra.mxu0 %v123
    %1767 = vmatprep.subr.mxu0 0.0
    %1768 = vmatpush1.msra.mxu0 %v120
    %1769 = vmatprep.subr.mxu0 0.0
    %1770 = vmatpush1.msra.mxu0 %v117
    %1771 = vmatprep.subr.mxu0 0.0
    %1772 = vmatpush1.msra.mxu0 %v114
    %1773 = vmatprep.subr.mxu0 0.0
    %1774 = vmatpush1.msra.mxu0 %v111
    %1775 = vmatprep.subr.mxu0 0.0
    %1776 = vmatpush1.msra.mxu0 %v108
    %1777 = vmatprep.subr.mxu0 0.0
    %1778 = vmatpush1.msra.mxu0 %v105
    %1779 = vmatprep.subr.mxu0 0.0
    %1780 = vmatpush1.msra.mxu0 %v102
    %1781 = vmatprep.subr.mxu0 0.0
    %1782 = vmatpush1.msra.mxu0 %v99
    %1783 = vmatprep.subr.mxu0 0.0
    %1784 = vmatpush1.msra.mxu0 %v96
    %1785 = vmatprep.subr.mxu0 0.0
    %1786 = vmatpush1.msra.mxu0 %v93
    %1787 = vmatprep.subr.mxu0 0.0
    %1788 = vmatpush1.msra.mxu0 %v90
    %1789 = vmatprep.subr.mxu0 0.0
    %1790 = vmatpush2.msra.mxu0 0.0
    %1791 = vmatprep.subr.mxu0 0.0
    %1792 = vmatpush2.msra.mxu0 0.0
    %1793 = vmatprep.subr.mxu0 0.0
    %1794 = vmatpush2.msra.mxu0 0.0
    %1795 = vmatprep.subr.mxu0 0.0
    %1796 = vmatpush2.msra.mxu0 0.0
    %1797 = vmatprep.subr.mxu0 0.0
    %1798 = vmatpush2.msra.mxu0 0.0
    %1799 = vmatprep.subr.mxu0 0.0
    %1800 = vmatpush2.msra.mxu0 0.0
    %1801 = vmatprep.subr.mxu0 0.0
    %1802 = vmatpush2.msra.mxu0 0.0
    %1803 = vmatprep.subr.mxu0 0.0
    %1804 = vmatpush2.msra.mxu0 0.0
    %1805 = vmatprep.subr.mxu0 0.0
    %1806 = vmatpush2.msra.mxu0 0.0
    %1807 = vmatprep.subr.mxu0 0.0
    %1808 = vmatpush2.msra.mxu0 0.0
    %1809 = vmatprep.subr.mxu0 0.0
    %1810 = vmatpush2.msra.mxu0 0.0
    %1811 = vmatprep.subr.mxu0 0.0
    %1812 = vmatpush2.msra.mxu0 0.0
    %1813 = vmatprep.subr.mxu0 0.0
    %1814 = vmatpush2.msra.mxu0 0.0
    %1815 = vmatprep.subr.mxu0 0.0
    %1816 = vmatpush2.msra.mxu0 0.0
    %1817 = vmatprep.subr.mxu0 0.0
    %1818 = vmatpush2.msra.mxu0 0.0
    %1819 = vmatprep.subr.mxu0 0.0
    %1820 = vmatpush2.msra.mxu0 0.0
    %1821 = vmatprep.mubr.f32.mxu0 0.0
    %1822 = vmatmul.mubr.f32.gmra.mxu0 %v1682
    %v1823 = vpop.f32.mrf.mxu0
    %v1824 = vadd.f32 0.0, %v1823
    %v1825 = vpop.f32.mrf.mxu0
    %1826 = vdwg.mxu0
    %v1827 = vadd.f32 %v1683, %v1753
    %v1828 = vadd.f32 %v1684, %v1755
    %v1829 = vmul.f32 %v1827, 0.5
    %v1830 = vtanh.pop %v1829
    %v1831 = vadd.f32 %v1830, 1.0
    %v1832 = vmul.f32 %v1831, 0.5
    %v1833 = vmul.f32 %v1828, 0.5
    %v1834 = vtanh.pop %v1833
    %v1835 = vadd.f32 %v1834, 1.0
    %v1836 = vmul.f32 %v1835, 0.5
    %v1837 = vadd.f32 %v1824, %v158
    %v1838 = vmul.f32 %v1832, %v1837
    %v1839 = vadd.f32 %v1685, %v1838
    %v1840 = vtanh.pop %v1839
    %v1841 = vsub.f32 1.0, %v1836
    %v1842 = vmul.f32 %v1841, %v1840
    %v1843 = vmul.f32 %v1836, %v1682
    %v1844 = vadd.f32 %v1842, %v1843
    %v1845 = vld [vmem:[%s755] sm:$0xff]
    %v1846 = vld [vmem:[%s755 + $0x8] sm:$0xff]
    %v1847 = vld [vmem:[%s755 + $0x10] sm:$0xff]
    %1848 = vmatprep.subr.mxu0 %v134
    %1849 = vmatpush1.msra.mxu0 %v133
    %1850 = vmatprep.subr.mxu0 %v131
    %1851 = vmatpush1.msra.mxu0 %v130
    %1852 = vmatprep.subr.mxu0 %v128
    %1853 = vmatpush1.msra.mxu0 %v127
    %1854 = vmatprep.subr.mxu0 %v125
    %1855 = vmatpush1.msra.mxu0 %v124
    %1856 = vmatprep.subr.mxu0 %v122
    %1857 = vmatpush1.msra.mxu0 %v121
    %1858 = vmatprep.subr.mxu0 %v119
    %1859 = vmatpush1.msra.mxu0 %v118
    %1860 = vmatprep.subr.mxu0 %v116
    %1861 = vmatpush1.msra.mxu0 %v115
    %1862 = vmatprep.subr.mxu0 %v113
    %1863 = vmatpush1.msra.mxu0 %v112
    %1864 = vmatprep.subr.mxu0 %v110
    %1865 = vmatpush1.msra.mxu0 %v109
    %1866 = vmatprep.subr.mxu0 %v107
    %1867 = vmatpush1.msra.mxu0 %v106
    %1868 = vmatprep.subr.mxu0 %v104
    %1869 = vmatpush1.msra.mxu0 %v103
    %1870 = vmatprep.subr.mxu0 %v101
    %1871 = vmatpush1.msra.mxu0 %v100
    %1872 = vmatprep.subr.mxu0 %v98
    %1873 = vmatpush1.msra.mxu0 %v97
    %1874 = vmatprep.subr.mxu0 %v95
    %1875 = vmatpush1.msra.mxu0 %v94
    %1876 = vmatprep.subr.mxu0 %v92
    %1877 = vmatpush1.msra.mxu0 %v91
    %1878 = vmatprep.subr.mxu0 %v89
    %1879 = vmatpush1.msra.mxu0 %v88
    %1880 = vmatprep.subr.mxu0 0.0
    %1881 = vmatpush2.msra.mxu0 0.0
    %1882 = vmatprep.subr.mxu0 0.0
    %1883 = vmatpush2.msra.mxu0 0.0
    %1884 = vmatprep.subr.mxu0 0.0
    %1885 = vmatpush2.msra.mxu0 0.0
    %1886 = vmatprep.subr.mxu0 0.0
    %1887 = vmatpush2.msra.mxu0 0.0
    %1888 = vmatprep.subr.mxu0 0.0
    %1889 = vmatpush2.msra.mxu0 0.0
    %1890 = vmatprep.subr.mxu0 0.0
    %1891 = vmatpush2.msra.mxu0 0.0
    %1892 = vmatprep.subr.mxu0 0.0
    %1893 = vmatpush2.msra.mxu0 0.0
    %1894 = vmatprep.subr.mxu0 0.0
    %1895 = vmatpush2.msra.mxu0 0.0
    %1896 = vmatprep.subr.mxu0 0.0
    %1897 = vmatpush2.msra.mxu0 0.0
    %1898 = vmatprep.subr.mxu0 0.0
    %1899 = vmatpush2.msra.mxu0 0.0
    %1900 = vmatprep.subr.mxu0 0.0
    %1901 = vmatpush2.msra.mxu0 0.0
    %1902 = vmatprep.subr.mxu0 0.0
    %1903 = vmatpush2.msra.mxu0 0.0
    %1904 = vmatprep.subr.mxu0 0.0
    %1905 = vmatpush2.msra.mxu0 0.0
    %1906 = vmatprep.subr.mxu0 0.0
    %1907 = vmatpush2.msra.mxu0 0.0
    %1908 = vmatprep.subr.mxu0 0.0
    %1909 = vmatpush2.msra.mxu0 0.0
    %1910 = vmatprep.subr.mxu0 0.0
    %1911 = vmatpush2.msra.mxu0 0.0
    %1912 = vmatprep.mubr.f32.mxu0 0.0
    %1913 = vmatmul.mubr.f32.gmra.mxu0 %v1844
    %v1914 = vpop.f32.mrf.mxu0
    %v1915 = vadd.f32 0.0, %v1914
    %v1916 = vpop.f32.mrf.mxu0
    %v1917 = vadd.f32 0.0, %v1916
    %1918 = vdwg.mxu0
    %1919 = vmatprep.subr.mxu0 0.0
    %1920 = vmatpush1.msra.mxu0 %v135
    %1921 = vmatprep.subr.mxu0 0.0
    %1922 = vmatpush1.msra.mxu0 %v132
    %1923 = vmatprep.subr.mxu0 0.0
    %1924 = vmatpush1.msra.mxu0 %v129
    %1925 = vmatprep.subr.mxu0 0.0
    %1926 = vmatpush1.msra.mxu0 %v126
    %1927 = vmatprep.subr.mxu0 0.0
    %1928 = vmatpush1.msra.mxu0 %v123
    %1929 = vmatprep.subr.mxu0 0.0
    %1930 = vmatpush1.msra.mxu0 %v120
    %1931 = vmatprep.subr.mxu0 0.0
    %1932 = vmatpush1.msra.mxu0 %v117
    %1933 = vmatprep.subr.mxu0 0.0
    %1934 = vmatpush1.msra.mxu0 %v114
    %1935 = vmatprep.subr.mxu0 0.0
    %1936 = vmatpush1.msra.mxu0 %v111
    %1937 = vmatprep.subr.mxu0 0.0
    %1938 = vmatpush1.msra.mxu0 %v108
    %1939 = vmatprep.subr.mxu0 0.0
    %1940 = vmatpush1.msra.mxu0 %v105
    %1941 = vmatprep.subr.mxu0 0.0
    %1942 = vmatpush1.msra.mxu0 %v102
    %1943 = vmatprep.subr.mxu0 0.0
    %1944 = vmatpush1.msra.mxu0 %v99
    %1945 = vmatprep.subr.mxu0 0.0
    %1946 = vmatpush1.msra.mxu0 %v96
    %1947 = vmatprep.subr.mxu0 0.0
    %1948 = vmatpush1.msra.mxu0 %v93
    %1949 = vmatprep.subr.mxu0 0.0
    %1950 = vmatpush1.msra.mxu0 %v90
    %1951 = vmatprep.subr.mxu0 0.0
    %1952 = vmatpush2.msra.mxu0 0.0
    %1953 = vmatprep.subr.mxu0 0.0
    %1954 = vmatpush2.msra.mxu0 0.0
    %1955 = vmatprep.subr.mxu0 0.0
    %1956 = vmatpush2.msra.mxu0 0.0
    %1957 = vmatprep.subr.mxu0 0.0
    %1958 = vmatpush2.msra.mxu0 0.0
    %1959 = vmatprep.subr.mxu0 0.0
    %1960 = vmatpush2.msra.mxu0 0.0
    %1961 = vmatprep.subr.mxu0 0.0
    %1962 = vmatpush2.msra.mxu0 0.0
    %1963 = vmatprep.subr.mxu0 0.0
    %1964 = vmatpush2.msra.mxu0 0.0
    %1965 = vmatprep.subr.mxu0 0.0
    %1966 = vmatpush2.msra.mxu0 0.0
    %1967 = vmatprep.subr.mxu0 0.0
    %1968 = vmatpush2.msra.mxu0 0.0
    %1969 = vmatprep.subr.mxu0 0.0
    %1970 = vmatpush2.msra.mxu0 0.0
    %1971 = vmatprep.subr.mxu0 0.0
    %1972 = vmatpush2.msra.mxu0 0.0
    %1973 = vmatprep.subr.mxu0 0.0
    %1974 = vmatpush2.msra.mxu0 0.0
    %1975 = vmatprep.subr.mxu0 0.0
    %1976 = vmatpush2.msra.mxu0 0.0
    %1977 = vmatprep.subr.mxu0 0.0
    %1978 = vmatpush2.msra.mxu0 0.0
    %1979 = vmatprep.subr.mxu0 0.0
    %1980 = vmatpush2.msra.mxu0 0.0
    %1981 = vmatprep.subr.mxu0 0.0
    %1982 = vmatpush2.msra.mxu0 0.0
    %1983 = vmatprep.mubr.f32.mxu0 0.0
    %1984 = vmatmul.mubr.f32.gmra.mxu0 %v1844
    %v1985 = vpop.f32.mrf.mxu0
    %v1986 = vadd.f32 0.0, %v1985
    %v1987 = vpop.f32.mrf.mxu0
    %1988 = vdwg.mxu0
    %v1989 = vadd.f32 %v1845, %v1915
    %v1990 = vadd.f32 %v1846, %v1917
    %v1991 = vmul.f32 %v1989, 0.5
    %v1992 = vtanh.pop %v1991
    %v1993 = vadd.f32 %v1992, 1.0
    %v1994 = vmul.f32 %v1993, 0.5
    %v1995 = vmul.f32 %v1990, 0.5
    %v1996 = vtanh.pop %v1995
    %v1997 = vadd.f32 %v1996, 1.0
    %v1998 = vmul.f32 %v1997, 0.5
    %v1999 = vadd.f32 %v1986, %v158
    %v2000 = vmul.f32 %v1994, %v1999
    %v2001 = vadd.f32 %v1847, %v2000
    %v2002 = vtanh.pop %v2001
    %v2003 = vsub.f32 1.0, %v1998
    %v2004 = vmul.f32 %v2003, %v2002
    %v2005 = vmul.f32 %v1998, %v1844
    %v2006 = vadd.f32 %v2004, %v2005
    %v2007 = vld [vmem:[%s905] sm:$0xff]
    %v2008 = vld [vmem:[%s905 + $0x8] sm:$0xff]
    %v2009 = vld [vmem:[%s905 + $0x10] sm:$0xff]
    %2010 = vmatprep.subr.mxu0 %v134
    %2011 = vmatpush1.msra.mxu0 %v133
    %2012 = vmatprep.subr.mxu0 %v131
    %2013 = vmatpush1.msra.mxu0 %v130
    %2014 = vmatprep.subr.mxu0 %v128
    %2015 = vmatpush1.msra.mxu0 %v127
    %2016 = vmatprep.subr.mxu0 %v125
    %2017 = vmatpush1.msra.mxu0 %v124
    %2018 = vmatprep.subr.mxu0 %v122
    %2019 = vmatpush1.msra.mxu0 %v121
    %2020 = vmatprep.subr.mxu0 %v119
    %2021 = vmatpush1.msra.mxu0 %v118
    %2022 = vmatprep.subr.mxu0 %v116
    %2023 = vmatpush1.msra.mxu0 %v115
    %2024 = vmatprep.subr.mxu0 %v113
    %2025 = vmatpush1.msra.mxu0 %v112
    %2026 = vmatprep.subr.mxu0 %v110
    %2027 = vmatpush1.msra.mxu0 %v109
    %2028 = vmatprep.subr.mxu0 %v107
    %2029 = vmatpush1.msra.mxu0 %v106
    %2030 = vmatprep.subr.mxu0 %v104
    %2031 = vmatpush1.msra.mxu0 %v103
    %2032 = vmatprep.subr.mxu0 %v101
    %2033 = vmatpush1.msra.mxu0 %v100
    %2034 = vmatprep.subr.mxu0 %v98
    %2035 = vmatpush1.msra.mxu0 %v97
    %2036 = vmatprep.subr.mxu0 %v95
    %2037 = vmatpush1.msra.mxu0 %v94
    %2038 = vmatprep.subr.mxu0 %v92
    %2039 = vmatpush1.msra.mxu0 %v91
    %2040 = vmatprep.subr.mxu0 %v89
    %2041 = vmatpush1.msra.mxu0 %v88
    %2042 = vmatprep.subr.mxu0 0.0
    %2043 = vmatpush2.msra.mxu0 0.0
    %2044 = vmatprep.subr.mxu0 0.0
    %2045 = vmatpush2.msra.mxu0 0.0
    %2046 = vmatprep.subr.mxu0 0.0
    %2047 = vmatpush2.msra.mxu0 0.0
    %2048 = vmatprep.subr.mxu0 0.0
    %2049 = vmatpush2.msra.mxu0 0.0
    %2050 = vmatprep.subr.mxu0 0.0
    %2051 = vmatpush2.msra.mxu0 0.0
    %2052 = vmatprep.subr.mxu0 0.0
    %2053 = vmatpush2.msra.mxu0 0.0
    %2054 = vmatprep.subr.mxu0 0.0
    %2055 = vmatpush2.msra.mxu0 0.0
    %2056 = vmatprep.subr.mxu0 0.0
    %2057 = vmatpush2.msra.mxu0 0.0
    %2058 = vmatprep.subr.mxu0 0.0
    %2059 = vmatpush2.msra.mxu0 0.0
    %2060 = vmatprep.subr.mxu0 0.0
    %2061 = vmatpush2.msra.mxu0 0.0
    %2062 = vmatprep.subr.mxu0 0.0
    %2063 = vmatpush2.msra.mxu0 0.0
    %2064 = vmatprep.subr.mxu0 0.0
    %2065 = vmatpush2.msra.mxu0 0.0
    %2066 = vmatprep.subr.mxu0 0.0
    %2067 = vmatpush2.msra.mxu0 0.0
    %2068 = vmatprep.subr.mxu0 0.0
    %2069 = vmatpush2.msra.mxu0 0.0
    %2070 = vmatprep.subr.mxu0 0.0
    %2071 = vmatpush2.msra.mxu0 0.0
    %2072 = vmatprep.subr.mxu0 0.0
    %2073 = vmatpush2.msra.mxu0 0.0
    %2074 = vmatprep.mubr.f32.mxu0 0.0
    %2075 = vmatmul.mubr.f32.gmra.mxu0 %v2006
    %v2076 = vpop.f32.mrf.mxu0
    %v2077 = vadd.f32 0.0, %v2076
    %v2078 = vpop.f32.mrf.mxu0
    %v2079 = vadd.f32 0.0, %v2078
    %2080 = vdwg.mxu0
    %2081 = vmatprep.subr.mxu0 0.0
    %2082 = vmatpush1.msra.mxu0 %v135
    %2083 = vmatprep.subr.mxu0 0.0
    %2084 = vmatpush1.msra.mxu0 %v132
    %2085 = vmatprep.subr.mxu0 0.0
    %2086 = vmatpush1.msra.mxu0 %v129
    %2087 = vmatprep.subr.mxu0 0.0
    %2088 = vmatpush1.msra.mxu0 %v126
    %2089 = vmatprep.subr.mxu0 0.0
    %2090 = vmatpush1.msra.mxu0 %v123
    %2091 = vmatprep.subr.mxu0 0.0
    %2092 = vmatpush1.msra.mxu0 %v120
    %2093 = vmatprep.subr.mxu0 0.0
    %2094 = vmatpush1.msra.mxu0 %v117
    %2095 = vmatprep.subr.mxu0 0.0
    %2096 = vmatpush1.msra.mxu0 %v114
    %2097 = vmatprep.subr.mxu0 0.0
    %2098 = vmatpush1.msra.mxu0 %v111
    %2099 = vmatprep.subr.mxu0 0.0
    %2100 = vmatpush1.msra.mxu0 %v108
    %2101 = vmatprep.subr.mxu0 0.0
    %2102 = vmatpush1.msra.mxu0 %v105
    %2103 = vmatprep.subr.mxu0 0.0
    %2104 = vmatpush1.msra.mxu0 %v102
    %2105 = vmatprep.subr.mxu0 0.0
    %2106 = vmatpush1.msra.mxu0 %v99
    %2107 = vmatprep.subr.mxu0 0.0
    %2108 = vmatpush1.msra.mxu0 %v96
    %2109 = vmatprep.subr.mxu0 0.0
    %2110 = vmatpush1.msra.mxu0 %v93
    %2111 = vmatprep.subr.mxu0 0.0
    %2112 = vmatpush1.msra.mxu0 %v90
    %2113 = vmatprep.subr.mxu0 0.0
    %2114 = vmatpush2.msra.mxu0 0.0
    %2115 = vmatprep.subr.mxu0 0.0
    %2116 = vmatpush2.msra.mxu0 0.0
    %2117 = vmatprep.subr.mxu0 0.0
    %2118 = vmatpush2.msra.mxu0 0.0
    %2119 = vmatprep.subr.mxu0 0.0
    %2120 = vmatpush2.msra.mxu0 0.0
    %2121 = vmatprep.subr.mxu0 0.0
    %2122 = vmatpush2.msra.mxu0 0.0
    %2123 = vmatprep.subr.mxu0 0.0
    %2124 = vmatpush2.msra.mxu0 0.0
    %2125 = vmatprep.subr.mxu0 0.0
    %2126 = vmatpush2.msra.mxu0 0.0
    %2127 = vmatprep.subr.mxu0 0.0
    %2128 = vmatpush2.msra.mxu0 0.0
    %2129 = vmatprep.subr.mxu0 0.0
    %2130 = vmatpush2.msra.mxu0 0.0
    %2131 = vmatprep.subr.mxu0 0.0
    %2132 = vmatpush2.msra.mxu0 0.0
    %2133 = vmatprep.subr.mxu0 0.0
    %2134 = vmatpush2.msra.mxu0 0.0
    %2135 = vmatprep.subr.mxu0 0.0
    %2136 = vmatpush2.msra.mxu0 0.0
    %2137 = vmatprep.subr.mxu0 0.0
    %2138 = vmatpush2.msra.mxu0 0.0
    %2139 = vmatprep.subr.mxu0 0.0
    %2140 = vmatpush2.msra.mxu0 0.0
    %2141 = vmatprep.subr.mxu0 0.0
    %2142 = vmatpush2.msra.mxu0 0.0
    %2143 = vmatprep.subr.mxu0 0.0
    %2144 = vmatpush2.msra.mxu0 0.0
    %2145 = vmatprep.mubr.f32.mxu0 0.0
    %2146 = vmatmul.mubr.f32.gmra.mxu0 %v2006
    %v2147 = vpop.f32.mrf.mxu0
    %v2148 = vadd.f32 0.0, %v2147
    %v2149 = vpop.f32.mrf.mxu0
    %2150 = vdwg.mxu0
    %v2151 = vadd.f32 %v2007, %v2077
    %v2152 = vadd.f32 %v2008, %v2079
    %v2153 = vmul.f32 %v2151, 0.5
    %v2154 = vtanh.pop %v2153
    %v2155 = vadd.f32 %v2154, 1.0
    %v2156 = vmul.f32 %v2155, 0.5
    %v2157 = vmul.f32 %v2152, 0.5
    %v2158 = vtanh.pop %v2157
    %v2159 = vadd.f32 %v2158, 1.0
    %v2160 = vmul.f32 %v2159, 0.5
    %v2161 = vadd.f32 %v2148, %v158
    %v2162 = vmul.f32 %v2156, %v2161
    %v2163 = vadd.f32 %v2009, %v2162
    %v2164 = vtanh.pop %v2163
    %v2165 = vsub.f32 1.0, %v2160
    %v2166 = vmul.f32 %v2165, %v2164
    %v2167 = vmul.f32 %v2160, %v2006
    %v2168 = vadd.f32 %v2166, %v2167
    %v2169 = vld [vmem:[%s1055] sm:$0xff]
    %v2170 = vld [vmem:[%s1055 + $0x8] sm:$0xff]
    %v2171 = vld [vmem:[%s1055 + $0x10] sm:$0xff]
    %2172 = vmatprep.subr.mxu0 %v134
    %2173 = vmatpush1.msra.mxu0 %v133
    %2174 = vmatprep.subr.mxu0 %v131
    %2175 = vmatpush1.msra.mxu0 %v130
    %2176 = vmatprep.subr.mxu0 %v128
    %2177 = vmatpush1.msra.mxu0 %v127
    %2178 = vmatprep.subr.mxu0 %v125
    %2179 = vmatpush1.msra.mxu0 %v124
    %2180 = vmatprep.subr.mxu0 %v122
    %2181 = vmatpush1.msra.mxu0 %v121
    %2182 = vmatprep.subr.mxu0 %v119
    %2183 = vmatpush1.msra.mxu0 %v118
    %2184 = vmatprep.subr.mxu0 %v116
    %2185 = vmatpush1.msra.mxu0 %v115
    %2186 = vmatprep.subr.mxu0 %v113
    %2187 = vmatpush1.msra.mxu0 %v112
    %2188 = vmatprep.subr.mxu0 %v110
    %2189 = vmatpush1.msra.mxu0 %v109
    %2190 = vmatprep.subr.mxu0 %v107
    %2191 = vmatpush1.msra.mxu0 %v106
    %2192 = vmatprep.subr.mxu0 %v104
    %2193 = vmatpush1.msra.mxu0 %v103
    %2194 = vmatprep.subr.mxu0 %v101
    %2195 = vmatpush1.msra.mxu0 %v100
    %2196 = vmatprep.subr.mxu0 %v98
    %2197 = vmatpush1.msra.mxu0 %v97
    %2198 = vmatprep.subr.mxu0 %v95
    %2199 = vmatpush1.msra.mxu0 %v94
    %2200 = vmatprep.subr.mxu0 %v92
    %2201 = vmatpush1.msra.mxu0 %v91
    %2202 = vmatprep.subr.mxu0 %v89
    %2203 = vmatpush1.msra.mxu0 %v88
    %2204 = vmatprep.subr.mxu0 0.0
    %2205 = vmatpush2.msra.mxu0 0.0
    %2206 = vmatprep.subr.mxu0 0.0
    %2207 = vmatpush2.msra.mxu0 0.0
    %2208 = vmatprep.subr.mxu0 0.0
    %2209 = vmatpush2.msra.mxu0 0.0
    %2210 = vmatprep.subr.mxu0 0.0
    %2211 = vmatpush2.msra.mxu0 0.0
    %2212 = vmatprep.subr.mxu0 0.0
    %2213 = vmatpush2.msra.mxu0 0.0
    %2214 = vmatprep.subr.mxu0 0.0
    %2215 = vmatpush2.msra.mxu0 0.0
    %2216 = vmatprep.subr.mxu0 0.0
    %2217 = vmatpush2.msra.mxu0 0.0
    %2218 = vmatprep.subr.mxu0 0.0
    %2219 = vmatpush2.msra.mxu0 0.0
    %2220 = vmatprep.subr.mxu0 0.0
    %2221 = vmatpush2.msra.mxu0 0.0
    %2222 = vmatprep.subr.mxu0 0.0
    %2223 = vmatpush2.msra.mxu0 0.0
    %2224 = vmatprep.subr.mxu0 0.0
    %2225 = vmatpush2.msra.mxu0 0.0
    %2226 = vmatprep.subr.mxu0 0.0
    %2227 = vmatpush2.msra.mxu0 0.0
    %2228 = vmatprep.subr.mxu0 0.0
    %2229 = vmatpush2.msra.mxu0 0.0
    %2230 = vmatprep.subr.mxu0 0.0
    %2231 = vmatpush2.msra.mxu0 0.0
    %2232 = vmatprep.subr.mxu0 0.0
    %2233 = vmatpush2.msra.mxu0 0.0
    %2234 = vmatprep.subr.mxu0 0.0
    %2235 = vmatpush2.msra.mxu0 0.0
    %2236 = vmatprep.mubr.f32.mxu0 0.0
    %2237 = vmatmul.mubr.f32.gmra.mxu0 %v2168
    %v2238 = vpop.f32.mrf.mxu0
    %v2239 = vadd.f32 0.0, %v2238
    %v2240 = vpop.f32.mrf.mxu0
    %v2241 = vadd.f32 0.0, %v2240
    %2242 = vdwg.mxu0
    %2243 = vmatprep.subr.mxu0 0.0
    %2244 = vmatpush1.msra.mxu0 %v135
    %2245 = vmatprep.subr.mxu0 0.0
    %2246 = vmatpush1.msra.mxu0 %v132
    %2247 = vmatprep.subr.mxu0 0.0
    %2248 = vmatpush1.msra.mxu0 %v129
    %2249 = vmatprep.subr.mxu0 0.0
    %2250 = vmatpush1.msra.mxu0 %v126
    %2251 = vmatprep.subr.mxu0 0.0
    %2252 = vmatpush1.msra.mxu0 %v123
    %2253 = vmatprep.subr.mxu0 0.0
    %2254 = vmatpush1.msra.mxu0 %v120
    %2255 = vmatprep.subr.mxu0 0.0
    %2256 = vmatpush1.msra.mxu0 %v117
    %2257 = vmatprep.subr.mxu0 0.0
    %2258 = vmatpush1.msra.mxu0 %v114
    %2259 = vmatprep.subr.mxu0 0.0
    %2260 = vmatpush1.msra.mxu0 %v111
    %2261 = vmatprep.subr.mxu0 0.0
    %2262 = vmatpush1.msra.mxu0 %v108
    %2263 = vmatprep.subr.mxu0 0.0
    %2264 = vmatpush1.msra.mxu0 %v105
    %2265 = vmatprep.subr.mxu0 0.0
    %2266 = vmatpush1.msra.mxu0 %v102
    %2267 = vmatprep.subr.mxu0 0.0
    %2268 = vmatpush1.msra.mxu0 %v99
    %2269 = vmatprep.subr.mxu0 0.0
    %2270 = vmatpush1.msra.mxu0 %v96
    %2271 = vmatprep.subr.mxu0 0.0
    %2272 = vmatpush1.msra.mxu0 %v93
    %2273 = vmatprep.subr.mxu0 0.0
    %2274 = vmatpush1.msra.mxu0 %v90
    %2275 = vmatprep.subr.mxu0 0.0
    %2276 = vmatpush2.msra.mxu0 0.0
    %2277 = vmatprep.subr.mxu0 0.0
    %2278 = vmatpush2.msra.mxu0 0.0
    %2279 = vmatprep.subr.mxu0 0.0
    %2280 = vmatpush2.msra.mxu0 0.0
    %2281 = vmatprep.subr.mxu0 0.0
    %2282 = vmatpush2.msra.mxu0 0.0
    %2283 = vmatprep.subr.mxu0 0.0
    %2284 = vmatpush2.msra.mxu0 0.0
    %2285 = vmatprep.subr.mxu0 0.0
    %2286 = vmatpush2.msra.mxu0 0.0
    %2287 = vmatprep.subr.mxu0 0.0
    %2288 = vmatpush2.msra.mxu0 0.0
    %2289 = vmatprep.subr.mxu0 0.0
    %2290 = vmatpush2.msra.mxu0 0.0
    %2291 = vmatprep.subr.mxu0 0.0
    %2292 = vmatpush2.msra.mxu0 0.0
    %2293 = vmatprep.subr.mxu0 0.0
    %2294 = vmatpush2.msra.mxu0 0.0
    %2295 = vmatprep.subr.mxu0 0.0
    %2296 = vmatpush2.msra.mxu0 0.0
    %2297 = vmatprep.subr.mxu0 0.0
    %2298 = vmatpush2.msra.mxu0 0.0
    %2299 = vmatprep.subr.mxu0 0.0
    %2300 = vmatpush2.msra.mxu0 0.0
    %2301 = vmatprep.subr.mxu0 0.0
    %2302 = vmatpush2.msra.mxu0 0.0
    %2303 = vmatprep.subr.mxu0 0.0
    %2304 = vmatpush2.msra.mxu0 0.0
    %2305 = vmatprep.subr.mxu0 0.0
    %2306 = vmatpush2.msra.mxu0 0.0
    %2307 = vmatprep.mubr.f32.mxu0 0.0
    %2308 = vmatmul.mubr.f32.gmra.mxu0 %v2168
    %v2309 = vpop.f32.mrf.mxu0
    %v2310 = vadd.f32 0.0, %v2309
    %v2311 = vpop.f32.mrf.mxu0
    %2312 = vdwg.mxu0
    %v2313 = vadd.f32 %v2169, %v2239
    %v2314 = vadd.f32 %v2170, %v2241
    %v2315 = vmul.f32 %v2313, 0.5
    %v2316 = vtanh.pop %v2315
    %v2317 = vadd.f32 %v2316, 1.0
    %v2318 = vmul.f32 %v2317, 0.5
    %v2319 = vmul.f32 %v2314, 0.5
    %v2320 = vtanh.pop %v2319
    %v2321 = vadd.f32 %v2320, 1.0
    %v2322 = vmul.f32 %v2321, 0.5
    %v2323 = vadd.f32 %v2310, %v158
    %v2324 = vmul.f32 %v2318, %v2323
    %v2325 = vadd.f32 %v2171, %v2324
    %v2326 = vtanh.pop %v2325
    %v2327 = vsub.f32 1.0, %v2322
    %v2328 = vmul.f32 %v2327, %v2326
    %v2329 = vmul.f32 %v2322, %v2168
    %v2330 = vadd.f32 %v2328, %v2329
    %v2331 = vld [vmem:[%s1205] sm:$0xff]
    %v2332 = vld [vmem:[%s1205 + $0x8] sm:$0xff]
    %v2333 = vld [vmem:[%s1205 + $0x10] sm:$0xff]
    %2334 = vmatprep.subr.mxu0 %v134
    %2335 = vmatpush1.msra.mxu0 %v133
    %2336 = vmatprep.subr.mxu0 %v131
    %2337 = vmatpush1.msra.mxu0 %v130
    %2338 = vmatprep.subr.mxu0 %v128
    %2339 = vmatpush1.msra.mxu0 %v127
    %2340 = vmatprep.subr.mxu0 %v125
    %2341 = vmatpush1.msra.mxu0 %v124
    %2342 = vmatprep.subr.mxu0 %v122
    %2343 = vmatpush1.msra.mxu0 %v121
    %2344 = vmatprep.subr.mxu0 %v119
    %2345 = vmatpush1.msra.mxu0 %v118
    %2346 = vmatprep.subr.mxu0 %v116
    %2347 = vmatpush1.msra.mxu0 %v115
    %2348 = vmatprep.subr.mxu0 %v113
    %2349 = vmatpush1.msra.mxu0 %v112
    %2350 = vmatprep.subr.mxu0 %v110
    %2351 = vmatpush1.msra.mxu0 %v109
    %2352 = vmatprep.subr.mxu0 %v107
    %2353 = vmatpush1.msra.mxu0 %v106
    %2354 = vmatprep.subr.mxu0 %v104
    %2355 = vmatpush1.msra.mxu0 %v103
    %2356 = vmatprep.subr.mxu0 %v101
    %2357 = vmatpush1.msra.mxu0 %v100
    %2358 = vmatprep.subr.mxu0 %v98
    %2359 = vmatpush1.msra.mxu0 %v97
    %2360 = vmatprep.subr.mxu0 %v95
    %2361 = vmatpush1.msra.mxu0 %v94
    %2362 = vmatprep.subr.mxu0 %v92
    %2363 = vmatpush1.msra.mxu0 %v91
    %2364 = vmatprep.subr.mxu0 %v89
    %2365 = vmatpush1.msra.mxu0 %v88
    %2366 = vmatprep.subr.mxu0 0.0
    %2367 = vmatpush2.msra.mxu0 0.0
    %2368 = vmatprep.subr.mxu0 0.0
    %2369 = vmatpush2.msra.mxu0 0.0
    %2370 = vmatprep.subr.mxu0 0.0
    %2371 = vmatpush2.msra.mxu0 0.0
    %2372 = vmatprep.subr.mxu0 0.0
    %2373 = vmatpush2.msra.mxu0 0.0
    %2374 = vmatprep.subr.mxu0 0.0
    %2375 = vmatpush2.msra.mxu0 0.0
    %2376 = vmatprep.subr.mxu0 0.0
    %2377 = vmatpush2.msra.mxu0 0.0
    %2378 = vmatprep.subr.mxu0 0.0
    %2379 = vmatpush2.msra.mxu0 0.0
    %2380 = vmatprep.subr.mxu0 0.0
    %2381 = vmatpush2.msra.mxu0 0.0
    %2382 = vmatprep.subr.mxu0 0.0
    %2383 = vmatpush2.msra.mxu0 0.0
    %2384 = vmatprep.subr.mxu0 0.0
    %2385 = vmatpush2.msra.mxu0 0.0
    %2386 = vmatprep.subr.mxu0 0.0
    %2387 = vmatpush2.msra.mxu0 0.0
    %2388 = vmatprep.subr.mxu0 0.0
    %2389 = vmatpush2.msra.mxu0 0.0
    %2390 = vmatprep.subr.mxu0 0.0
    %2391 = vmatpush2.msra.mxu0 0.0
    %2392 = vmatprep.subr.mxu0 0.0
    %2393 = vmatpush2.msra.mxu0 0.0
    %2394 = vmatprep.subr.mxu0 0.0
    %2395 = vmatpush2.msra.mxu0 0.0
    %2396 = vmatprep.subr.mxu0 0.0
    %2397 = vmatpush2.msra.mxu0 0.0
    %2398 = vmatprep.mubr.f32.mxu0 0.0
    %2399 = vmatmul.mubr.f32.gmra.mxu0 %v2330
    %v2400 = vpop.f32.mrf.mxu0
    %v2401 = vadd.f32 0.0, %v2400
    %v2402 = vpop.f32.mrf.mxu0
    %v2403 = vadd.f32 0.0, %v2402
    %2404 = vdwg.mxu0
    %2405 = vmatprep.subr.mxu0 0.0
    %2406 = vmatpush1.msra.mxu0 %v135
    %2407 = vmatprep.subr.mxu0 0.0
    %2408 = vmatpush1.msra.mxu0 %v132
    %2409 = vmatprep.subr.mxu0 0.0
    %2410 = vmatpush1.msra.mxu0 %v129
    %2411 = vmatprep.subr.mxu0 0.0
    %2412 = vmatpush1.msra.mxu0 %v126
    %2413 = vmatprep.subr.mxu0 0.0
    %2414 = vmatpush1.msra.mxu0 %v123
    %2415 = vmatprep.subr.mxu0 0.0
    %2416 = vmatpush1.msra.mxu0 %v120
    %2417 = vmatprep.subr.mxu0 0.0
    %2418 = vmatpush1.msra.mxu0 %v117
    %2419 = vmatprep.subr.mxu0 0.0
    %2420 = vmatpush1.msra.mxu0 %v114
    %2421 = vmatprep.subr.mxu0 0.0
    %2422 = vmatpush1.msra.mxu0 %v111
    %2423 = vmatprep.subr.mxu0 0.0
    %2424 = vmatpush1.msra.mxu0 %v108
    %2425 = vmatprep.subr.mxu0 0.0
    %2426 = vmatpush1.msra.mxu0 %v105
    %2427 = vmatprep.subr.mxu0 0.0
    %2428 = vmatpush1.msra.mxu0 %v102
    %2429 = vmatprep.subr.mxu0 0.0
    %2430 = vmatpush1.msra.mxu0 %v99
    %2431 = vmatprep.subr.mxu0 0.0
    %2432 = vmatpush1.msra.mxu0 %v96
    %2433 = vmatprep.subr.mxu0 0.0
    %2434 = vmatpush1.msra.mxu0 %v93
    %2435 = vmatprep.subr.mxu0 0.0
    %2436 = vmatpush1.msra.mxu0 %v90
    %2437 = vmatprep.subr.mxu0 0.0
    %2438 = vmatpush2.msra.mxu0 0.0
    %2439 = vmatprep.subr.mxu0 0.0
    %2440 = vmatpush2.msra.mxu0 0.0
    %2441 = vmatprep.subr.mxu0 0.0
    %2442 = vmatpush2.msra.mxu0 0.0
    %2443 = vmatprep.subr.mxu0 0.0
    %2444 = vmatpush2.msra.mxu0 0.0
    %2445 = vmatprep.subr.mxu0 0.0
    %2446 = vmatpush2.msra.mxu0 0.0
    %2447 = vmatprep.subr.mxu0 0.0
    %2448 = vmatpush2.msra.mxu0 0.0
    %2449 = vmatprep.subr.mxu0 0.0
    %2450 = vmatpush2.msra.mxu0 0.0
    %2451 = vmatprep.subr.mxu0 0.0
    %2452 = vmatpush2.msra.mxu0 0.0
    %2453 = vmatprep.subr.mxu0 0.0
    %2454 = vmatpush2.msra.mxu0 0.0
    %2455 = vmatprep.subr.mxu0 0.0
    %2456 = vmatpush2.msra.mxu0 0.0
    %2457 = vmatprep.subr.mxu0 0.0
    %2458 = vmatpush2.msra.mxu0 0.0
    %2459 = vmatprep.subr.mxu0 0.0
    %2460 = vmatpush2.msra.mxu0 0.0
    %2461 = vmatprep.subr.mxu0 0.0
    %2462 = vmatpush2.msra.mxu0 0.0
    %2463 = vmatprep.subr.mxu0 0.0
    %2464 = vmatpush2.msra.mxu0 0.0
    %2465 = vmatprep.subr.mxu0 0.0
    %2466 = vmatpush2.msra.mxu0 0.0
    %2467 = vmatprep.subr.mxu0 0.0
    %2468 = vmatpush2.msra.mxu0 0.0
    %2469 = vmatprep.mubr.f32.mxu0 0.0
    %2470 = vmatmul.mubr.f32.gmra.mxu0 %v2330
    %v2471 = vpop.f32.mrf.mxu0
    %v2472 = vadd.f32 0.0, %v2471
    %v2473 = vpop.f32.mrf.mxu0
    %2474 = vdwg.mxu0
    %v2475 = vadd.f32 %v2331, %v2401
    %v2476 = vadd.f32 %v2332, %v2403
    %v2477 = vmul.f32 %v2475, 0.5
    %v2478 = vtanh.pop %v2477
    %v2479 = vadd.f32 %v2478, 1.0
    %v2480 = vmul.f32 %v2479, 0.5
    %v2481 = vmul.f32 %v2476, 0.5
    %v2482 = vtanh.pop %v2481
    %v2483 = vadd.f32 %v2482, 1.0
    %v2484 = vmul.f32 %v2483, 0.5
    %v2485 = vadd.f32 %v2472, %v158
    %v2486 = vmul.f32 %v2480, %v2485
    %v2487 = vadd.f32 %v2333, %v2486
    %v2488 = vtanh.pop %v2487
    %v2489 = vsub.f32 1.0, %v2484
    %v2490 = vmul.f32 %v2489, %v2488
    %v2491 = vmul.f32 %v2484, %v2330
    %v2492 = vadd.f32 %v2490, %v2491
    %v2493 = vld [vmem:[%s1355] sm:$0xff]
    %v2494 = vld [vmem:[%s1355 + $0x8] sm:$0xff]
    %v2495 = vld [vmem:[%s1355 + $0x10] sm:$0xff]
    %2496 = vmatprep.subr.mxu0 %v134
    %2497 = vmatpush1.msra.mxu0 %v133
    %2498 = vmatprep.subr.mxu0 %v131
    %2499 = vmatpush1.msra.mxu0 %v130
    %2500 = vmatprep.subr.mxu0 %v128
    %2501 = vmatpush1.msra.mxu0 %v127
    %2502 = vmatprep.subr.mxu0 %v125
    %2503 = vmatpush1.msra.mxu0 %v124
    %2504 = vmatprep.subr.mxu0 %v122
    %2505 = vmatpush1.msra.mxu0 %v121
    %2506 = vmatprep.subr.mxu0 %v119
    %2507 = vmatpush1.msra.mxu0 %v118
    %2508 = vmatprep.subr.mxu0 %v116
    %2509 = vmatpush1.msra.mxu0 %v115
    %2510 = vmatprep.subr.mxu0 %v113
    %2511 = vmatpush1.msra.mxu0 %v112
    %2512 = vmatprep.subr.mxu0 %v110
    %2513 = vmatpush1.msra.mxu0 %v109
    %2514 = vmatprep.subr.mxu0 %v107
    %2515 = vmatpush1.msra.mxu0 %v106
    %2516 = vmatprep.subr.mxu0 %v104
    %2517 = vmatpush1.msra.mxu0 %v103
    %2518 = vmatprep.subr.mxu0 %v101
    %2519 = vmatpush1.msra.mxu0 %v100
    %2520 = vmatprep.subr.mxu0 %v98
    %2521 = vmatpush1.msra.mxu0 %v97
    %2522 = vmatprep.subr.mxu0 %v95
    %2523 = vmatpush1.msra.mxu0 %v94
    %2524 = vmatprep.subr.mxu0 %v92
    %2525 = vmatpush1.msra.mxu0 %v91
    %2526 = vmatprep.subr.mxu0 %v89
    %2527 = vmatpush1.msra.mxu0 %v88
    %2528 = vmatprep.subr.mxu0 0.0
    %2529 = vmatpush2.msra.mxu0 0.0
    %2530 = vmatprep.subr.mxu0 0.0
    %2531 = vmatpush2.msra.mxu0 0.0
    %2532 = vmatprep.subr.mxu0 0.0
    %2533 = vmatpush2.msra.mxu0 0.0
    %2534 = vmatprep.subr.mxu0 0.0
    %2535 = vmatpush2.msra.mxu0 0.0
    %2536 = vmatprep.subr.mxu0 0.0
    %2537 = vmatpush2.msra.mxu0 0.0
    %2538 = vmatprep.subr.mxu0 0.0
    %2539 = vmatpush2.msra.mxu0 0.0
    %2540 = vmatprep.subr.mxu0 0.0
    %2541 = vmatpush2.msra.mxu0 0.0
    %2542 = vmatprep.subr.mxu0 0.0
    %2543 = vmatpush2.msra.mxu0 0.0
    %2544 = vmatprep.subr.mxu0 0.0
    %2545 = vmatpush2.msra.mxu0 0.0
    %2546 = vmatprep.subr.mxu0 0.0
    %2547 = vmatpush2.msra.mxu0 0.0
    %2548 = vmatprep.subr.mxu0 0.0
    %2549 = vmatpush2.msra.mxu0 0.0
    %2550 = vmatprep.subr.mxu0 0.0
    %2551 = vmatpush2.msra.mxu0 0.0
    %2552 = vmatprep.subr.mxu0 0.0
    %2553 = vmatpush2.msra.mxu0 0.0
    %2554 = vmatprep.subr.mxu0 0.0
    %2555 = vmatpush2.msra.mxu0 0.0
    %2556 = vmatprep.subr.mxu0 0.0
    %2557 = vmatpush2.msra.mxu0 0.0
    %2558 = vmatprep.subr.mxu0 0.0
    %2559 = vmatpush2.msra.mxu0 0.0
    %2560 = vmatprep.mubr.f32.mxu0 0.0
    %2561 = vmatmul.mubr.f32.gmra.mxu0 %v2492
    %v2562 = vpop.f32.mrf.mxu0
    %v2563 = vadd.f32 0.0, %v2562
    %v2564 = vpop.f32.mrf.mxu0
    %v2565 = vadd.f32 0.0, %v2564
    %2566 = vdwg.mxu0
    %2567 = vmatprep.subr.mxu0 0.0
    %2568 = vmatpush1.msra.mxu0 %v135
    %2569 = vmatprep.subr.mxu0 0.0
    %2570 = vmatpush1.msra.mxu0 %v132
    %2571 = vmatprep.subr.mxu0 0.0
    %2572 = vmatpush1.msra.mxu0 %v129
    %2573 = vmatprep.subr.mxu0 0.0
    %2574 = vmatpush1.msra.mxu0 %v126
    %2575 = vmatprep.subr.mxu0 0.0
    %2576 = vmatpush1.msra.mxu0 %v123
    %2577 = vmatprep.subr.mxu0 0.0
    %2578 = vmatpush1.msra.mxu0 %v120
    %2579 = vmatprep.subr.mxu0 0.0
    %2580 = vmatpush1.msra.mxu0 %v117
    %2581 = vmatprep.subr.mxu0 0.0
    %2582 = vmatpush1.msra.mxu0 %v114
    %2583 = vmatprep.subr.mxu0 0.0
    %2584 = vmatpush1.msra.mxu0 %v111
    %2585 = vmatprep.subr.mxu0 0.0
    %2586 = vmatpush1.msra.mxu0 %v108
    %2587 = vmatprep.subr.mxu0 0.0
    %2588 = vmatpush1.msra.mxu0 %v105
    %2589 = vmatprep.subr.mxu0 0.0
    %2590 = vmatpush1.msra.mxu0 %v102
    %2591 = vmatprep.subr.mxu0 0.0
    %2592 = vmatpush1.msra.mxu0 %v99
    %2593 = vmatprep.subr.mxu0 0.0
    %2594 = vmatpush1.msra.mxu0 %v96
    %2595 = vmatprep.subr.mxu0 0.0
    %2596 = vmatpush1.msra.mxu0 %v93
    %2597 = vmatprep.subr.mxu0 0.0
    %2598 = vmatpush1.msra.mxu0 %v90
    %2599 = vmatprep.subr.mxu0 0.0
    %2600 = vmatpush2.msra.mxu0 0.0
    %2601 = vmatprep.subr.mxu0 0.0
    %2602 = vmatpush2.msra.mxu0 0.0
    %2603 = vmatprep.subr.mxu0 0.0
    %2604 = vmatpush2.msra.mxu0 0.0
    %2605 = vmatprep.subr.mxu0 0.0
    %2606 = vmatpush2.msra.mxu0 0.0
    %2607 = vmatprep.subr.mxu0 0.0
    %2608 = vmatpush2.msra.mxu0 0.0
    %2609 = vmatprep.subr.mxu0 0.0
    %2610 = vmatpush2.msra.mxu0 0.0
    %2611 = vmatprep.subr.mxu0 0.0
    %2612 = vmatpush2.msra.mxu0 0.0
    %2613 = vmatprep.subr.mxu0 0.0
    %2614 = vmatpush2.msra.mxu0 0.0
    %2615 = vmatprep.subr.mxu0 0.0
    %2616 = vmatpush2.msra.mxu0 0.0
    %2617 = vmatprep.subr.mxu0 0.0
    %2618 = vmatpush2.msra.mxu0 0.0
    %2619 = vmatprep.subr.mxu0 0.0
    %2620 = vmatpush2.msra.mxu0 0.0
    %2621 = vmatprep.subr.mxu0 0.0
    %2622 = vmatpush2.msra.mxu0 0.0
    %2623 = vmatprep.subr.mxu0 0.0
    %2624 = vmatpush2.msra.mxu0 0.0
    %2625 = vmatprep.subr.mxu0 0.0
    %2626 = vmatpush2.msra.mxu0 0.0
    %2627 = vmatprep.subr.mxu0 0.0
    %2628 = vmatpush2.msra.mxu0 0.0
    %2629 = vmatprep.subr.mxu0 0.0
    %2630 = vmatpush2.msra.mxu0 0.0
    %2631 = vmatprep.mubr.f32.mxu0 0.0
    %2632 = vmatmul.mubr.f32.gmra.mxu0 %v2492
    %v2633 = vpop.f32.mrf.mxu0
    %v2634 = vadd.f32 0.0, %v2633
    %v2635 = vpop.f32.mrf.mxu0
    %2636 = vdwg.mxu0
    %v2637 = vadd.f32 %v2493, %v2563
    %v2638 = vadd.f32 %v2494, %v2565
    %v2639 = vmul.f32 %v2637, 0.5
    %v2640 = vtanh.pop %v2639
    %v2641 = vadd.f32 %v2640, 1.0
    %v2642 = vmul.f32 %v2641, 0.5
    %v2643 = vmul.f32 %v2638, 0.5
    %v2644 = vtanh.pop %v2643
    %v2645 = vadd.f32 %v2644, 1.0
    %v2646 = vmul.f32 %v2645, 0.5
    %v2647 = vadd.f32 %v2634, %v158
    %v2648 = vmul.f32 %v2642, %v2647
    %v2649 = vadd.f32 %v2495, %v2648
    %v2650 = vtanh.pop %v2649
    %v2651 = vsub.f32 1.0, %v2646
    %v2652 = vmul.f32 %v2651, %v2650
    %v2653 = vmul.f32 %v2646, %v2492
    %v2654 = vadd.f32 %v2652, %v2653
    %v2655 = vld [vmem:[#allocation9] sm:$0xff]
    %v2656 = vld [vmem:[#allocation9 + $0x8] sm:$0xff]
    %v2657 = vld [vmem:[#allocation9 + $0x10] sm:$0xff]
    %v2658 = vld [vmem:[#allocation9 + $0x18] sm:$0xff]
    %v2659 = vld [vmem:[#allocation9 + $0x20] sm:$0xff]
    %v2660 = vld [vmem:[#allocation9 + $0x28] sm:$0xff]
    %v2661 = vld [vmem:[#allocation9 + $0x30] sm:$0xff]
    %v2662 = vld [vmem:[#allocation9 + $0x38] sm:$0xff]
    %v2663 = vld [vmem:[#allocation9 + $0x40] sm:$0xff]
    %v2664 = vld [vmem:[#allocation9 + $0x48] sm:$0xff]
    %v2665 = vld [vmem:[#allocation9 + $0x50] sm:$0xff]
    %v2666 = vld [vmem:[#allocation9 + $0x58] sm:$0xff]
    %v2667 = vld [vmem:[#allocation9 + $0x60] sm:$0xff]
    %v2668 = vld [vmem:[#allocation9 + $0x68] sm:$0xff]
    %v2669 = vld [vmem:[#allocation9 + $0x70] sm:$0xff]
    %v2670 = vld [vmem:[#allocation9 + $0x78] sm:$0xff]
    %v2671 = vld [vmem:[%s6] sm:$0x1]
    %v2673 = vlaneseq
    %v2674 = vshrl.u32 %v2673, 7
    %v2675 = vsub.s32 0, %v2674
    %v2676 = vrot.slane %v2671, %v2675
    %2678 = vmatprep.subr.mxu0 0.0
    %2679 = vmatpush1.msra.mxu0 %v2670
    %2680 = vmatprep.subr.mxu0 0.0
    %2681 = vmatpush1.msra.mxu0 %v2669
    %2682 = vmatprep.subr.mxu0 0.0
    %2683 = vmatpush1.msra.mxu0 %v2668
    %2684 = vmatprep.subr.mxu0 0.0
    %2685 = vmatpush1.msra.mxu0 %v2667
    %2686 = vmatprep.subr.mxu0 0.0
    %2687 = vmatpush1.msra.mxu0 %v2666
    %2688 = vmatprep.subr.mxu0 0.0
    %2689 = vmatpush1.msra.mxu0 %v2665
    %2690 = vmatprep.subr.mxu0 0.0
    %2691 = vmatpush1.msra.mxu0 %v2664
    %2692 = vmatprep.subr.mxu0 0.0
    %2693 = vmatpush1.msra.mxu0 %v2663
    %2694 = vmatprep.subr.mxu0 0.0
    %2695 = vmatpush1.msra.mxu0 %v2662
    %2696 = vmatprep.subr.mxu0 0.0
    %2697 = vmatpush1.msra.mxu0 %v2661
    %2698 = vmatprep.subr.mxu0 0.0
    %2699 = vmatpush1.msra.mxu0 %v2660
    %2700 = vmatprep.subr.mxu0 0.0
    %2701 = vmatpush1.msra.mxu0 %v2659
    %2702 = vmatprep.subr.mxu0 0.0
    %2703 = vmatpush1.msra.mxu0 %v2658
    %2704 = vmatprep.subr.mxu0 0.0
    %2705 = vmatpush1.msra.mxu0 %v2657
    %2706 = vmatprep.subr.mxu0 0.0
    %2707 = vmatpush1.msra.mxu0 %v2656
    %2708 = vmatprep.subr.mxu0 0.0
    %2709 = vmatpush1.msra.mxu0 %v2655
    %2710 = vmatprep.subr.mxu0 0.0
    %2711 = vmatpush2.msra.mxu0 0.0
    %2712 = vmatprep.subr.mxu0 0.0
    %2713 = vmatpush2.msra.mxu0 0.0
    %2714 = vmatprep.subr.mxu0 0.0
    %2715 = vmatpush2.msra.mxu0 0.0
    %2716 = vmatprep.subr.mxu0 0.0
    %2717 = vmatpush2.msra.mxu0 0.0
    %2718 = vmatprep.subr.mxu0 0.0
    %2719 = vmatpush2.msra.mxu0 0.0
    %2720 = vmatprep.subr.mxu0 0.0
    %2721 = vmatpush2.msra.mxu0 0.0
    %2722 = vmatprep.subr.mxu0 0.0
    %2723 = vmatpush2.msra.mxu0 0.0
    %2724 = vmatprep.subr.mxu0 0.0
    %2725 = vmatpush2.msra.mxu0 0.0
    %2726 = vmatprep.subr.mxu0 0.0
    %2727 = vmatpush2.msra.mxu0 0.0
    %2728 = vmatprep.subr.mxu0 0.0
    %2729 = vmatpush2.msra.mxu0 0.0
    %2730 = vmatprep.subr.mxu0 0.0
    %2731 = vmatpush2.msra.mxu0 0.0
    %2732 = vmatprep.subr.mxu0 0.0
    %2733 = vmatpush2.msra.mxu0 0.0
    %2734 = vmatprep.subr.mxu0 0.0
    %2735 = vmatpush2.msra.mxu0 0.0
    %2736 = vmatprep.subr.mxu0 0.0
    %2737 = vmatpush2.msra.mxu0 0.0
    %2738 = vmatprep.subr.mxu0 0.0
    %2739 = vmatpush2.msra.mxu0 0.0
    %2740 = vmatprep.subr.mxu0 0.0
    %2741 = vmatpush2.msra.mxu0 0.0
    %2742 = vmatprep.mubr.f32.mxu0 0.0
    %2743 = vmatmul.mubr.f32.gmra.mxu0 %v2654
    %v2744 = vpop.f32.mrf.mxu0
    %v2745 = vadd.f32 %v2676, %v2744
    %v2746 = vpop.f32.mrf.mxu0
    %2747 = vdwg.mxu0
    %2748 = vst [vmem:[#allocation11] sm:$0xff] %v2745
    // Predicated region
    $region46: #{tpu_custom_call.1} parent=1 // pred_check
      _
    $region47: #{tpu_custom_call.1} parent=1 // pred_check_branch
      %2750 = sbr.rel (0) target = $region49
    $region48: #{tpu_custom_call.1} parent=1 // pred_region
      %s2752 = ssub.s32 128, 128
      %2753 = vsyncadd [#allocation5], %s2752
      %s2755 = sshll.u32 [#allocation11], 4
      %s2756 = int_to_ptr.vmem [resolvable:$true] %s2755
      %2758 = dma.vmem_to_hbm [thread:$0]  %s2756, 128, %s7, [#allocation5]
    $region49: #{tpu_custom_call.1} parent=1 // pred_fallthru
      _
    // Predicated region
    $region50: #{tpu_custom_call.1} parent=1 // pred_check
      _
    $region51: #{tpu_custom_call.1} parent=1 // pred_check_branch
      %2760 = sbr.rel (0) target = $region53
    $region52: #{tpu_custom_call.1} parent=1 // pred_region
      %2761 = dma.done [#allocation5], 128
    $region53: #{tpu_custom_call.1} parent=1 // pred_fallthru
      _
    %2762 = vsyncpa [#allocation4], 1
    %2763 = vsyncpa [#allocation7], 1
    %2764 = vsyncpa [#allocation10], 1
    %2765 = vsyncpa [#allocation5], 1

</llo_original>
